<compile_context>
chip_gen: v5e
topology: v5e:2x2
jax: 0.10.0
libtpu: 0.0.40
codegen_flags: <defaults>
</compile_context>

<pallas_src>
import jax
import jax.numpy as jnp
from jax.experimental import pallas as pl
from jax.experimental.pallas import tpu as pltpu


# ----------------------------- Pallas kernels -----------------------------

def _conv_bias_relu_pool_kernel(w_ref, p_ref, b_ref, o_ref):
    """Fused conv (matmul over im2col patches) + bias + ReLU + 2x2 maxpool.

    w_ref: (Cout, K)   bf16   K = Cin*KH*KW
    p_ref: (K, 4*L)    bf16   columns ordered (dh, dw, n, hp, wp); L = N*Hp*Wp
    b_ref: (Cout, 1)   f32
    o_ref: (Cout, L)   f32    lane-dense pooled output, columns (n, hp, wp)
    """
    acc = jnp.dot(w_ref[...], p_ref[...], preferred_element_type=jnp.float32)
    acc = jnp.maximum(acc + b_ref[...], 0.0)          # bias + ReLU (VPU)
    l = o_ref.shape[1]
    # 2x2 maxpool == elementwise max over the four pool-phase column slabs.
    o_ref[...] = jnp.maximum(
        jnp.maximum(acc[:, 0 * l:1 * l], acc[:, 1 * l:2 * l]),
        jnp.maximum(acc[:, 2 * l:3 * l], acc[:, 3 * l:4 * l]),
    )


def _fc_head_kernel(x_ref, w1_ref, b1_ref, w2_ref, b2_ref, o_ref):
    """Fused fc1 + ReLU + fc2 + log_softmax; intermediate stays in VMEM/vregs."""
    h = jnp.dot(x_ref[...], w1_ref[...], preferred_element_type=jnp.float32)
    h = jnp.maximum(h + b1_ref[...], 0.0)
    z = jnp.dot(h.astype(w2_ref.dtype), w2_ref[...],
                preferred_element_type=jnp.float32) + b2_ref[...]
    m = jnp.max(z, axis=-1, keepdims=True)
    e = jnp.exp(z - m)
    o_ref[...] = z - m - jnp.log(jnp.sum(e, axis=-1, keepdims=True))


_VMEM_SPEC = pl.BlockSpec(memory_space=pltpu.MemorySpace.VMEM)


# ------------------------------- glue / model -------------------------------

def _pool_major_patches(x_cnhw, kh, kw):
    """im2col in the transposed, pool-phase-major layout the conv kernel wants.

    x_cnhw: (Cin, N, H, W) -> patches^T: (Cin*kh*kw, 4*N*Hp*Wp) bf16 with rows
    ordered (ci, i, j) (matching torch Conv2d weight.reshape(Cout, -1)) and
    columns ordered (dh, dw, n, hp, wp).
    """
    c, n, h, w = x_cnhw.shape
    ho, wo = h - kh + 1, w - kw + 1
    hp, wp = ho // 2, wo // 2
    win = jnp.stack(
        [x_cnhw[:, :, i:i + ho, j:j + wo] for i in range(kh) for j in range(kw)],
        axis=1)                                       # (C, kh*kw, N, Ho, Wo)
    win = win.reshape(c, kh * kw, n, hp, 2, wp, 2)    # [ci, ij, n, hp, dh, wp, dw]
    pt = win.transpose(0, 1, 4, 6, 2, 3, 5)           # [ci, ij, dh, dw, n, hp, wp]
    pt = pt.reshape(c * kh * kw, 4 * n * hp * wp)
    return pt.astype(jnp.bfloat16), hp, wp


def _conv_relu_pool(x_cnhw, w_flat, b_col, kh=5, kw=5):
    """x: (Cin, N, H, W) f32, w_flat: (Cout, Cin*kh*kw) bf16, b_col: (Cout, 1) f32
    -> (Cout, N, Hp, Wp) f32 (channels-first layout feeds the next conv as-is)."""
    n = x_cnhw.shape[1]
    cout = w_flat.shape[0]
    pt, hp, wp = _pool_major_patches(x_cnhw, kh, kw)
    out = pl.pallas_call(
        _conv_bias_relu_pool_kernel,
        out_shape=jax.ShapeDtypeStruct((cout, n * hp * wp), jnp.float32),
        in_specs=[_VMEM_SPEC, _VMEM_SPEC, _VMEM_SPEC],
        out_specs=_VMEM_SPEC,
    )(w_flat, pt, b_col)
    return out.reshape(cout, n, hp, wp)


def init_params(num_channels=18, classes=14):
    """Random parameters in the reference PyTorch layouts."""
    key = jax.random.PRNGKey(0)
    ks = jax.random.split(key, 8)
    return {
        "conv1_w": jax.random.normal(ks[0], (20, num_channels, 5, 5), jnp.float32) * 0.05,
        "conv1_b": jax.random.normal(ks[1], (20,), jnp.float32) * 0.05,
        "conv2_w": jax.random.normal(ks[2], (50, 20, 5, 5), jnp.float32) * 0.05,
        "conv2_b": jax.random.normal(ks[3], (50,), jnp.float32) * 0.05,
        "fc1_w": jax.random.normal(ks[4], (500, 800), jnp.float32) * 0.05,
        "fc1_b": jax.random.normal(ks[5], (500,), jnp.float32) * 0.05,
        "fc2_w": jax.random.normal(ks[6], (classes, 500), jnp.float32) * 0.05,
        "fc2_b": jax.random.normal(ks[7], (classes,), jnp.float32) * 0.05,
    }


def prepare_params(p):
    """One-time layout / dtype prep (outside the per-step forward): conv weights
    flattened + bf16, fc weights pre-transposed + bf16, biases kept f32."""
    bf16 = jnp.bfloat16
    return {
        "c1_w": p["conv1_w"].reshape(p["conv1_w"].shape[0], -1).astype(bf16),
        "c1_b": p["conv1_b"].reshape(-1, 1).astype(jnp.float32),
        "c2_w": p["conv2_w"].reshape(p["conv2_w"].shape[0], -1).astype(bf16),
        "c2_b": p["conv2_b"].reshape(-1, 1).astype(jnp.float32),
        "fc1_w": p["fc1_w"].T.astype(bf16),                  # (800, 500)
        "fc1_b": p["fc1_b"].reshape(1, -1).astype(jnp.float32),
        "fc2_w": p["fc2_w"].T.astype(bf16),                  # (500, classes)
        "fc2_b": p["fc2_b"].reshape(1, -1).astype(jnp.float32),
    }


@jax.jit
def lenet_forward(x, params):
    """x: (N, Cin, H, W) f32 NCHW, params: output of prepare_params."""
    n = x.shape[0]
    xc = jnp.transpose(x, (1, 0, 2, 3))                          # (Cin, N, H, W)
    a1 = _conv_relu_pool(xc, params["c1_w"], params["c1_b"])     # (20, N, 12, 12)
    a2 = _conv_relu_pool(a1, params["c2_w"], params["c2_b"])     # (50, N, 4, 4)
    # torch.flatten(x, 1) ordering: (c, h, w) per sample.
    feat = jnp.transpose(a2, (1, 0, 2, 3)).reshape(n, -1).astype(jnp.bfloat16)
    classes = params["fc2_b"].shape[1]
    return pl.pallas_call(
        _fc_head_kernel,
        out_shape=jax.ShapeDtypeStruct((n, classes), jnp.float32),
        in_specs=[_VMEM_SPEC] * 5,
        out_specs=_VMEM_SPEC,
    )(feat, params["fc1_w"], params["fc1_b"], params["fc2_w"], params["fc2_b"])


# --------------------------- pure-JAX f32 reference ---------------------------

def lenet_reference(x, p):
    hi = jax.lax.Precision.HIGHEST

    def conv(x, w, b):
        y = jax.lax.conv_general_dilated(
            x, w, window_strides=(1, 1), padding="VALID",
            dimension_numbers=("NCHW", "OIHW", "NCHW"), precision=hi)
        return y + b.reshape(1, -1, 1, 1)

    def pool(x):
        return jax.lax.reduce_window(x, -jnp.inf, jax.lax.max,
                                     (1, 1, 2, 2), (1, 1, 2, 2), "VALID")

    h = pool(jax.nn.relu(conv(x, p["conv1_w"], p["conv1_b"])))
    h = pool(jax.nn.relu(conv(h, p["conv2_w"], p["conv2_b"])))
    h = h.reshape(x.shape[0], -1)
    h = jax.nn.relu(jnp.dot(h, p["fc1_w"].T, precision=hi) + p["fc1_b"])
    z = jnp.dot(h, p["fc2_w"].T, precision=hi) + p["fc2_b"]
    return jax.nn.log_softmax(z, axis=-1)


if __name__ == "__main__":
    num_channels, classes, batch = 18, 14, 2
    raw = init_params(num_channels, classes)
    params = prepare_params(raw)
    # fc1 in_features=800 = 50*4*4 implies a 28x28 spatial input (MNIST-like).
    x = jax.random.normal(jax.random.PRNGKey(0),
                          (batch, num_channels, 28, 28), jnp.float32)
    out = jax.block_until_ready(lenet_forward(x, params))
    assert out.shape == (batch, classes)
    # log-softmax rows must exponentiate-sum to 1
    assert bool(jnp.allclose(jnp.exp(out).sum(axis=1), 1.0, atol=1e-4))
    # matches the f32 reference up to bf16 matmul-input rounding
    ref = jax.block_until_ready(lenet_reference(x, raw))
    err = float(jnp.max(jnp.abs(out - ref)))
    assert err < 0.3, f"log-prob mismatch vs reference: {err}"
    print("KERNEL_OK")
</pallas_src>

<mosaic_0001>
module attributes {stable_mosaic.version = 11 : i64} {
  func.func @_conv_bias_relu_pool_kernel(%arg0: memref<20x450xbf16, #tpu.memory_space<vmem>>, %arg1: memref<450x1152xbf16, #tpu.memory_space<vmem>>, %arg2: memref<20x1xf32, #tpu.memory_space<vmem>>, %arg3: memref<20x288xf32, #tpu.memory_space<vmem>>) attributes {dimension_semantics = [], scalar_prefetch = 0 : i64, scratch_operands = 0 : i64, tpu.core_type = #tpu.core_type<tc>} {
    %c0 = arith.constant 0 : index
    %c0_0 = arith.constant 0 : index
    %0 = vector.load %arg0[%c0, %c0_0] : memref<20x450xbf16, #tpu.memory_space<vmem>>, vector<20x450xbf16>
    %c0_1 = arith.constant 0 : index
    %c0_2 = arith.constant 0 : index
    %1 = vector.load %arg1[%c0_1, %c0_2] : memref<450x1152xbf16, #tpu.memory_space<vmem>>, vector<450x1152xbf16>
    %cst = arith.constant dense<0.000000e+00> : vector<20x1152xf32>
    %2 = tpu.matmul %0, %1, %cst {dimension_numbers = #tpu.dot_dimension_numbers<[1], [0], [0], [1], [0, 0, 1, 1], [], []>} : vector<20x450xbf16>, vector<450x1152xbf16>, vector<20x1152xf32> -> vector<20x1152xf32>
    %c0_3 = arith.constant 0 : index
    %c0_4 = arith.constant 0 : index
    %3 = vector.load %arg2[%c0_3, %c0_4] : memref<20x1xf32, #tpu.memory_space<vmem>>, vector<20x1xf32>
    %4 = vector.broadcast %3 : vector<20x1xf32> to vector<20x1152xf32>
    %5 = arith.addf %2, %4 : vector<20x1152xf32>
    %cst_5 = arith.constant 0.000000e+00 : f32
    %6 = vector.broadcast %cst_5 : f32 to vector<20x1152xf32>
    %7 = arith.maximumf %5, %6 : vector<20x1152xf32>
    %8 = vector.extract_strided_slice %7 {offsets = [0, 0], sizes = [20, 288], strides = [1, 1]} : vector<20x1152xf32> to vector<20x288xf32>
    %9 = vector.extract_strided_slice %7 {offsets = [0, 288], sizes = [20, 288], strides = [1, 1]} : vector<20x1152xf32> to vector<20x288xf32>
    %10 = arith.maximumf %8, %9 : vector<20x288xf32>
    %11 = vector.extract_strided_slice %7 {offsets = [0, 576], sizes = [20, 288], strides = [1, 1]} : vector<20x1152xf32> to vector<20x288xf32>
    %12 = vector.extract_strided_slice %7 {offsets = [0, 864], sizes = [20, 288], strides = [1, 1]} : vector<20x1152xf32> to vector<20x288xf32>
    %13 = arith.maximumf %11, %12 : vector<20x288xf32>
    %14 = arith.maximumf %10, %13 : vector<20x288xf32>
    %c0_6 = arith.constant 0 : index
    %c0_7 = arith.constant 0 : index
    %15 = vector.load %arg3[%c0_6, %c0_7] : memref<20x288xf32, #tpu.memory_space<vmem>>, vector<20x288xf32>
    tpu.vector_store %arg3[%c0_6, %c0_7], %14 {strides = array<i32>} : memref<20x288xf32, #tpu.memory_space<vmem>>, vector<20x288xf32>,
    return
  }
}

module attributes {stable_mosaic.version = 11 : i64} {
  func.func @_conv_bias_relu_pool_kernel(%arg0: memref<50x500xbf16, #tpu.memory_space<vmem>>, %arg1: memref<500x128xbf16, #tpu.memory_space<vmem>>, %arg2: memref<50x1xf32, #tpu.memory_space<vmem>>, %arg3: memref<50x32xf32, #tpu.memory_space<vmem>>) attributes {dimension_semantics = [], scalar_prefetch = 0 : i64, scratch_operands = 0 : i64, tpu.core_type = #tpu.core_type<tc>} {
    %c0 = arith.constant 0 : index
    %c0_0 = arith.constant 0 : index
    %0 = vector.load %arg0[%c0, %c0_0] : memref<50x500xbf16, #tpu.memory_space<vmem>>, vector<50x500xbf16>
    %c0_1 = arith.constant 0 : index
    %c0_2 = arith.constant 0 : index
    %1 = vector.load %arg1[%c0_1, %c0_2] : memref<500x128xbf16, #tpu.memory_space<vmem>>, vector<500x128xbf16>
    %cst = arith.constant dense<0.000000e+00> : vector<50x128xf32>
    %2 = tpu.matmul %0, %1, %cst {dimension_numbers = #tpu.dot_dimension_numbers<[1], [0], [0], [1], [0, 0, 1, 1], [], []>} : vector<50x500xbf16>, vector<500x128xbf16>, vector<50x128xf32> -> vector<50x128xf32>
    %c0_3 = arith.constant 0 : index
    %c0_4 = arith.constant 0 : index
    %3 = vector.load %arg2[%c0_3, %c0_4] : memref<50x1xf32, #tpu.memory_space<vmem>>, vector<50x1xf32>
    %4 = vector.broadcast %3 : vector<50x1xf32> to vector<50x128xf32>
    %5 = arith.addf %2, %4 : vector<50x128xf32>
    %cst_5 = arith.constant 0.000000e+00 : f32
    %6 = vector.broadcast %cst_5 : f32 to vector<50x128xf32>
    %7 = arith.maximumf %5, %6 : vector<50x128xf32>
    %8 = vector.extract_strided_slice %7 {offsets = [0, 0], sizes = [50, 32], strides = [1, 1]} : vector<50x128xf32> to vector<50x32xf32>
    %9 = vector.extract_strided_slice %7 {offsets = [0, 32], sizes = [50, 32], strides = [1, 1]} : vector<50x128xf32> to vector<50x32xf32>
    %10 = arith.maximumf %8, %9 : vector<50x32xf32>
    %11 = vector.extract_strided_slice %7 {offsets = [0, 64], sizes = [50, 32], strides = [1, 1]} : vector<50x128xf32> to vector<50x32xf32>
    %12 = vector.extract_strided_slice %7 {offsets = [0, 96], sizes = [50, 32], strides = [1, 1]} : vector<50x128xf32> to vector<50x32xf32>
    %13 = arith.maximumf %11, %12 : vector<50x32xf32>
    %14 = arith.maximumf %10, %13 : vector<50x32xf32>
    %c0_6 = arith.constant 0 : index
    %c0_7 = arith.constant 0 : index
    %15 = vector.load %arg3[%c0_6, %c0_7] : memref<50x32xf32, #tpu.memory_space<vmem>>, vector<50x32xf32>
    tpu.vector_store %arg3[%c0_6, %c0_7], %14 {strides = array<i32>} : memref<50x32xf32, #tpu.memory_space<vmem>>, vector<50x32xf32>,
    return
  }
}

module attributes {stable_mosaic.version = 11 : i64} {
  func.func @_fc_head_kernel(%arg0: memref<2x800xbf16, #tpu.memory_space<vmem>>, %arg1: memref<800x500xbf16, #tpu.memory_space<vmem>>, %arg2: memref<1x500xf32, #tpu.memory_space<vmem>>, %arg3: memref<500x14xbf16, #tpu.memory_space<vmem>>, %arg4: memref<1x14xf32, #tpu.memory_space<vmem>>, %arg5: memref<2x14xf32, #tpu.memory_space<vmem>>) attributes {dimension_semantics = [], scalar_prefetch = 0 : i64, scratch_operands = 0 : i64, tpu.core_type = #tpu.core_type<tc>} {
    %c0 = arith.constant 0 : index
    %c0_0 = arith.constant 0 : index
    %0 = vector.load %arg0[%c0, %c0_0] : memref<2x800xbf16, #tpu.memory_space<vmem>>, vector<2x800xbf16>
    %c0_1 = arith.constant 0 : index
    %c0_2 = arith.constant 0 : index
    %1 = vector.load %arg1[%c0_1, %c0_2] : memref<800x500xbf16, #tpu.memory_space<vmem>>, vector<800x500xbf16>
    %cst = arith.constant dense<0.000000e+00> : vector<2x500xf32>
    %2 = tpu.matmul %0, %1, %cst {dimension_numbers = #tpu.dot_dimension_numbers<[1], [0], [0], [1], [0, 0, 1, 1], [], []>} : vector<2x800xbf16>, vector<800x500xbf16>, vector<2x500xf32> -> vector<2x500xf32>
    %c0_3 = arith.constant 0 : index
    %c0_4 = arith.constant 0 : index
    %3 = vector.load %arg2[%c0_3, %c0_4] : memref<1x500xf32, #tpu.memory_space<vmem>>, vector<1x500xf32>
    %4 = vector.broadcast %3 : vector<1x500xf32> to vector<2x500xf32>
    %5 = arith.addf %2, %4 : vector<2x500xf32>
    %cst_5 = arith.constant 0.000000e+00 : f32
    %6 = vector.broadcast %cst_5 : f32 to vector<2x500xf32>
    %7 = arith.maximumf %5, %6 : vector<2x500xf32>
    %8 = arith.truncf %7 : vector<2x500xf32> to vector<2x500xbf16>
    %c0_6 = arith.constant 0 : index
    %c0_7 = arith.constant 0 : index
    %9 = vector.load %arg3[%c0_6, %c0_7] : memref<500x14xbf16, #tpu.memory_space<vmem>>, vector<500x14xbf16>
    %cst_8 = arith.constant dense<0.000000e+00> : vector<2x14xf32>
    %10 = tpu.matmul %8, %9, %cst_8 {dimension_numbers = #tpu.dot_dimension_numbers<[1], [0], [0], [1], [0, 0, 1, 1], [], []>} : vector<2x500xbf16>, vector<500x14xbf16>, vector<2x14xf32> -> vector<2x14xf32>
    %c0_9 = arith.constant 0 : index
    %c0_10 = arith.constant 0 : index
    %11 = vector.load %arg4[%c0_9, %c0_10] : memref<1x14xf32, #tpu.memory_space<vmem>>, vector<1x14xf32>
    %12 = vector.broadcast %11 : vector<1x14xf32> to vector<2x14xf32>
    %13 = arith.addf %10, %12 : vector<2x14xf32>
    %cst_11 = arith.constant dense<0xFF800000> : vector<2xf32>
    %14 = vector.multi_reduction <maximumf>, %13, %cst_11 [1] : vector<2x14xf32> to vector<2xf32>
    %15 = vector.shape_cast %14 : vector<2xf32> to vector<2x1xf32>
    %16 = vector.broadcast %15 : vector<2x1xf32> to vector<2x14xf32>
    %17 = arith.subf %13, %16 : vector<2x14xf32>
    %18 = math.exp %17 : vector<2x14xf32>
    %19 = vector.broadcast %15 : vector<2x1xf32> to vector<2x14xf32>
    %20 = arith.subf %13, %19 : vector<2x14xf32>
    %cst_12 = arith.constant dense<0.000000e+00> : vector<2xf32>
    %21 = vector.multi_reduction <add>, %18, %cst_12 [1] : vector<2x14xf32> to vector<2xf32>
    %22 = vector.shape_cast %21 : vector<2xf32> to vector<2x1xf32>
    %23 = math.log %22 : vector<2x1xf32>
    %24 = vector.broadcast %23 : vector<2x1xf32> to vector<2x14xf32>
    %25 = arith.subf %20, %24 : vector<2x14xf32>
    %c0_13 = arith.constant 0 : index
    %c0_14 = arith.constant 0 : index
    %26 = vector.load %arg5[%c0_13, %c0_14] : memref<2x14xf32, #tpu.memory_space<vmem>>, vector<2x14xf32>
    tpu.vector_store %arg5[%c0_13, %c0_14], %25 {strides = array<i32>} : memref<2x14xf32, #tpu.memory_space<vmem>>, vector<2x14xf32>,
    return
  }
}

</mosaic_0001>

<llo_original>
// kernel: lenet_forward.3
$region0: #{lenet_forward.3}
  #allocation0 [shape = 'u32[]', space=smem, size = 0x4, offset = 0x4, fixed_abs, tag = 'smem constant byte address 0x4 - core index']
  #allocation1 [shape = 'u32[72,128]{1,0:T(1,128)}', space=vmem, size = 0x9000, scoped, tag = 'internal scratch']
  %s0 = inlined_call_operand.vmem [shape: bf16[20,450], index: 0, kind: input, shape index: {}]
  %s1 = inlined_call_operand.vmem [shape: bf16[450,1152], index: 1, kind: input, shape index: {}]
  %s2 = inlined_call_operand.vmem [shape: f32[20,1], index: 2, kind: input, shape index: {}]
  %s3 = inlined_call_operand.vmem [shape: f32[20,288], index: 3, kind: output, shape index: {}]
  %s4 = sld [smem:[#allocation0]]
  $region22: #{lenet_forward.3} parent=0
    _
  %s6 = ssub.s32 1, %s4
  %s7 = scalar_select 0, %s6, %s4
  // Predicated region
  $region2: #{lenet_forward.3} parent=0 // pred_check
    _
  $region3: #{lenet_forward.3} parent=0 // pred_check_branch
    %9 = sbr.rel (0) target = $region5
  $region4: #{lenet_forward.3} parent=0 // pred_region
    _
  $region5: #{lenet_forward.3} parent=0 // pred_fallthru
    _
  // Predicated region
  $region6: #{lenet_forward.3} parent=0 // pred_check
    _
  $region7: #{lenet_forward.3} parent=0 // pred_check_branch
    %11 = sbr.rel (0) target = $region9
  $region8: #{lenet_forward.3} parent=0 // pred_region
    _
  $region9: #{lenet_forward.3} parent=0 // pred_fallthru
    _
  // Predicated region
  $region10: #{lenet_forward.3} parent=0 // pred_check
    _
  $region11: #{lenet_forward.3} parent=0 // pred_check_branch
    %13 = sbr.rel (0) target = $region13
  $region12: #{lenet_forward.3} parent=0 // pred_region
    _
  $region13: #{lenet_forward.3} parent=0 // pred_fallthru
    _
  %v15 = vld [vmem:[%s0] sm:$0xff]
  %v16 = vld [vmem:[%s0 + $0x8] sm:$0xff]
  %v17 = vld [vmem:[%s0 + $0x10] sm:$0xff]
  %v18 = vld [vmem:[%s0 + $0x18] sm:$0xff]
  %v19 = vld [vmem:[%s0 + $0x20] sm:$0x33]
  %v20 = vld [vmem:[%s0 + $0x28] sm:$0x33]
  %v21 = vld [vmem:[%s1] sm:$0xff]
  %v22 = vld [vmem:[%s1 + $0x8] sm:$0xff]
  %v23 = vld [vmem:[%s1 + $0x10] sm:$0xff]
  %v24 = vld [vmem:[%s1 + $0x18] sm:$0xff]
  %v25 = vld [vmem:[%s1 + $0x20] sm:$0xf]
  %v26 = vld [vmem:[%s1 + $0x24] sm:$0xff]
  %v27 = vld [vmem:[%s1 + $0x2c] sm:$0xff]
  %v28 = vld [vmem:[%s1 + $0x34] sm:$0xff]
  %v29 = vld [vmem:[%s1 + $0x3c] sm:$0xff]
  %v30 = vld [vmem:[%s1 + $0x44] sm:$0xf]
  %v31 = vld [vmem:[%s1 + $0x48] sm:$0xff]
  %v32 = vld [vmem:[%s1 + $0x50] sm:$0xff]
  %v33 = vld [vmem:[%s1 + $0x58] sm:$0xff]
  %v34 = vld [vmem:[%s1 + $0x60] sm:$0xff]
  %v35 = vld [vmem:[%s1 + $0x68] sm:$0xf]
  %v36 = vld [vmem:[%s1 + $0x6c] sm:$0xff]
  %v37 = vld [vmem:[%s1 + $0x74] sm:$0xff]
  %v38 = vld [vmem:[%s1 + $0x7c] sm:$0xff]
  %v39 = vld [vmem:[%s1 + $0x84] sm:$0xff]
  %v40 = vld [vmem:[%s1 + $0x8c] sm:$0xf]
  %v41 = vld [vmem:[%s1 + $0x90] sm:$0xff]
  %v42 = vld [vmem:[%s1 + $0x98] sm:$0xff]
  %v43 = vld [vmem:[%s1 + $0xa0] sm:$0xff]
  %v44 = vld [vmem:[%s1 + $0xa8] sm:$0xff]
  %v45 = vld [vmem:[%s1 + $0xb0] sm:$0xf]
  %v46 = vld [vmem:[%s1 + $0xb4] sm:$0xff]
  %v47 = vld [vmem:[%s1 + $0xbc] sm:$0xff]
  %v48 = vld [vmem:[%s1 + $0xc4] sm:$0xff]
  %v49 = vld [vmem:[%s1 + $0xcc] sm:$0xff]
  %v50 = vld [vmem:[%s1 + $0xd4] sm:$0xf]
  %v51 = vld [vmem:[%s1 + $0xd8] sm:$0xff]
  %v52 = vld [vmem:[%s1 + $0xe0] sm:$0xff]
  %v53 = vld [vmem:[%s1 + $0xe8] sm:$0xff]
  %v54 = vld [vmem:[%s1 + $0xf0] sm:$0xff]
  %v55 = vld [vmem:[%s1 + $0xf8] sm:$0xf]
  %v56 = vld [vmem:[%s1 + $0xfc] sm:$0xff]
  %v57 = vld [vmem:[%s1 + $0x104] sm:$0xff]
  %v58 = vld [vmem:[%s1 + $0x10c] sm:$0xff]
  %v59 = vld [vmem:[%s1 + $0x114] sm:$0xff]
  %v60 = vld [vmem:[%s1 + $0x11c] sm:$0xf]
  %v61 = vld [vmem:[%s1 + $0x120] sm:$0xff]
  %v62 = vld [vmem:[%s1 + $0x128] sm:$0xff]
  %v63 = vld [vmem:[%s1 + $0x130] sm:$0xff]
  %v64 = vld [vmem:[%s1 + $0x138] sm:$0xff]
  %v65 = vld [vmem:[%s1 + $0x140] sm:$0xf]
  %v66 = vld [vmem:[%s1 + $0x144] sm:$0xff]
  %v67 = vld [vmem:[%s1 + $0x14c] sm:$0xff]
  %v68 = vld [vmem:[%s1 + $0x154] sm:$0xff]
  %v69 = vld [vmem:[%s1 + $0x15c] sm:$0xff]
  %v70 = vld [vmem:[%s1 + $0x164] sm:$0xf]
  %v71 = vld [vmem:[%s1 + $0x168] sm:$0xff]
  %v72 = vld [vmem:[%s1 + $0x170] sm:$0xff]
  %v73 = vld [vmem:[%s1 + $0x178] sm:$0xff]
  %v74 = vld [vmem:[%s1 + $0x180] sm:$0xff]
  %v75 = vld [vmem:[%s1 + $0x188] sm:$0xf]
  %v76 = vld [vmem:[%s1 + $0x18c] sm:$0xff]
  %v77 = vld [vmem:[%s1 + $0x194] sm:$0xff]
  %v78 = vld [vmem:[%s1 + $0x19c] sm:$0xff]
  %v79 = vld [vmem:[%s1 + $0x1a4] sm:$0xff]
  %v80 = vld [vmem:[%s1 + $0x1ac] sm:$0xf]
  %v81 = vld [vmem:[%s1 + $0x1b0] sm:$0xff]
  %v82 = vld [vmem:[%s1 + $0x1b8] sm:$0xff]
  %v83 = vld [vmem:[%s1 + $0x1c0] sm:$0xff]
  %v84 = vld [vmem:[%s1 + $0x1c8] sm:$0xff]
  %v85 = vld [vmem:[%s1 + $0x1d0] sm:$0xf]
  %v86 = vld [vmem:[%s1 + $0x1d4] sm:$0xff]
  %v87 = vld [vmem:[%s1 + $0x1dc] sm:$0xff]
  %v88 = vld [vmem:[%s1 + $0x1e4] sm:$0xff]
  %v89 = vld [vmem:[%s1 + $0x1ec] sm:$0xff]
  %v90 = vld [vmem:[%s1 + $0x1f4] sm:$0xf]
  %v91 = vld [vmem:[%s1 + $0x1f8] sm:$0xff]
  %v92 = vld [vmem:[%s1 + $0x200] sm:$0xff]
  %v93 = vld [vmem:[%s1 + $0x208] sm:$0xff]
  %v94 = vld [vmem:[%s1 + $0x210] sm:$0xff]
  %v95 = vld [vmem:[%s1 + $0x218] sm:$0xf]
  %v96 = vld [vmem:[%s1 + $0x21c] sm:$0xff]
  %v97 = vld [vmem:[%s1 + $0x224] sm:$0xff]
  %v98 = vld [vmem:[%s1 + $0x22c] sm:$0xff]
  %v99 = vld [vmem:[%s1 + $0x234] sm:$0xff]
  %v100 = vld [vmem:[%s1 + $0x23c] sm:$0xf]
  %v101 = vld [vmem:[%s1 + $0x240] sm:$0xff]
  %v102 = vld [vmem:[%s1 + $0x248] sm:$0xff]
  %v103 = vld [vmem:[%s1 + $0x250] sm:$0xff]
  %v104 = vld [vmem:[%s1 + $0x258] sm:$0xff]
  %v105 = vld [vmem:[%s1 + $0x260] sm:$0xf]
  %v106 = vld [vmem:[%s1 + $0x264] sm:$0xff]
  %v107 = vld [vmem:[%s1 + $0x26c] sm:$0xff]
  %v108 = vld [vmem:[%s1 + $0x274] sm:$0xff]
  %v109 = vld [vmem:[%s1 + $0x27c] sm:$0xff]
  %v110 = vld [vmem:[%s1 + $0x284] sm:$0xf]
  %v111 = vld [vmem:[%s1 + $0x288] sm:$0xff]
  %v112 = vld [vmem:[%s1 + $0x290] sm:$0xff]
  %v113 = vld [vmem:[%s1 + $0x298] sm:$0xff]
  %v114 = vld [vmem:[%s1 + $0x2a0] sm:$0xff]
  %v115 = vld [vmem:[%s1 + $0x2a8] sm:$0xf]
  %v116 = vld [vmem:[%s1 + $0x2ac] sm:$0xff]
  %v117 = vld [vmem:[%s1 + $0x2b4] sm:$0xff]
  %v118 = vld [vmem:[%s1 + $0x2bc] sm:$0xff]
  %v119 = vld [vmem:[%s1 + $0x2c4] sm:$0xff]
  %v120 = vld [vmem:[%s1 + $0x2cc] sm:$0xf]
  %v121 = vld [vmem:[%s1 + $0x2d0] sm:$0xff]
  %v122 = vld [vmem:[%s1 + $0x2d8] sm:$0xff]
  %v123 = vld [vmem:[%s1 + $0x2e0] sm:$0xff]
  %v124 = vld [vmem:[%s1 + $0x2e8] sm:$0xff]
  %v125 = vld [vmem:[%s1 + $0x2f0] sm:$0xf]
  %v126 = vld [vmem:[%s1 + $0x2f4] sm:$0xff]
  %v127 = vld [vmem:[%s1 + $0x2fc] sm:$0xff]
  %v128 = vld [vmem:[%s1 + $0x304] sm:$0xff]
  %v129 = vld [vmem:[%s1 + $0x30c] sm:$0xff]
  %v130 = vld [vmem:[%s1 + $0x314] sm:$0xf]
  %v131 = vld [vmem:[%s1 + $0x318] sm:$0xff]
  %v132 = vld [vmem:[%s1 + $0x320] sm:$0xff]
  %v133 = vld [vmem:[%s1 + $0x328] sm:$0xff]
  %v134 = vld [vmem:[%s1 + $0x330] sm:$0xff]
  %v135 = vld [vmem:[%s1 + $0x338] sm:$0xf]
  %v136 = vld [vmem:[%s1 + $0x33c] sm:$0xff]
  %v137 = vld [vmem:[%s1 + $0x344] sm:$0xff]
  %v138 = vld [vmem:[%s1 + $0x34c] sm:$0xff]
  %v139 = vld [vmem:[%s1 + $0x354] sm:$0xff]
  %v140 = vld [vmem:[%s1 + $0x35c] sm:$0xf]
  %v141 = vld [vmem:[%s1 + $0x360] sm:$0xff]
  %v142 = vld [vmem:[%s1 + $0x368] sm:$0xff]
  %v143 = vld [vmem:[%s1 + $0x370] sm:$0xff]
  %v144 = vld [vmem:[%s1 + $0x378] sm:$0xff]
  %v145 = vld [vmem:[%s1 + $0x380] sm:$0xf]
  %v146 = vld [vmem:[%s1 + $0x384] sm:$0xff]
  %v147 = vld [vmem:[%s1 + $0x38c] sm:$0xff]
  %v148 = vld [vmem:[%s1 + $0x394] sm:$0xff]
  %v149 = vld [vmem:[%s1 + $0x39c] sm:$0xff]
  %v150 = vld [vmem:[%s1 + $0x3a4] sm:$0xf]
  %v151 = vld [vmem:[%s1 + $0x3a8] sm:$0xff]
  %v152 = vld [vmem:[%s1 + $0x3b0] sm:$0xff]
  %v153 = vld [vmem:[%s1 + $0x3b8] sm:$0xff]
  %v154 = vld [vmem:[%s1 + $0x3c0] sm:$0xff]
  %v155 = vld [vmem:[%s1 + $0x3c8] sm:$0xf]
  %v156 = vld [vmem:[%s1 + $0x3cc] sm:$0xff]
  %v157 = vld [vmem:[%s1 + $0x3d4] sm:$0xff]
  %v158 = vld [vmem:[%s1 + $0x3dc] sm:$0xff]
  %v159 = vld [vmem:[%s1 + $0x3e4] sm:$0xff]
  %v160 = vld [vmem:[%s1 + $0x3ec] sm:$0xf]
  %v161 = vld [vmem:[%s1 + $0x3f0] sm:$0xff]
  %v162 = vld [vmem:[%s1 + $0x3f8] sm:$0xff]
  %v163 = vld [vmem:[%s1 + $0x400] sm:$0xff]
  %v164 = vld [vmem:[%s1 + $0x408] sm:$0xff]
  %v165 = vld [vmem:[%s1 + $0x410] sm:$0xf]
  %v166 = vld [vmem:[%s1 + $0x414] sm:$0xff]
  %v167 = vld [vmem:[%s1 + $0x41c] sm:$0xff]
  %v168 = vld [vmem:[%s1 + $0x424] sm:$0xff]
  %v169 = vld [vmem:[%s1 + $0x42c] sm:$0xff]
  %v170 = vld [vmem:[%s1 + $0x434] sm:$0xf]
  %v171 = vld [vmem:[%s1 + $0x438] sm:$0xff]
  %v172 = vld [vmem:[%s1 + $0x440] sm:$0xff]
  %v173 = vld [vmem:[%s1 + $0x448] sm:$0xff]
  %v174 = vld [vmem:[%s1 + $0x450] sm:$0xff]
  %v175 = vld [vmem:[%s1 + $0x458] sm:$0xf]
  %v176 = vld [vmem:[%s1 + $0x45c] sm:$0xff]
  %v177 = vld [vmem:[%s1 + $0x464] sm:$0xff]
  %v178 = vld [vmem:[%s1 + $0x46c] sm:$0xff]
  %v179 = vld [vmem:[%s1 + $0x474] sm:$0xff]
  %v180 = vld [vmem:[%s1 + $0x47c] sm:$0xf]
  %v181 = vld [vmem:[%s1 + $0x480] sm:$0xff]
  %v182 = vld [vmem:[%s1 + $0x488] sm:$0xff]
  %v183 = vld [vmem:[%s1 + $0x490] sm:$0xff]
  %v184 = vld [vmem:[%s1 + $0x498] sm:$0xff]
  %v185 = vld [vmem:[%s1 + $0x4a0] sm:$0xf]
  %v186 = vld [vmem:[%s1 + $0x4a4] sm:$0xff]
  %v187 = vld [vmem:[%s1 + $0x4ac] sm:$0xff]
  %v188 = vld [vmem:[%s1 + $0x4b4] sm:$0xff]
  %v189 = vld [vmem:[%s1 + $0x4bc] sm:$0xff]
  %v190 = vld [vmem:[%s1 + $0x4c4] sm:$0xf]
  %v191 = vld [vmem:[%s1 + $0x4c8] sm:$0xff]
  %v192 = vld [vmem:[%s1 + $0x4d0] sm:$0xff]
  %v193 = vld [vmem:[%s1 + $0x4d8] sm:$0xff]
  %v194 = vld [vmem:[%s1 + $0x4e0] sm:$0xff]
  %v195 = vld [vmem:[%s1 + $0x4e8] sm:$0xf]
  %v196 = vld [vmem:[%s1 + $0x4ec] sm:$0xff]
  %v197 = vld [vmem:[%s1 + $0x4f4] sm:$0xff]
  %v198 = vld [vmem:[%s1 + $0x4fc] sm:$0xff]
  %v199 = vld [vmem:[%s1 + $0x504] sm:$0xff]
  %v200 = vld [vmem:[%s1 + $0x50c] sm:$0xf]
  %v201 = vld [vmem:[%s1 + $0x510] sm:$0xff]
  %v202 = vld [vmem:[%s1 + $0x518] sm:$0xff]
  %v203 = vld [vmem:[%s1 + $0x520] sm:$0xff]
  %v204 = vld [vmem:[%s1 + $0x528] sm:$0xff]
  %v205 = vld [vmem:[%s1 + $0x530] sm:$0xf]
  %v206 = vld [vmem:[%s1 + $0x534] sm:$0xff]
  %v207 = vld [vmem:[%s1 + $0x53c] sm:$0xff]
  %v208 = vld [vmem:[%s1 + $0x544] sm:$0xff]
  %v209 = vld [vmem:[%s1 + $0x54c] sm:$0xff]
  %v210 = vld [vmem:[%s1 + $0x554] sm:$0xf]
  %v211 = vld [vmem:[%s1 + $0x558] sm:$0xff]
  %v212 = vld [vmem:[%s1 + $0x560] sm:$0xff]
  %v213 = vld [vmem:[%s1 + $0x568] sm:$0xff]
  %v214 = vld [vmem:[%s1 + $0x570] sm:$0xff]
  %v215 = vld [vmem:[%s1 + $0x578] sm:$0xf]
  %v216 = vld [vmem:[%s1 + $0x57c] sm:$0xff]
  %v217 = vld [vmem:[%s1 + $0x584] sm:$0xff]
  %v218 = vld [vmem:[%s1 + $0x58c] sm:$0xff]
  %v219 = vld [vmem:[%s1 + $0x594] sm:$0xff]
  %v220 = vld [vmem:[%s1 + $0x59c] sm:$0xf]
  %v221 = vld [vmem:[%s1 + $0x5a0] sm:$0xff]
  %v222 = vld [vmem:[%s1 + $0x5a8] sm:$0xff]
  %v223 = vld [vmem:[%s1 + $0x5b0] sm:$0xff]
  %v224 = vld [vmem:[%s1 + $0x5b8] sm:$0xff]
  %v225 = vld [vmem:[%s1 + $0x5c0] sm:$0xf]
  %v226 = vld [vmem:[%s1 + $0x5c4] sm:$0xff]
  %v227 = vld [vmem:[%s1 + $0x5cc] sm:$0xff]
  %v228 = vld [vmem:[%s1 + $0x5d4] sm:$0xff]
  %v229 = vld [vmem:[%s1 + $0x5dc] sm:$0xff]
  %v230 = vld [vmem:[%s1 + $0x5e4] sm:$0xf]
  %v231 = vld [vmem:[%s1 + $0x5e8] sm:$0xff]
  %v232 = vld [vmem:[%s1 + $0x5f0] sm:$0xff]
  %v233 = vld [vmem:[%s1 + $0x5f8] sm:$0xff]
  %v234 = vld [vmem:[%s1 + $0x600] sm:$0xff]
  %v235 = vld [vmem:[%s1 + $0x608] sm:$0xf]
  %v236 = vld [vmem:[%s1 + $0x60c] sm:$0xff]
  %v237 = vld [vmem:[%s1 + $0x614] sm:$0xff]
  %v238 = vld [vmem:[%s1 + $0x61c] sm:$0xff]
  %v239 = vld [vmem:[%s1 + $0x624] sm:$0xff]
  %v240 = vld [vmem:[%s1 + $0x62c] sm:$0xf]
  %v241 = vld [vmem:[%s1 + $0x630] sm:$0xff]
  %v242 = vld [vmem:[%s1 + $0x638] sm:$0xff]
  %v243 = vld [vmem:[%s1 + $0x640] sm:$0xff]
  %v244 = vld [vmem:[%s1 + $0x648] sm:$0xff]
  %v245 = vld [vmem:[%s1 + $0x650] sm:$0xf]
  %v246 = vld [vmem:[%s1 + $0x654] sm:$0xff]
  %v247 = vld [vmem:[%s1 + $0x65c] sm:$0xff]
  %v248 = vld [vmem:[%s1 + $0x664] sm:$0xff]
  %v249 = vld [vmem:[%s1 + $0x66c] sm:$0xff]
  %v250 = vld [vmem:[%s1 + $0x674] sm:$0xf]
  %v251 = vld [vmem:[%s1 + $0x678] sm:$0xff]
  %v252 = vld [vmem:[%s1 + $0x680] sm:$0xff]
  %v253 = vld [vmem:[%s1 + $0x688] sm:$0xff]
  %v254 = vld [vmem:[%s1 + $0x690] sm:$0xff]
  %v255 = vld [vmem:[%s1 + $0x698] sm:$0xf]
  %v256 = vld [vmem:[%s1 + $0x69c] sm:$0xff]
  %v257 = vld [vmem:[%s1 + $0x6a4] sm:$0xff]
  %v258 = vld [vmem:[%s1 + $0x6ac] sm:$0xff]
  %v259 = vld [vmem:[%s1 + $0x6b4] sm:$0xff]
  %v260 = vld [vmem:[%s1 + $0x6bc] sm:$0xf]
  %v261 = vld [vmem:[%s1 + $0x6c0] sm:$0xff]
  %v262 = vld [vmem:[%s1 + $0x6c8] sm:$0xff]
  %v263 = vld [vmem:[%s1 + $0x6d0] sm:$0xff]
  %v264 = vld [vmem:[%s1 + $0x6d8] sm:$0xff]
  %v265 = vld [vmem:[%s1 + $0x6e0] sm:$0xf]
  %v266 = vld [vmem:[%s1 + $0x6e4] sm:$0xff]
  %v267 = vld [vmem:[%s1 + $0x6ec] sm:$0xff]
  %v268 = vld [vmem:[%s1 + $0x6f4] sm:$0xff]
  %v269 = vld [vmem:[%s1 + $0x6fc] sm:$0xff]
  %v270 = vld [vmem:[%s1 + $0x704] sm:$0xf]
  %v271 = vld [vmem:[%s1 + $0x708] sm:$0xff]
  %v272 = vld [vmem:[%s1 + $0x710] sm:$0xff]
  %v273 = vld [vmem:[%s1 + $0x718] sm:$0xff]
  %v274 = vld [vmem:[%s1 + $0x720] sm:$0xff]
  %v275 = vld [vmem:[%s1 + $0x728] sm:$0xf]
  %v276 = vld [vmem:[%s1 + $0x72c] sm:$0xff]
  %v277 = vld [vmem:[%s1 + $0x734] sm:$0xff]
  %v278 = vld [vmem:[%s1 + $0x73c] sm:$0xff]
  %v279 = vld [vmem:[%s1 + $0x744] sm:$0xff]
  %v280 = vld [vmem:[%s1 + $0x74c] sm:$0xf]
  %v281 = vld [vmem:[%s1 + $0x750] sm:$0xff]
  %v282 = vld [vmem:[%s1 + $0x758] sm:$0xff]
  %v283 = vld [vmem:[%s1 + $0x760] sm:$0xff]
  %v284 = vld [vmem:[%s1 + $0x768] sm:$0xff]
  %v285 = vld [vmem:[%s1 + $0x770] sm:$0xf]
  %v286 = vld [vmem:[%s1 + $0x774] sm:$0xff]
  %v287 = vld [vmem:[%s1 + $0x77c] sm:$0xff]
  %v288 = vld [vmem:[%s1 + $0x784] sm:$0xff]
  %v289 = vld [vmem:[%s1 + $0x78c] sm:$0xff]
  %v290 = vld [vmem:[%s1 + $0x794] sm:$0xf]
  %v291 = vld [vmem:[%s1 + $0x798] sm:$0xff]
  %v292 = vld [vmem:[%s1 + $0x7a0] sm:$0xff]
  %v293 = vld [vmem:[%s1 + $0x7a8] sm:$0xff]
  %v294 = vld [vmem:[%s1 + $0x7b0] sm:$0xff]
  %v295 = vld [vmem:[%s1 + $0x7b8] sm:$0xf]
  %v296 = vld [vmem:[%s1 + $0x7bc] sm:$0xff]
  %v297 = vld [vmem:[%s1 + $0x7c4] sm:$0xff]
  %v298 = vld [vmem:[%s1 + $0x7cc] sm:$0xff]
  %v299 = vld [vmem:[%s1 + $0x7d4] sm:$0xff]
  %v300 = vld [vmem:[%s1 + $0x7dc] sm:$0xf]
  %v301 = vld [vmem:[%s1 + $0x7e0] sm:$0x11]
  %v302 = vld [vmem:[%s1 + $0x7e8] sm:$0x11]
  %v303 = vld [vmem:[%s1 + $0x7f0] sm:$0x11]
  %v304 = vld [vmem:[%s1 + $0x7f8] sm:$0x11]
  %v305 = vld [vmem:[%s1 + $0x800] sm:$0x1]
  %v306 = vld [vmem:[%s2] sm:$0xff]
  %v307 = vld [vmem:[%s2 + $0x8] sm:$0xff]
  %v308 = vld [vmem:[%s2 + $0x10] sm:$0xf]
  %310 = vset.pattern.permute.xlu0 0
  %311 = vperm.xlu0 %310, %v306
  %v312 = vpop.permute.xlu0 %311
  %315 = vset.pattern.permute.xlu0 0
  %316 = vperm.xlu0 %315, %v307
  %v317 = vpop.permute.xlu0 %316
  %320 = vset.pattern.permute.xlu0 0
  %321 = vperm.xlu0 %320, %v308
  %v322 = vpop.permute.xlu0 %321
  %v330 = vunpack.c.l.b16 %v15
  %v331 = vunpack.c.h.b16 %v15
  %v332 = vunpack.c.l.b16 %v16
  %v333 = vunpack.c.h.b16 %v16
  %v334 = vunpack.c.l.b16 %v17
  %v335 = vunpack.c.h.b16 %v17
  %v336 = vunpack.c.l.b16 %v18
  %v337 = vunpack.c.h.b16 %v18
  %v338 = vunpack.c.l.b16 %v19
  %v339 = vunpack.c.h.b16 %v19
  %v340 = vunpack.c.l.b16 %v20
  %v341 = vunpack.c.h.b16 %v20
  %v342 = vpack.c.b16 %v334, %v330
  %v343 = vpack.c.b16 %v335, %v331
  %v344 = vpack.c.b16 %v336, %v332
  %v345 = vpack.c.b16 %v337, %v333
  %v346 = vpack.c.b16 %v338, %v338
  %v347 = vpack.c.b16 %v339, %v339
  %v348 = vpack.c.b16 %v340, %v340
  %v349 = vpack.c.b16 %v341, %v341
  %v641 = vunpack.c.l.b16 %v21
  %v642 = vunpack.c.h.b16 %v21
  %v643 = vunpack.c.l.b16 %v22
  %v644 = vunpack.c.h.b16 %v22
  %v645 = vunpack.c.l.b16 %v23
  %v646 = vunpack.c.h.b16 %v23
  %v647 = vunpack.c.l.b16 %v24
  %v648 = vunpack.c.h.b16 %v24
  %v649 = vunpack.c.l.b16 %v25
  %v650 = vunpack.c.l.b16 %v26
  %v651 = vunpack.c.h.b16 %v26
  %v652 = vunpack.c.l.b16 %v27
  %v653 = vunpack.c.h.b16 %v27
  %v654 = vunpack.c.l.b16 %v28
  %v655 = vunpack.c.h.b16 %v28
  %v656 = vunpack.c.l.b16 %v29
  %v657 = vunpack.c.h.b16 %v29
  %v658 = vunpack.c.l.b16 %v30
  %v659 = vunpack.c.l.b16 %v31
  %v660 = vunpack.c.h.b16 %v31
  %v661 = vunpack.c.l.b16 %v32
  %v662 = vunpack.c.h.b16 %v32
  %v663 = vunpack.c.l.b16 %v33
  %v664 = vunpack.c.h.b16 %v33
  %v665 = vunpack.c.l.b16 %v34
  %v666 = vunpack.c.h.b16 %v34
  %v667 = vunpack.c.l.b16 %v35
  %v668 = vunpack.c.l.b16 %v36
  %v669 = vunpack.c.h.b16 %v36
  %v670 = vunpack.c.l.b16 %v37
  %v671 = vunpack.c.h.b16 %v37
  %v672 = vunpack.c.l.b16 %v38
  %v673 = vunpack.c.h.b16 %v38
  %v674 = vunpack.c.l.b16 %v39
  %v675 = vunpack.c.h.b16 %v39
  %v676 = vunpack.c.l.b16 %v40
  %v677 = vunpack.c.l.b16 %v41
  %v678 = vunpack.c.h.b16 %v41
  %v679 = vunpack.c.l.b16 %v42
  %v680 = vunpack.c.h.b16 %v42
  %v681 = vunpack.c.l.b16 %v43
  %v682 = vunpack.c.h.b16 %v43
  %v683 = vunpack.c.l.b16 %v44
  %v684 = vunpack.c.h.b16 %v44
  %v685 = vunpack.c.l.b16 %v45
  %v686 = vunpack.c.l.b16 %v46
  %v687 = vunpack.c.h.b16 %v46
  %v688 = vunpack.c.l.b16 %v47
  %v689 = vunpack.c.h.b16 %v47
  %v690 = vunpack.c.l.b16 %v48
  %v691 = vunpack.c.h.b16 %v48
  %v692 = vunpack.c.l.b16 %v49
  %v693 = vunpack.c.h.b16 %v49
  %v694 = vunpack.c.l.b16 %v50
  %v695 = vunpack.c.l.b16 %v51
  %v696 = vunpack.c.h.b16 %v51
  %v697 = vunpack.c.l.b16 %v52
  %v698 = vunpack.c.h.b16 %v52
  %v699 = vunpack.c.l.b16 %v53
  %v700 = vunpack.c.h.b16 %v53
  %v701 = vunpack.c.l.b16 %v54
  %v702 = vunpack.c.h.b16 %v54
  %v703 = vunpack.c.l.b16 %v55
  %v704 = vunpack.c.l.b16 %v56
  %v705 = vunpack.c.h.b16 %v56
  %v706 = vunpack.c.l.b16 %v57
  %v707 = vunpack.c.h.b16 %v57
  %v708 = vunpack.c.l.b16 %v58
  %v709 = vunpack.c.h.b16 %v58
  %v710 = vunpack.c.l.b16 %v59
  %v711 = vunpack.c.h.b16 %v59
  %v712 = vunpack.c.l.b16 %v60
  %v713 = vunpack.c.l.b16 %v61
  %v714 = vunpack.c.h.b16 %v61
  %v715 = vunpack.c.l.b16 %v62
  %v716 = vunpack.c.h.b16 %v62
  %v717 = vunpack.c.l.b16 %v63
  %v718 = vunpack.c.h.b16 %v63
  %v719 = vunpack.c.l.b16 %v64
  %v720 = vunpack.c.h.b16 %v64
  %v721 = vunpack.c.l.b16 %v65
  %v722 = vunpack.c.l.b16 %v66
  %v723 = vunpack.c.h.b16 %v66
  %v724 = vunpack.c.l.b16 %v67
  %v725 = vunpack.c.h.b16 %v67
  %v726 = vunpack.c.l.b16 %v68
  %v727 = vunpack.c.h.b16 %v68
  %v728 = vunpack.c.l.b16 %v69
  %v729 = vunpack.c.h.b16 %v69
  %v730 = vunpack.c.l.b16 %v70
  %v731 = vunpack.c.l.b16 %v71
  %v732 = vunpack.c.h.b16 %v71
  %v733 = vunpack.c.l.b16 %v72
  %v734 = vunpack.c.h.b16 %v72
  %v735 = vunpack.c.l.b16 %v73
  %v736 = vunpack.c.h.b16 %v73
  %v737 = vunpack.c.l.b16 %v74
  %v738 = vunpack.c.h.b16 %v74
  %v739 = vunpack.c.l.b16 %v75
  %v740 = vunpack.c.l.b16 %v76
  %v741 = vunpack.c.h.b16 %v76
  %v742 = vunpack.c.l.b16 %v77
  %v743 = vunpack.c.h.b16 %v77
  %v744 = vunpack.c.l.b16 %v78
  %v745 = vunpack.c.h.b16 %v78
  %v746 = vunpack.c.l.b16 %v79
  %v747 = vunpack.c.h.b16 %v79
  %v748 = vunpack.c.l.b16 %v80
  %v749 = vunpack.c.l.b16 %v81
  %v750 = vunpack.c.h.b16 %v81
  %v751 = vunpack.c.l.b16 %v82
  %v752 = vunpack.c.h.b16 %v82
  %v753 = vunpack.c.l.b16 %v83
  %v754 = vunpack.c.h.b16 %v83
  %v755 = vunpack.c.l.b16 %v84
  %v756 = vunpack.c.h.b16 %v84
  %v757 = vunpack.c.l.b16 %v85
  %v758 = vunpack.c.l.b16 %v86
  %v759 = vunpack.c.h.b16 %v86
  %v760 = vunpack.c.l.b16 %v87
  %v761 = vunpack.c.h.b16 %v87
  %v762 = vunpack.c.l.b16 %v88
  %v763 = vunpack.c.h.b16 %v88
  %v764 = vunpack.c.l.b16 %v89
  %v765 = vunpack.c.h.b16 %v89
  %v766 = vunpack.c.l.b16 %v90
  %v767 = vunpack.c.l.b16 %v91
  %v768 = vunpack.c.h.b16 %v91
  %v769 = vunpack.c.l.b16 %v92
  %v770 = vunpack.c.h.b16 %v92
  %v771 = vunpack.c.l.b16 %v93
  %v772 = vunpack.c.h.b16 %v93
  %v773 = vunpack.c.l.b16 %v94
  %v774 = vunpack.c.h.b16 %v94
  %v775 = vunpack.c.l.b16 %v95
  %v776 = vunpack.c.l.b16 %v96
  %v777 = vunpack.c.h.b16 %v96
  %v778 = vunpack.c.l.b16 %v97
  %v779 = vunpack.c.h.b16 %v97
  %v780 = vunpack.c.l.b16 %v98
  %v781 = vunpack.c.h.b16 %v98
  %v782 = vunpack.c.l.b16 %v99
  %v783 = vunpack.c.h.b16 %v99
  %v784 = vunpack.c.l.b16 %v100
  %v785 = vunpack.c.l.b16 %v101
  %v786 = vunpack.c.h.b16 %v101
  %v787 = vunpack.c.l.b16 %v102
  %v788 = vunpack.c.h.b16 %v102
  %v789 = vunpack.c.l.b16 %v103
  %v790 = vunpack.c.h.b16 %v103
  %v791 = vunpack.c.l.b16 %v104
  %v792 = vunpack.c.h.b16 %v104
  %v793 = vunpack.c.l.b16 %v105
  %v794 = vunpack.c.l.b16 %v106
  %v795 = vunpack.c.h.b16 %v106
  %v796 = vunpack.c.l.b16 %v107
  %v797 = vunpack.c.h.b16 %v107
  %v798 = vunpack.c.l.b16 %v108
  %v799 = vunpack.c.h.b16 %v108
  %v800 = vunpack.c.l.b16 %v109
  %v801 = vunpack.c.h.b16 %v109
  %v802 = vunpack.c.l.b16 %v110
  %v803 = vunpack.c.l.b16 %v111
  %v804 = vunpack.c.h.b16 %v111
  %v805 = vunpack.c.l.b16 %v112
  %v806 = vunpack.c.h.b16 %v112
  %v807 = vunpack.c.l.b16 %v113
  %v808 = vunpack.c.h.b16 %v113
  %v809 = vunpack.c.l.b16 %v114
  %v810 = vunpack.c.h.b16 %v114
  %v811 = vunpack.c.l.b16 %v115
  %v812 = vunpack.c.l.b16 %v116
  %v813 = vunpack.c.h.b16 %v116
  %v814 = vunpack.c.l.b16 %v117
  %v815 = vunpack.c.h.b16 %v117
  %v816 = vunpack.c.l.b16 %v118
  %v817 = vunpack.c.h.b16 %v118
  %v818 = vunpack.c.l.b16 %v119
  %v819 = vunpack.c.h.b16 %v119
  %v820 = vunpack.c.l.b16 %v120
  %v821 = vunpack.c.l.b16 %v121
  %v822 = vunpack.c.h.b16 %v121
  %v823 = vunpack.c.l.b16 %v122
  %v824 = vunpack.c.h.b16 %v122
  %v825 = vunpack.c.l.b16 %v123
  %v826 = vunpack.c.h.b16 %v123
  %v827 = vunpack.c.l.b16 %v124
  %v828 = vunpack.c.h.b16 %v124
  %v829 = vunpack.c.l.b16 %v125
  %v830 = vunpack.c.l.b16 %v126
  %v831 = vunpack.c.h.b16 %v126
  %v832 = vunpack.c.l.b16 %v127
  %v833 = vunpack.c.h.b16 %v127
  %v834 = vunpack.c.l.b16 %v128
  %v835 = vunpack.c.h.b16 %v128
  %v836 = vunpack.c.l.b16 %v129
  %v837 = vunpack.c.h.b16 %v129
  %v838 = vunpack.c.l.b16 %v130
  %v839 = vunpack.c.l.b16 %v131
  %v840 = vunpack.c.h.b16 %v131
  %v841 = vunpack.c.l.b16 %v132
  %v842 = vunpack.c.h.b16 %v132
  %v843 = vunpack.c.l.b16 %v133
  %v844 = vunpack.c.h.b16 %v133
  %v845 = vunpack.c.l.b16 %v134
  %v846 = vunpack.c.h.b16 %v134
  %v847 = vunpack.c.l.b16 %v135
  %v848 = vunpack.c.l.b16 %v136
  %v849 = vunpack.c.h.b16 %v136
  %v850 = vunpack.c.l.b16 %v137
  %v851 = vunpack.c.h.b16 %v137
  %v852 = vunpack.c.l.b16 %v138
  %v853 = vunpack.c.h.b16 %v138
  %v854 = vunpack.c.l.b16 %v139
  %v855 = vunpack.c.h.b16 %v139
  %v856 = vunpack.c.l.b16 %v140
  %v857 = vunpack.c.l.b16 %v141
  %v858 = vunpack.c.h.b16 %v141
  %v859 = vunpack.c.l.b16 %v142
  %v860 = vunpack.c.h.b16 %v142
  %v861 = vunpack.c.l.b16 %v143
  %v862 = vunpack.c.h.b16 %v143
  %v863 = vunpack.c.l.b16 %v144
  %v864 = vunpack.c.h.b16 %v144
  %v865 = vunpack.c.l.b16 %v145
  %v866 = vunpack.c.l.b16 %v146
  %v867 = vunpack.c.h.b16 %v146
  %v868 = vunpack.c.l.b16 %v147
  %v869 = vunpack.c.h.b16 %v147
  %v870 = vunpack.c.l.b16 %v148
  %v871 = vunpack.c.h.b16 %v148
  %v872 = vunpack.c.l.b16 %v149
  %v873 = vunpack.c.h.b16 %v149
  %v874 = vunpack.c.l.b16 %v150
  %v875 = vunpack.c.l.b16 %v151
  %v876 = vunpack.c.h.b16 %v151
  %v877 = vunpack.c.l.b16 %v152
  %v878 = vunpack.c.h.b16 %v152
  %v879 = vunpack.c.l.b16 %v153
  %v880 = vunpack.c.h.b16 %v153
  %v881 = vunpack.c.l.b16 %v154
  %v882 = vunpack.c.h.b16 %v154
  %v883 = vunpack.c.l.b16 %v155
  %v884 = vunpack.c.l.b16 %v156
  %v885 = vunpack.c.h.b16 %v156
  %v886 = vunpack.c.l.b16 %v157
  %v887 = vunpack.c.h.b16 %v157
  %v888 = vunpack.c.l.b16 %v158
  %v889 = vunpack.c.h.b16 %v158
  %v890 = vunpack.c.l.b16 %v159
  %v891 = vunpack.c.h.b16 %v159
  %v892 = vunpack.c.l.b16 %v160
  %v893 = vunpack.c.l.b16 %v161
  %v894 = vunpack.c.h.b16 %v161
  %v895 = vunpack.c.l.b16 %v162
  %v896 = vunpack.c.h.b16 %v162
  %v897 = vunpack.c.l.b16 %v163
  %v898 = vunpack.c.h.b16 %v163
  %v899 = vunpack.c.l.b16 %v164
  %v900 = vunpack.c.h.b16 %v164
  %v901 = vunpack.c.l.b16 %v165
  %v902 = vunpack.c.l.b16 %v166
  %v903 = vunpack.c.h.b16 %v166
  %v904 = vunpack.c.l.b16 %v167
  %v905 = vunpack.c.h.b16 %v167
  %v906 = vunpack.c.l.b16 %v168
  %v907 = vunpack.c.h.b16 %v168
  %v908 = vunpack.c.l.b16 %v169
  %v909 = vunpack.c.h.b16 %v169
  %v910 = vunpack.c.l.b16 %v170
  %v911 = vunpack.c.l.b16 %v171
  %v912 = vunpack.c.h.b16 %v171
  %v913 = vunpack.c.l.b16 %v172
  %v914 = vunpack.c.h.b16 %v172
  %v915 = vunpack.c.l.b16 %v173
  %v916 = vunpack.c.h.b16 %v173
  %v917 = vunpack.c.l.b16 %v174
  %v918 = vunpack.c.h.b16 %v174
  %v919 = vunpack.c.l.b16 %v175
  %v920 = vunpack.c.l.b16 %v176
  %v921 = vunpack.c.h.b16 %v176
  %v922 = vunpack.c.l.b16 %v177
  %v923 = vunpack.c.h.b16 %v177
  %v924 = vunpack.c.l.b16 %v178
  %v925 = vunpack.c.h.b16 %v178
  %v926 = vunpack.c.l.b16 %v179
  %v927 = vunpack.c.h.b16 %v179
  %v928 = vunpack.c.l.b16 %v180
  %v929 = vunpack.c.l.b16 %v181
  %v930 = vunpack.c.h.b16 %v181
  %v931 = vunpack.c.l.b16 %v182
  %v932 = vunpack.c.h.b16 %v182
  %v933 = vunpack.c.l.b16 %v183
  %v934 = vunpack.c.h.b16 %v183
  %v935 = vunpack.c.l.b16 %v184
  %v936 = vunpack.c.h.b16 %v184
  %v937 = vunpack.c.l.b16 %v185
  %v938 = vunpack.c.l.b16 %v186
  %v939 = vunpack.c.h.b16 %v186
  %v940 = vunpack.c.l.b16 %v187
  %v941 = vunpack.c.h.b16 %v187
  %v942 = vunpack.c.l.b16 %v188
  %v943 = vunpack.c.h.b16 %v188
  %v944 = vunpack.c.l.b16 %v189
  %v945 = vunpack.c.h.b16 %v189
  %v946 = vunpack.c.l.b16 %v190
  %v947 = vunpack.c.l.b16 %v191
  %v948 = vunpack.c.h.b16 %v191
  %v949 = vunpack.c.l.b16 %v192
  %v950 = vunpack.c.h.b16 %v192
  %v951 = vunpack.c.l.b16 %v193
  %v952 = vunpack.c.h.b16 %v193
  %v953 = vunpack.c.l.b16 %v194
  %v954 = vunpack.c.h.b16 %v194
  %v955 = vunpack.c.l.b16 %v195
  %v956 = vunpack.c.l.b16 %v196
  %v957 = vunpack.c.h.b16 %v196
  %v958 = vunpack.c.l.b16 %v197
  %v959 = vunpack.c.h.b16 %v197
  %v960 = vunpack.c.l.b16 %v198
  %v961 = vunpack.c.h.b16 %v198
  %v962 = vunpack.c.l.b16 %v199
  %v963 = vunpack.c.h.b16 %v199
  %v964 = vunpack.c.l.b16 %v200
  %v965 = vunpack.c.l.b16 %v201
  %v966 = vunpack.c.h.b16 %v201
  %v967 = vunpack.c.l.b16 %v202
  %v968 = vunpack.c.h.b16 %v202
  %v969 = vunpack.c.l.b16 %v203
  %v970 = vunpack.c.h.b16 %v203
  %v971 = vunpack.c.l.b16 %v204
  %v972 = vunpack.c.h.b16 %v204
  %v973 = vunpack.c.l.b16 %v205
  %v974 = vunpack.c.l.b16 %v206
  %v975 = vunpack.c.h.b16 %v206
  %v976 = vunpack.c.l.b16 %v207
  %v977 = vunpack.c.h.b16 %v207
  %v978 = vunpack.c.l.b16 %v208
  %v979 = vunpack.c.h.b16 %v208
  %v980 = vunpack.c.l.b16 %v209
  %v981 = vunpack.c.h.b16 %v209
  %v982 = vunpack.c.l.b16 %v210
  %v983 = vunpack.c.l.b16 %v211
  %v984 = vunpack.c.h.b16 %v211
  %v985 = vunpack.c.l.b16 %v212
  %v986 = vunpack.c.h.b16 %v212
  %v987 = vunpack.c.l.b16 %v213
  %v988 = vunpack.c.h.b16 %v213
  %v989 = vunpack.c.l.b16 %v214
  %v990 = vunpack.c.h.b16 %v214
  %v991 = vunpack.c.l.b16 %v215
  %v992 = vunpack.c.l.b16 %v216
  %v993 = vunpack.c.h.b16 %v216
  %v994 = vunpack.c.l.b16 %v217
  %v995 = vunpack.c.h.b16 %v217
  %v996 = vunpack.c.l.b16 %v218
  %v997 = vunpack.c.h.b16 %v218
  %v998 = vunpack.c.l.b16 %v219
  %v999 = vunpack.c.h.b16 %v219
  %v1000 = vunpack.c.l.b16 %v220
  %v1001 = vunpack.c.l.b16 %v221
  %v1002 = vunpack.c.h.b16 %v221
  %v1003 = vunpack.c.l.b16 %v222
  %v1004 = vunpack.c.h.b16 %v222
  %v1005 = vunpack.c.l.b16 %v223
  %v1006 = vunpack.c.h.b16 %v223
  %v1007 = vunpack.c.l.b16 %v224
  %v1008 = vunpack.c.h.b16 %v224
  %v1009 = vunpack.c.l.b16 %v225
  %v1010 = vunpack.c.l.b16 %v226
  %v1011 = vunpack.c.h.b16 %v226
  %v1012 = vunpack.c.l.b16 %v227
  %v1013 = vunpack.c.h.b16 %v227
  %v1014 = vunpack.c.l.b16 %v228
  %v1015 = vunpack.c.h.b16 %v228
  %v1016 = vunpack.c.l.b16 %v229
  %v1017 = vunpack.c.h.b16 %v229
  %v1018 = vunpack.c.l.b16 %v230
  %v1019 = vunpack.c.l.b16 %v231
  %v1020 = vunpack.c.h.b16 %v231
  %v1021 = vunpack.c.l.b16 %v232
  %v1022 = vunpack.c.h.b16 %v232
  %v1023 = vunpack.c.l.b16 %v233
  %v1024 = vunpack.c.h.b16 %v233
  %v1025 = vunpack.c.l.b16 %v234
  %v1026 = vunpack.c.h.b16 %v234
  %v1027 = vunpack.c.l.b16 %v235
  %v1028 = vunpack.c.l.b16 %v236
  %v1029 = vunpack.c.h.b16 %v236
  %v1030 = vunpack.c.l.b16 %v237
  %v1031 = vunpack.c.h.b16 %v237
  %v1032 = vunpack.c.l.b16 %v238
  %v1033 = vunpack.c.h.b16 %v238
  %v1034 = vunpack.c.l.b16 %v239
  %v1035 = vunpack.c.h.b16 %v239
  %v1036 = vunpack.c.l.b16 %v240
  %v1037 = vunpack.c.l.b16 %v241
  %v1038 = vunpack.c.h.b16 %v241
  %v1039 = vunpack.c.l.b16 %v242
  %v1040 = vunpack.c.h.b16 %v242
  %v1041 = vunpack.c.l.b16 %v243
  %v1042 = vunpack.c.h.b16 %v243
  %v1043 = vunpack.c.l.b16 %v244
  %v1044 = vunpack.c.h.b16 %v244
  %v1045 = vunpack.c.l.b16 %v245
  %v1046 = vunpack.c.l.b16 %v246
  %v1047 = vunpack.c.h.b16 %v246
  %v1048 = vunpack.c.l.b16 %v247
  %v1049 = vunpack.c.h.b16 %v247
  %v1050 = vunpack.c.l.b16 %v248
  %v1051 = vunpack.c.h.b16 %v248
  %v1052 = vunpack.c.l.b16 %v249
  %v1053 = vunpack.c.h.b16 %v249
  %v1054 = vunpack.c.l.b16 %v250
  %v1055 = vunpack.c.l.b16 %v251
  %v1056 = vunpack.c.h.b16 %v251
  %v1057 = vunpack.c.l.b16 %v252
  %v1058 = vunpack.c.h.b16 %v252
  %v1059 = vunpack.c.l.b16 %v253
  %v1060 = vunpack.c.h.b16 %v253
  %v1061 = vunpack.c.l.b16 %v254
  %v1062 = vunpack.c.h.b16 %v254
  %v1063 = vunpack.c.l.b16 %v255
  %v1064 = vunpack.c.l.b16 %v256
  %v1065 = vunpack.c.h.b16 %v256
  %v1066 = vunpack.c.l.b16 %v257
  %v1067 = vunpack.c.h.b16 %v257
  %v1068 = vunpack.c.l.b16 %v258
  %v1069 = vunpack.c.h.b16 %v258
  %v1070 = vunpack.c.l.b16 %v259
  %v1071 = vunpack.c.h.b16 %v259
  %v1072 = vunpack.c.l.b16 %v260
  %v1073 = vunpack.c.l.b16 %v261
  %v1074 = vunpack.c.h.b16 %v261
  %v1075 = vunpack.c.l.b16 %v262
  %v1076 = vunpack.c.h.b16 %v262
  %v1077 = vunpack.c.l.b16 %v263
  %v1078 = vunpack.c.h.b16 %v263
  %v1079 = vunpack.c.l.b16 %v264
  %v1080 = vunpack.c.h.b16 %v264
  %v1081 = vunpack.c.l.b16 %v265
  %v1082 = vunpack.c.l.b16 %v266
  %v1083 = vunpack.c.h.b16 %v266
  %v1084 = vunpack.c.l.b16 %v267
  %v1085 = vunpack.c.h.b16 %v267
  %v1086 = vunpack.c.l.b16 %v268
  %v1087 = vunpack.c.h.b16 %v268
  %v1088 = vunpack.c.l.b16 %v269
  %v1089 = vunpack.c.h.b16 %v269
  %v1090 = vunpack.c.l.b16 %v270
  %v1091 = vunpack.c.l.b16 %v271
  %v1092 = vunpack.c.h.b16 %v271
  %v1093 = vunpack.c.l.b16 %v272
  %v1094 = vunpack.c.h.b16 %v272
  %v1095 = vunpack.c.l.b16 %v273
  %v1096 = vunpack.c.h.b16 %v273
  %v1097 = vunpack.c.l.b16 %v274
  %v1098 = vunpack.c.h.b16 %v274
  %v1099 = vunpack.c.l.b16 %v275
  %v1100 = vunpack.c.l.b16 %v276
  %v1101 = vunpack.c.h.b16 %v276
  %v1102 = vunpack.c.l.b16 %v277
  %v1103 = vunpack.c.h.b16 %v277
  %v1104 = vunpack.c.l.b16 %v278
  %v1105 = vunpack.c.h.b16 %v278
  %v1106 = vunpack.c.l.b16 %v279
  %v1107 = vunpack.c.h.b16 %v279
  %v1108 = vunpack.c.l.b16 %v280
  %v1109 = vunpack.c.l.b16 %v281
  %v1110 = vunpack.c.h.b16 %v281
  %v1111 = vunpack.c.l.b16 %v282
  %v1112 = vunpack.c.h.b16 %v282
  %v1113 = vunpack.c.l.b16 %v283
  %v1114 = vunpack.c.h.b16 %v283
  %v1115 = vunpack.c.l.b16 %v284
  %v1116 = vunpack.c.h.b16 %v284
  %v1117 = vunpack.c.l.b16 %v285
  %v1118 = vunpack.c.l.b16 %v286
  %v1119 = vunpack.c.h.b16 %v286
  %v1120 = vunpack.c.l.b16 %v287
  %v1121 = vunpack.c.h.b16 %v287
  %v1122 = vunpack.c.l.b16 %v288
  %v1123 = vunpack.c.h.b16 %v288
  %v1124 = vunpack.c.l.b16 %v289
  %v1125 = vunpack.c.h.b16 %v289
  %v1126 = vunpack.c.l.b16 %v290
  %v1127 = vunpack.c.l.b16 %v291
  %v1128 = vunpack.c.h.b16 %v291
  %v1129 = vunpack.c.l.b16 %v292
  %v1130 = vunpack.c.h.b16 %v292
  %v1131 = vunpack.c.l.b16 %v293
  %v1132 = vunpack.c.h.b16 %v293
  %v1133 = vunpack.c.l.b16 %v294
  %v1134 = vunpack.c.h.b16 %v294
  %v1135 = vunpack.c.l.b16 %v295
  %v1136 = vunpack.c.l.b16 %v296
  %v1137 = vunpack.c.h.b16 %v296
  %v1138 = vunpack.c.l.b16 %v297
  %v1139 = vunpack.c.h.b16 %v297
  %v1140 = vunpack.c.l.b16 %v298
  %v1141 = vunpack.c.h.b16 %v298
  %v1142 = vunpack.c.l.b16 %v299
  %v1143 = vunpack.c.h.b16 %v299
  %v1144 = vunpack.c.l.b16 %v300
  %v1145 = vunpack.c.l.b16 %v301
  %v1146 = vunpack.c.h.b16 %v301
  %v1147 = vunpack.c.l.b16 %v302
  %v1148 = vunpack.c.h.b16 %v302
  %v1149 = vunpack.c.l.b16 %v303
  %v1150 = vunpack.c.h.b16 %v303
  %v1151 = vunpack.c.l.b16 %v304
  %v1152 = vunpack.c.h.b16 %v304
  %v1153 = vunpack.c.l.b16 %v305
  %v1154 = vpack.c.b16 %v650, %v641
  %v1155 = vpack.c.b16 %v651, %v642
  %v1156 = vpack.c.b16 %v652, %v643
  %v1157 = vpack.c.b16 %v653, %v644
  %v1158 = vpack.c.b16 %v654, %v645
  %v1159 = vpack.c.b16 %v655, %v646
  %v1160 = vpack.c.b16 %v656, %v647
  %v1161 = vpack.c.b16 %v657, %v648
  %v1162 = vpack.c.b16 %v658, %v649
  %v1163 = vpack.c.b16 %v668, %v659
  %v1164 = vpack.c.b16 %v669, %v660
  %v1165 = vpack.c.b16 %v670, %v661
  %v1166 = vpack.c.b16 %v671, %v662
  %v1167 = vpack.c.b16 %v672, %v663
  %v1168 = vpack.c.b16 %v673, %v664
  %v1169 = vpack.c.b16 %v674, %v665
  %v1170 = vpack.c.b16 %v675, %v666
  %v1171 = vpack.c.b16 %v676, %v667
  %v1172 = vpack.c.b16 %v686, %v677
  %v1173 = vpack.c.b16 %v687, %v678
  %v1174 = vpack.c.b16 %v688, %v679
  %v1175 = vpack.c.b16 %v689, %v680
  %v1176 = vpack.c.b16 %v690, %v681
  %v1177 = vpack.c.b16 %v691, %v682
  %v1178 = vpack.c.b16 %v692, %v683
  %v1179 = vpack.c.b16 %v693, %v684
  %v1180 = vpack.c.b16 %v694, %v685
  %v1181 = vpack.c.b16 %v704, %v695
  %v1182 = vpack.c.b16 %v705, %v696
  %v1183 = vpack.c.b16 %v706, %v697
  %v1184 = vpack.c.b16 %v707, %v698
  %v1185 = vpack.c.b16 %v708, %v699
  %v1186 = vpack.c.b16 %v709, %v700
  %v1187 = vpack.c.b16 %v710, %v701
  %v1188 = vpack.c.b16 %v711, %v702
  %v1189 = vpack.c.b16 %v712, %v703
  %v1190 = vpack.c.b16 %v722, %v713
  %v1191 = vpack.c.b16 %v723, %v714
  %v1192 = vpack.c.b16 %v724, %v715
  %v1193 = vpack.c.b16 %v725, %v716
  %v1194 = vpack.c.b16 %v726, %v717
  %v1195 = vpack.c.b16 %v727, %v718
  %v1196 = vpack.c.b16 %v728, %v719
  %v1197 = vpack.c.b16 %v729, %v720
  %v1198 = vpack.c.b16 %v730, %v721
  %v1199 = vpack.c.b16 %v740, %v731
  %v1200 = vpack.c.b16 %v741, %v732
  %v1201 = vpack.c.b16 %v742, %v733
  %v1202 = vpack.c.b16 %v743, %v734
  %v1203 = vpack.c.b16 %v744, %v735
  %v1204 = vpack.c.b16 %v745, %v736
  %v1205 = vpack.c.b16 %v746, %v737
  %v1206 = vpack.c.b16 %v747, %v738
  %v1207 = vpack.c.b16 %v748, %v739
  %v1208 = vpack.c.b16 %v758, %v749
  %v1209 = vpack.c.b16 %v759, %v750
  %v1210 = vpack.c.b16 %v760, %v751
  %v1211 = vpack.c.b16 %v761, %v752
  %v1212 = vpack.c.b16 %v762, %v753
  %v1213 = vpack.c.b16 %v763, %v754
  %v1214 = vpack.c.b16 %v764, %v755
  %v1215 = vpack.c.b16 %v765, %v756
  %v1216 = vpack.c.b16 %v766, %v757
  %v1217 = vpack.c.b16 %v776, %v767
  %v1218 = vpack.c.b16 %v777, %v768
  %v1219 = vpack.c.b16 %v778, %v769
  %v1220 = vpack.c.b16 %v779, %v770
  %v1221 = vpack.c.b16 %v780, %v771
  %v1222 = vpack.c.b16 %v781, %v772
  %v1223 = vpack.c.b16 %v782, %v773
  %v1224 = vpack.c.b16 %v783, %v774
  %v1225 = vpack.c.b16 %v784, %v775
  %v1226 = vpack.c.b16 %v794, %v785
  %v1227 = vpack.c.b16 %v795, %v786
  %v1228 = vpack.c.b16 %v796, %v787
  %v1229 = vpack.c.b16 %v797, %v788
  %v1230 = vpack.c.b16 %v798, %v789
  %v1231 = vpack.c.b16 %v799, %v790
  %v1232 = vpack.c.b16 %v800, %v791
  %v1233 = vpack.c.b16 %v801, %v792
  %v1234 = vpack.c.b16 %v802, %v793
  %v1235 = vpack.c.b16 %v812, %v803
  %v1236 = vpack.c.b16 %v813, %v804
  %v1237 = vpack.c.b16 %v814, %v805
  %v1238 = vpack.c.b16 %v815, %v806
  %v1239 = vpack.c.b16 %v816, %v807
  %v1240 = vpack.c.b16 %v817, %v808
  %v1241 = vpack.c.b16 %v818, %v809
  %v1242 = vpack.c.b16 %v819, %v810
  %v1243 = vpack.c.b16 %v820, %v811
  %v1244 = vpack.c.b16 %v830, %v821
  %v1245 = vpack.c.b16 %v831, %v822
  %v1246 = vpack.c.b16 %v832, %v823
  %v1247 = vpack.c.b16 %v833, %v824
  %v1248 = vpack.c.b16 %v834, %v825
  %v1249 = vpack.c.b16 %v835, %v826
  %v1250 = vpack.c.b16 %v836, %v827
  %v1251 = vpack.c.b16 %v837, %v828
  %v1252 = vpack.c.b16 %v838, %v829
  %v1253 = vpack.c.b16 %v848, %v839
  %v1254 = vpack.c.b16 %v849, %v840
  %v1255 = vpack.c.b16 %v850, %v841
  %v1256 = vpack.c.b16 %v851, %v842
  %v1257 = vpack.c.b16 %v852, %v843
  %v1258 = vpack.c.b16 %v853, %v844
  %v1259 = vpack.c.b16 %v854, %v845
  %v1260 = vpack.c.b16 %v855, %v846
  %v1261 = vpack.c.b16 %v856, %v847
  %v1262 = vpack.c.b16 %v866, %v857
  %v1263 = vpack.c.b16 %v867, %v858
  %v1264 = vpack.c.b16 %v868, %v859
  %v1265 = vpack.c.b16 %v869, %v860
  %v1266 = vpack.c.b16 %v870, %v861
  %v1267 = vpack.c.b16 %v871, %v862
  %v1268 = vpack.c.b16 %v872, %v863
  %v1269 = vpack.c.b16 %v873, %v864
  %v1270 = vpack.c.b16 %v874, %v865
  %v1271 = vpack.c.b16 %v884, %v875
  %v1272 = vpack.c.b16 %v885, %v876
  %v1273 = vpack.c.b16 %v886, %v877
  %v1274 = vpack.c.b16 %v887, %v878
  %v1275 = vpack.c.b16 %v888, %v879
  %v1276 = vpack.c.b16 %v889, %v880
  %v1277 = vpack.c.b16 %v890, %v881
  %v1278 = vpack.c.b16 %v891, %v882
  %v1279 = vpack.c.b16 %v892, %v883
  %v1280 = vpack.c.b16 %v902, %v893
  %v1281 = vpack.c.b16 %v903, %v894
  %v1282 = vpack.c.b16 %v904, %v895
  %v1283 = vpack.c.b16 %v905, %v896
  %v1284 = vpack.c.b16 %v906, %v897
  %v1285 = vpack.c.b16 %v907, %v898
  %v1286 = vpack.c.b16 %v908, %v899
  %v1287 = vpack.c.b16 %v909, %v900
  %v1288 = vpack.c.b16 %v910, %v901
  %v1289 = vpack.c.b16 %v920, %v911
  %v1290 = vpack.c.b16 %v921, %v912
  %v1291 = vpack.c.b16 %v922, %v913
  %v1292 = vpack.c.b16 %v923, %v914
  %v1293 = vpack.c.b16 %v924, %v915
  %v1294 = vpack.c.b16 %v925, %v916
  %v1295 = vpack.c.b16 %v926, %v917
  %v1296 = vpack.c.b16 %v927, %v918
  %v1297 = vpack.c.b16 %v928, %v919
  %v1298 = vpack.c.b16 %v938, %v929
  %v1299 = vpack.c.b16 %v939, %v930
  %v1300 = vpack.c.b16 %v940, %v931
  %v1301 = vpack.c.b16 %v941, %v932
  %v1302 = vpack.c.b16 %v942, %v933
  %v1303 = vpack.c.b16 %v943, %v934
  %v1304 = vpack.c.b16 %v944, %v935
  %v1305 = vpack.c.b16 %v945, %v936
  %v1306 = vpack.c.b16 %v946, %v937
  %v1307 = vpack.c.b16 %v956, %v947
  %v1308 = vpack.c.b16 %v957, %v948
  %v1309 = vpack.c.b16 %v958, %v949
  %v1310 = vpack.c.b16 %v959, %v950
  %v1311 = vpack.c.b16 %v960, %v951
  %v1312 = vpack.c.b16 %v961, %v952
  %v1313 = vpack.c.b16 %v962, %v953
  %v1314 = vpack.c.b16 %v963, %v954
  %v1315 = vpack.c.b16 %v964, %v955
  %v1316 = vpack.c.b16 %v974, %v965
  %v1317 = vpack.c.b16 %v975, %v966
  %v1318 = vpack.c.b16 %v976, %v967
  %v1319 = vpack.c.b16 %v977, %v968
  %v1320 = vpack.c.b16 %v978, %v969
  %v1321 = vpack.c.b16 %v979, %v970
  %v1322 = vpack.c.b16 %v980, %v971
  %v1323 = vpack.c.b16 %v981, %v972
  %v1324 = vpack.c.b16 %v982, %v973
  %v1325 = vpack.c.b16 %v992, %v983
  %v1326 = vpack.c.b16 %v993, %v984
  %v1327 = vpack.c.b16 %v994, %v985
  %v1328 = vpack.c.b16 %v995, %v986
  %v1329 = vpack.c.b16 %v996, %v987
  %v1330 = vpack.c.b16 %v997, %v988
  %v1331 = vpack.c.b16 %v998, %v989
  %v1332 = vpack.c.b16 %v999, %v990
  %v1333 = vpack.c.b16 %v1000, %v991
  %v1334 = vpack.c.b16 %v1010, %v1001
  %v1335 = vpack.c.b16 %v1011, %v1002
  %v1336 = vpack.c.b16 %v1012, %v1003
  %v1337 = vpack.c.b16 %v1013, %v1004
  %v1338 = vpack.c.b16 %v1014, %v1005
  %v1339 = vpack.c.b16 %v1015, %v1006
  %v1340 = vpack.c.b16 %v1016, %v1007
  %v1341 = vpack.c.b16 %v1017, %v1008
  %v1342 = vpack.c.b16 %v1018, %v1009
  %v1343 = vpack.c.b16 %v1028, %v1019
  %v1344 = vpack.c.b16 %v1029, %v1020
  %v1345 = vpack.c.b16 %v1030, %v1021
  %v1346 = vpack.c.b16 %v1031, %v1022
  %v1347 = vpack.c.b16 %v1032, %v1023
  %v1348 = vpack.c.b16 %v1033, %v1024
  %v1349 = vpack.c.b16 %v1034, %v1025
  %v1350 = vpack.c.b16 %v1035, %v1026
  %v1351 = vpack.c.b16 %v1036, %v1027
  %v1352 = vpack.c.b16 %v1046, %v1037
  %v1353 = vpack.c.b16 %v1047, %v1038
  %v1354 = vpack.c.b16 %v1048, %v1039
  %v1355 = vpack.c.b16 %v1049, %v1040
  %v1356 = vpack.c.b16 %v1050, %v1041
  %v1357 = vpack.c.b16 %v1051, %v1042
  %v1358 = vpack.c.b16 %v1052, %v1043
  %v1359 = vpack.c.b16 %v1053, %v1044
  %v1360 = vpack.c.b16 %v1054, %v1045
  %v1361 = vpack.c.b16 %v1064, %v1055
  %v1362 = vpack.c.b16 %v1065, %v1056
  %v1363 = vpack.c.b16 %v1066, %v1057
  %v1364 = vpack.c.b16 %v1067, %v1058
  %v1365 = vpack.c.b16 %v1068, %v1059
  %v1366 = vpack.c.b16 %v1069, %v1060
  %v1367 = vpack.c.b16 %v1070, %v1061
  %v1368 = vpack.c.b16 %v1071, %v1062
  %v1369 = vpack.c.b16 %v1072, %v1063
  %v1370 = vpack.c.b16 %v1082, %v1073
  %v1371 = vpack.c.b16 %v1083, %v1074
  %v1372 = vpack.c.b16 %v1084, %v1075
  %v1373 = vpack.c.b16 %v1085, %v1076
  %v1374 = vpack.c.b16 %v1086, %v1077
  %v1375 = vpack.c.b16 %v1087, %v1078
  %v1376 = vpack.c.b16 %v1088, %v1079
  %v1377 = vpack.c.b16 %v1089, %v1080
  %v1378 = vpack.c.b16 %v1090, %v1081
  %v1379 = vpack.c.b16 %v1100, %v1091
  %v1380 = vpack.c.b16 %v1101, %v1092
  %v1381 = vpack.c.b16 %v1102, %v1093
  %v1382 = vpack.c.b16 %v1103, %v1094
  %v1383 = vpack.c.b16 %v1104, %v1095
  %v1384 = vpack.c.b16 %v1105, %v1096
  %v1385 = vpack.c.b16 %v1106, %v1097
  %v1386 = vpack.c.b16 %v1107, %v1098
  %v1387 = vpack.c.b16 %v1108, %v1099
  %v1388 = vpack.c.b16 %v1118, %v1109
  %v1389 = vpack.c.b16 %v1119, %v1110
  %v1390 = vpack.c.b16 %v1120, %v1111
  %v1391 = vpack.c.b16 %v1121, %v1112
  %v1392 = vpack.c.b16 %v1122, %v1113
  %v1393 = vpack.c.b16 %v1123, %v1114
  %v1394 = vpack.c.b16 %v1124, %v1115
  %v1395 = vpack.c.b16 %v1125, %v1116
  %v1396 = vpack.c.b16 %v1126, %v1117
  %v1397 = vpack.c.b16 %v1136, %v1127
  %v1398 = vpack.c.b16 %v1137, %v1128
  %v1399 = vpack.c.b16 %v1138, %v1129
  %v1400 = vpack.c.b16 %v1139, %v1130
  %v1401 = vpack.c.b16 %v1140, %v1131
  %v1402 = vpack.c.b16 %v1141, %v1132
  %v1403 = vpack.c.b16 %v1142, %v1133
  %v1404 = vpack.c.b16 %v1143, %v1134
  %v1405 = vpack.c.b16 %v1144, %v1135
  %v1406 = vpack.c.b16 %v1145, %v1145
  %v1407 = vpack.c.b16 %v1146, %v1146
  %v1408 = vpack.c.b16 %v1147, %v1147
  %v1409 = vpack.c.b16 %v1148, %v1148
  %v1410 = vpack.c.b16 %v1149, %v1149
  %v1411 = vpack.c.b16 %v1150, %v1150
  %v1412 = vpack.c.b16 %v1151, %v1151
  %v1413 = vpack.c.b16 %v1152, %v1152
  %v1414 = vpack.c.b16 %v1153, %v1153
  %vm1667 = vcmask 539648
  %v1669 = vsel %vm1667, %v345, 0
  %v1672 = vsel %vm1667, %v349, 0
  %vm1674 = vcmask 1040384
  %v1676 = vsel %vm1674, %v1406, 0
  %v1679 = vsel %vm1674, %v1407, 0
  %v1682 = vsel %vm1674, %v1408, 0
  %v1685 = vsel %vm1674, %v1409, 0
  %v1688 = vsel %vm1674, %v1410, 0
  %v1691 = vsel %vm1674, %v1411, 0
  %v1694 = vsel %vm1674, %v1412, 0
  %v1697 = vsel %vm1674, %v1413, 0
  %v1700 = vsel %vm1674, %v1414, 0
  %1702 = vmatpush.bf16.msra.mxu0 %v1217
  %1703 = vmatpush.bf16.msra.mxu0 %v1208
  %1704 = vmatpush.bf16.msra.mxu0 %v1199
  %1705 = vmatpush.bf16.msra.mxu0 %v1190
  %1706 = vmatpush.bf16.msra.mxu0 %v1181
  %1707 = vmatpush.bf16.msra.mxu0 %v1172
  %1708 = vmatpush.bf16.msra.mxu0 %v1163
  %1709 = vmatpush.bf16.msra.mxu0 %v1154
  %1710 = vmatmul.bf16.gmra.mxu0 %v342
  %v1711 = vpop.f32.mrf.mxu0
  %v1712 = vadd.f32 %v312, %v1711
  %v1713 = vpop.f32.mrf.mxu0
  %v1714 = vadd.f32 %v317, %v1713
  %1715 = vmatmul.bf16.gmra.mxu0 %v346
  %v1716 = vpop.f32.mrf.mxu0
  %v1717 = vadd.f32 %v322, %v1716
  %v1718 = vpop.f32.mrf.mxu0
  %1719 = vdwg.mxu0
  %1720 = vmatpush.bf16.msra.mxu0 %v1289
  %1721 = vmatpush.bf16.msra.mxu0 %v1280
  %1722 = vmatpush.bf16.msra.mxu0 %v1271
  %1723 = vmatpush.bf16.msra.mxu0 %v1262
  %1724 = vmatpush.bf16.msra.mxu0 %v1253
  %1725 = vmatpush.bf16.msra.mxu0 %v1244
  %1726 = vmatpush.bf16.msra.mxu0 %v1235
  %1727 = vmatpush.bf16.msra.mxu0 %v1226
  %1728 = vmatmul.bf16.gmra.mxu0 %v343
  %v1729 = vpop.f32.mrf.mxu0
  %v1730 = vadd.f32 %v1712, %v1729
  %v1731 = vpop.f32.mrf.mxu0
  %v1732 = vadd.f32 %v1714, %v1731
  %1733 = vmatmul.bf16.gmra.mxu0 %v347
  %v1734 = vpop.f32.mrf.mxu0
  %v1735 = vadd.f32 %v1717, %v1734
  %v1736 = vpop.f32.mrf.mxu0
  %1737 = vdwg.mxu0
  %1738 = vmatpush.bf16.msra.mxu0 %v1361
  %1739 = vmatpush.bf16.msra.mxu0 %v1352
  %1740 = vmatpush.bf16.msra.mxu0 %v1343
  %1741 = vmatpush.bf16.msra.mxu0 %v1334
  %1742 = vmatpush.bf16.msra.mxu0 %v1325
  %1743 = vmatpush.bf16.msra.mxu0 %v1316
  %1744 = vmatpush.bf16.msra.mxu0 %v1307
  %1745 = vmatpush.bf16.msra.mxu0 %v1298
  %1746 = vmatmul.bf16.gmra.mxu0 %v344
  %v1747 = vpop.f32.mrf.mxu0
  %v1748 = vadd.f32 %v1730, %v1747
  %v1749 = vpop.f32.mrf.mxu0
  %v1750 = vadd.f32 %v1732, %v1749
  %1751 = vmatmul.bf16.gmra.mxu0 %v348
  %v1752 = vpop.f32.mrf.mxu0
  %v1753 = vadd.f32 %v1735, %v1752
  %v1754 = vpop.f32.mrf.mxu0
  %1755 = vdwg.mxu0
  %1756 = vmatpush.bf16.msra.mxu0 0
  %1757 = vmatpush.bf16.msra.mxu0 0
  %1758 = vmatpush.bf16.msra.mxu0 0
  %1759 = vmatpush.bf16.msra.mxu0 %v1676
  %1760 = vmatpush.bf16.msra.mxu0 %v1397
  %1761 = vmatpush.bf16.msra.mxu0 %v1388
  %1762 = vmatpush.bf16.msra.mxu0 %v1379
  %1763 = vmatpush.bf16.msra.mxu0 %v1370
  %1764 = vmatmul.bf16.gmra.mxu0 %v1669
  %v1765 = vpop.f32.mrf.mxu0
  %v1766 = vadd.f32 %v1748, %v1765
  %v1767 = vpop.f32.mrf.mxu0
  %v1768 = vadd.f32 %v1750, %v1767
  %1769 = vmatmul.bf16.gmra.mxu0 %v1672
  %v1770 = vpop.f32.mrf.mxu0
  %v1771 = vadd.f32 %v1753, %v1770
  %v1772 = vpop.f32.mrf.mxu0
  %1773 = vdwg.mxu0
  %1774 = vmatpush.bf16.msra.mxu0 %v1218
  %1775 = vmatpush.bf16.msra.mxu0 %v1209
  %1776 = vmatpush.bf16.msra.mxu0 %v1200
  %1777 = vmatpush.bf16.msra.mxu0 %v1191
  %1778 = vmatpush.bf16.msra.mxu0 %v1182
  %1779 = vmatpush.bf16.msra.mxu0 %v1173
  %1780 = vmatpush.bf16.msra.mxu0 %v1164
  %1781 = vmatpush.bf16.msra.mxu0 %v1155
  %1782 = vmatmul.bf16.gmra.mxu0 %v342
  %v1783 = vpop.f32.mrf.mxu0
  %v1784 = vadd.f32 %v312, %v1783
  %v1785 = vpop.f32.mrf.mxu0
  %v1786 = vadd.f32 %v317, %v1785
  %1787 = vmatmul.bf16.gmra.mxu0 %v346
  %v1788 = vpop.f32.mrf.mxu0
  %v1789 = vadd.f32 %v322, %v1788
  %v1790 = vpop.f32.mrf.mxu0
  %1791 = vdwg.mxu0
  %1792 = vmatpush.bf16.msra.mxu0 %v1290
  %1793 = vmatpush.bf16.msra.mxu0 %v1281
  %1794 = vmatpush.bf16.msra.mxu0 %v1272
  %1795 = vmatpush.bf16.msra.mxu0 %v1263
  %1796 = vmatpush.bf16.msra.mxu0 %v1254
  %1797 = vmatpush.bf16.msra.mxu0 %v1245
  %1798 = vmatpush.bf16.msra.mxu0 %v1236
  %1799 = vmatpush.bf16.msra.mxu0 %v1227
  %1800 = vmatmul.bf16.gmra.mxu0 %v343
  %v1801 = vpop.f32.mrf.mxu0
  %v1802 = vadd.f32 %v1784, %v1801
  %v1803 = vpop.f32.mrf.mxu0
  %v1804 = vadd.f32 %v1786, %v1803
  %1805 = vmatmul.bf16.gmra.mxu0 %v347
  %v1806 = vpop.f32.mrf.mxu0
  %v1807 = vadd.f32 %v1789, %v1806
  %v1808 = vpop.f32.mrf.mxu0
  %1809 = vdwg.mxu0
  %1810 = vmatpush.bf16.msra.mxu0 %v1362
  %1811 = vmatpush.bf16.msra.mxu0 %v1353
  %1812 = vmatpush.bf16.msra.mxu0 %v1344
  %1813 = vmatpush.bf16.msra.mxu0 %v1335
  %1814 = vmatpush.bf16.msra.mxu0 %v1326
  %1815 = vmatpush.bf16.msra.mxu0 %v1317
  %1816 = vmatpush.bf16.msra.mxu0 %v1308
  %1817 = vmatpush.bf16.msra.mxu0 %v1299
  %1818 = vmatmul.bf16.gmra.mxu0 %v344
  %v1819 = vpop.f32.mrf.mxu0
  %v1820 = vadd.f32 %v1802, %v1819
  %v1821 = vpop.f32.mrf.mxu0
  %v1822 = vadd.f32 %v1804, %v1821
  %1823 = vmatmul.bf16.gmra.mxu0 %v348
  %v1824 = vpop.f32.mrf.mxu0
  %v1825 = vadd.f32 %v1807, %v1824
  %v1826 = vpop.f32.mrf.mxu0
  %1827 = vdwg.mxu0
  %1828 = vmatpush.bf16.msra.mxu0 0
  %1829 = vmatpush.bf16.msra.mxu0 0
  %1830 = vmatpush.bf16.msra.mxu0 0
  %1831 = vmatpush.bf16.msra.mxu0 %v1679
  %1832 = vmatpush.bf16.msra.mxu0 %v1398
  %1833 = vmatpush.bf16.msra.mxu0 %v1389
  %1834 = vmatpush.bf16.msra.mxu0 %v1380
  %1835 = vmatpush.bf16.msra.mxu0 %v1371
  %1836 = vmatmul.bf16.gmra.mxu0 %v1669
  %v1837 = vpop.f32.mrf.mxu0
  %v1838 = vadd.f32 %v1820, %v1837
  %v1839 = vpop.f32.mrf.mxu0
  %v1840 = vadd.f32 %v1822, %v1839
  %1841 = vmatmul.bf16.gmra.mxu0 %v1672
  %v1842 = vpop.f32.mrf.mxu0
  %v1843 = vadd.f32 %v1825, %v1842
  %v1844 = vpop.f32.mrf.mxu0
  %1845 = vdwg.mxu0
  %1846 = vmatpush.bf16.msra.mxu0 %v1219
  %1847 = vmatpush.bf16.msra.mxu0 %v1210
  %1848 = vmatpush.bf16.msra.mxu0 %v1201
  %1849 = vmatpush.bf16.msra.mxu0 %v1192
  %1850 = vmatpush.bf16.msra.mxu0 %v1183
  %1851 = vmatpush.bf16.msra.mxu0 %v1174
  %1852 = vmatpush.bf16.msra.mxu0 %v1165
  %1853 = vmatpush.bf16.msra.mxu0 %v1156
  %1854 = vmatmul.bf16.gmra.mxu0 %v342
  %v1855 = vpop.f32.mrf.mxu0
  %v1856 = vadd.f32 %v312, %v1855
  %v1857 = vpop.f32.mrf.mxu0
  %v1858 = vadd.f32 %v317, %v1857
  %1859 = vmatmul.bf16.gmra.mxu0 %v346
  %v1860 = vpop.f32.mrf.mxu0
  %v1861 = vadd.f32 %v322, %v1860
  %v1862 = vpop.f32.mrf.mxu0
  %1863 = vdwg.mxu0
  %1864 = vmatpush.bf16.msra.mxu0 %v1291
  %1865 = vmatpush.bf16.msra.mxu0 %v1282
  %1866 = vmatpush.bf16.msra.mxu0 %v1273
  %1867 = vmatpush.bf16.msra.mxu0 %v1264
  %1868 = vmatpush.bf16.msra.mxu0 %v1255
  %1869 = vmatpush.bf16.msra.mxu0 %v1246
  %1870 = vmatpush.bf16.msra.mxu0 %v1237
  %1871 = vmatpush.bf16.msra.mxu0 %v1228
  %1872 = vmatmul.bf16.gmra.mxu0 %v343
  %v1873 = vpop.f32.mrf.mxu0
  %v1874 = vadd.f32 %v1856, %v1873
  %v1875 = vpop.f32.mrf.mxu0
  %v1876 = vadd.f32 %v1858, %v1875
  %1877 = vmatmul.bf16.gmra.mxu0 %v347
  %v1878 = vpop.f32.mrf.mxu0
  %v1879 = vadd.f32 %v1861, %v1878
  %v1880 = vpop.f32.mrf.mxu0
  %1881 = vdwg.mxu0
  %1882 = vmatpush.bf16.msra.mxu0 %v1363
  %1883 = vmatpush.bf16.msra.mxu0 %v1354
  %1884 = vmatpush.bf16.msra.mxu0 %v1345
  %1885 = vmatpush.bf16.msra.mxu0 %v1336
  %1886 = vmatpush.bf16.msra.mxu0 %v1327
  %1887 = vmatpush.bf16.msra.mxu0 %v1318
  %1888 = vmatpush.bf16.msra.mxu0 %v1309
  %1889 = vmatpush.bf16.msra.mxu0 %v1300
  %1890 = vmatmul.bf16.gmra.mxu0 %v344
  %v1891 = vpop.f32.mrf.mxu0
  %v1892 = vadd.f32 %v1874, %v1891
  %v1893 = vpop.f32.mrf.mxu0
  %v1894 = vadd.f32 %v1876, %v1893
  %1895 = vmatmul.bf16.gmra.mxu0 %v348
  %v1896 = vpop.f32.mrf.mxu0
  %v1897 = vadd.f32 %v1879, %v1896
  %v1898 = vpop.f32.mrf.mxu0
  %1899 = vdwg.mxu0
  %1900 = vmatpush.bf16.msra.mxu0 0
  %1901 = vmatpush.bf16.msra.mxu0 0
  %1902 = vmatpush.bf16.msra.mxu0 0
  %1903 = vmatpush.bf16.msra.mxu0 %v1682
  %1904 = vmatpush.bf16.msra.mxu0 %v1399
  %1905 = vmatpush.bf16.msra.mxu0 %v1390
  %1906 = vmatpush.bf16.msra.mxu0 %v1381
  %1907 = vmatpush.bf16.msra.mxu0 %v1372
  %1908 = vmatmul.bf16.gmra.mxu0 %v1669
  %v1909 = vpop.f32.mrf.mxu0
  %v1910 = vadd.f32 %v1892, %v1909
  %v1911 = vpop.f32.mrf.mxu0
  %v1912 = vadd.f32 %v1894, %v1911
  %1913 = vmatmul.bf16.gmra.mxu0 %v1672
  %v1914 = vpop.f32.mrf.mxu0
  %v1915 = vadd.f32 %v1897, %v1914
  %v1916 = vpop.f32.mrf.mxu0
  %1917 = vdwg.mxu0
  %1918 = vmatpush.bf16.msra.mxu0 %v1220
  %1919 = vmatpush.bf16.msra.mxu0 %v1211
  %1920 = vmatpush.bf16.msra.mxu0 %v1202
  %1921 = vmatpush.bf16.msra.mxu0 %v1193
  %1922 = vmatpush.bf16.msra.mxu0 %v1184
  %1923 = vmatpush.bf16.msra.mxu0 %v1175
  %1924 = vmatpush.bf16.msra.mxu0 %v1166
  %1925 = vmatpush.bf16.msra.mxu0 %v1157
  %1926 = vmatmul.bf16.gmra.mxu0 %v342
  %v1927 = vpop.f32.mrf.mxu0
  %v1928 = vadd.f32 %v312, %v1927
  %v1929 = vpop.f32.mrf.mxu0
  %v1930 = vadd.f32 %v317, %v1929
  %1931 = vmatmul.bf16.gmra.mxu0 %v346
  %v1932 = vpop.f32.mrf.mxu0
  %v1933 = vadd.f32 %v322, %v1932
  %v1934 = vpop.f32.mrf.mxu0
  %1935 = vdwg.mxu0
  %1936 = vmatpush.bf16.msra.mxu0 %v1292
  %1937 = vmatpush.bf16.msra.mxu0 %v1283
  %1938 = vmatpush.bf16.msra.mxu0 %v1274
  %1939 = vmatpush.bf16.msra.mxu0 %v1265
  %1940 = vmatpush.bf16.msra.mxu0 %v1256
  %1941 = vmatpush.bf16.msra.mxu0 %v1247
  %1942 = vmatpush.bf16.msra.mxu0 %v1238
  %1943 = vmatpush.bf16.msra.mxu0 %v1229
  %1944 = vmatmul.bf16.gmra.mxu0 %v343
  %v1945 = vpop.f32.mrf.mxu0
  %v1946 = vadd.f32 %v1928, %v1945
  %v1947 = vpop.f32.mrf.mxu0
  %v1948 = vadd.f32 %v1930, %v1947
  %1949 = vmatmul.bf16.gmra.mxu0 %v347
  %v1950 = vpop.f32.mrf.mxu0
  %v1951 = vadd.f32 %v1933, %v1950
  %v1952 = vpop.f32.mrf.mxu0
  %1953 = vdwg.mxu0
  %1954 = vmatpush.bf16.msra.mxu0 %v1364
  %1955 = vmatpush.bf16.msra.mxu0 %v1355
  %1956 = vmatpush.bf16.msra.mxu0 %v1346
  %1957 = vmatpush.bf16.msra.mxu0 %v1337
  %1958 = vmatpush.bf16.msra.mxu0 %v1328
  %1959 = vmatpush.bf16.msra.mxu0 %v1319
  %1960 = vmatpush.bf16.msra.mxu0 %v1310
  %1961 = vmatpush.bf16.msra.mxu0 %v1301
  %1962 = vmatmul.bf16.gmra.mxu0 %v344
  %v1963 = vpop.f32.mrf.mxu0
  %v1964 = vadd.f32 %v1946, %v1963
  %v1965 = vpop.f32.mrf.mxu0
  %v1966 = vadd.f32 %v1948, %v1965
  %1967 = vmatmul.bf16.gmra.mxu0 %v348
  %v1968 = vpop.f32.mrf.mxu0
  %v1969 = vadd.f32 %v1951, %v1968
  %v1970 = vpop.f32.mrf.mxu0
  %1971 = vdwg.mxu0
  %1972 = vmatpush.bf16.msra.mxu0 0
  %1973 = vmatpush.bf16.msra.mxu0 0
  %1974 = vmatpush.bf16.msra.mxu0 0
  %1975 = vmatpush.bf16.msra.mxu0 %v1685
  %1976 = vmatpush.bf16.msra.mxu0 %v1400
  %1977 = vmatpush.bf16.msra.mxu0 %v1391
  %1978 = vmatpush.bf16.msra.mxu0 %v1382
  %1979 = vmatpush.bf16.msra.mxu0 %v1373
  %1980 = vmatmul.bf16.gmra.mxu0 %v1669
  %v1981 = vpop.f32.mrf.mxu0
  %v1982 = vadd.f32 %v1964, %v1981
  %v1983 = vpop.f32.mrf.mxu0
  %v1984 = vadd.f32 %v1966, %v1983
  %1985 = vmatmul.bf16.gmra.mxu0 %v1672
  %v1986 = vpop.f32.mrf.mxu0
  %v1987 = vadd.f32 %v1969, %v1986
  %v1988 = vpop.f32.mrf.mxu0
  %1989 = vdwg.mxu0
  %1990 = vmatpush.bf16.msra.mxu0 %v1221
  %1991 = vmatpush.bf16.msra.mxu0 %v1212
  %1992 = vmatpush.bf16.msra.mxu0 %v1203
  %1993 = vmatpush.bf16.msra.mxu0 %v1194
  %1994 = vmatpush.bf16.msra.mxu0 %v1185
  %1995 = vmatpush.bf16.msra.mxu0 %v1176
  %1996 = vmatpush.bf16.msra.mxu0 %v1167
  %1997 = vmatpush.bf16.msra.mxu0 %v1158
  %1998 = vmatmul.bf16.gmra.mxu0 %v342
  %v1999 = vpop.f32.mrf.mxu0
  %v2000 = vadd.f32 %v312, %v1999
  %v2001 = vpop.f32.mrf.mxu0
  %v2002 = vadd.f32 %v317, %v2001
  %2003 = vmatmul.bf16.gmra.mxu0 %v346
  %v2004 = vpop.f32.mrf.mxu0
  %v2005 = vadd.f32 %v322, %v2004
  %v2006 = vpop.f32.mrf.mxu0
  %2007 = vdwg.mxu0
  %2008 = vmatpush.bf16.msra.mxu0 %v1293
  %2009 = vmatpush.bf16.msra.mxu0 %v1284
  %2010 = vmatpush.bf16.msra.mxu0 %v1275
  %2011 = vmatpush.bf16.msra.mxu0 %v1266
  %2012 = vmatpush.bf16.msra.mxu0 %v1257
  %2013 = vmatpush.bf16.msra.mxu0 %v1248
  %2014 = vmatpush.bf16.msra.mxu0 %v1239
  %2015 = vmatpush.bf16.msra.mxu0 %v1230
  %2016 = vmatmul.bf16.gmra.mxu0 %v343
  %v2017 = vpop.f32.mrf.mxu0
  %v2018 = vadd.f32 %v2000, %v2017
  %v2019 = vpop.f32.mrf.mxu0
  %v2020 = vadd.f32 %v2002, %v2019
  %2021 = vmatmul.bf16.gmra.mxu0 %v347
  %v2022 = vpop.f32.mrf.mxu0
  %v2023 = vadd.f32 %v2005, %v2022
  %v2024 = vpop.f32.mrf.mxu0
  %2025 = vdwg.mxu0
  %2026 = vmatpush.bf16.msra.mxu0 %v1365
  %2027 = vmatpush.bf16.msra.mxu0 %v1356
  %2028 = vmatpush.bf16.msra.mxu0 %v1347
  %2029 = vmatpush.bf16.msra.mxu0 %v1338
  %2030 = vmatpush.bf16.msra.mxu0 %v1329
  %2031 = vmatpush.bf16.msra.mxu0 %v1320
  %2032 = vmatpush.bf16.msra.mxu0 %v1311
  %2033 = vmatpush.bf16.msra.mxu0 %v1302
  %2034 = vmatmul.bf16.gmra.mxu0 %v344
  %v2035 = vpop.f32.mrf.mxu0
  %v2036 = vadd.f32 %v2018, %v2035
  %v2037 = vpop.f32.mrf.mxu0
  %v2038 = vadd.f32 %v2020, %v2037
  %2039 = vmatmul.bf16.gmra.mxu0 %v348
  %v2040 = vpop.f32.mrf.mxu0
  %v2041 = vadd.f32 %v2023, %v2040
  %v2042 = vpop.f32.mrf.mxu0
  %2043 = vdwg.mxu0
  %2044 = vmatpush.bf16.msra.mxu0 0
  %2045 = vmatpush.bf16.msra.mxu0 0
  %2046 = vmatpush.bf16.msra.mxu0 0
  %2047 = vmatpush.bf16.msra.mxu0 %v1688
  %2048 = vmatpush.bf16.msra.mxu0 %v1401
  %2049 = vmatpush.bf16.msra.mxu0 %v1392
  %2050 = vmatpush.bf16.msra.mxu0 %v1383
  %2051 = vmatpush.bf16.msra.mxu0 %v1374
  %2052 = vmatmul.bf16.gmra.mxu0 %v1669
  %v2053 = vpop.f32.mrf.mxu0
  %v2054 = vadd.f32 %v2036, %v2053
  %v2055 = vpop.f32.mrf.mxu0
  %v2056 = vadd.f32 %v2038, %v2055
  %2057 = vmatmul.bf16.gmra.mxu0 %v1672
  %v2058 = vpop.f32.mrf.mxu0
  %v2059 = vadd.f32 %v2041, %v2058
  %v2060 = vpop.f32.mrf.mxu0
  %2061 = vdwg.mxu0
  %2062 = vmatpush.bf16.msra.mxu0 %v1222
  %2063 = vmatpush.bf16.msra.mxu0 %v1213
  %2064 = vmatpush.bf16.msra.mxu0 %v1204
  %2065 = vmatpush.bf16.msra.mxu0 %v1195
  %2066 = vmatpush.bf16.msra.mxu0 %v1186
  %2067 = vmatpush.bf16.msra.mxu0 %v1177
  %2068 = vmatpush.bf16.msra.mxu0 %v1168
  %2069 = vmatpush.bf16.msra.mxu0 %v1159
  %2070 = vmatmul.bf16.gmra.mxu0 %v342
  %v2071 = vpop.f32.mrf.mxu0
  %v2072 = vadd.f32 %v312, %v2071
  %v2073 = vpop.f32.mrf.mxu0
  %v2074 = vadd.f32 %v317, %v2073
  %2075 = vmatmul.bf16.gmra.mxu0 %v346
  %v2076 = vpop.f32.mrf.mxu0
  %v2077 = vadd.f32 %v322, %v2076
  %v2078 = vpop.f32.mrf.mxu0
  %2079 = vdwg.mxu0
  %2080 = vmatpush.bf16.msra.mxu0 %v1294
  %2081 = vmatpush.bf16.msra.mxu0 %v1285
  %2082 = vmatpush.bf16.msra.mxu0 %v1276
  %2083 = vmatpush.bf16.msra.mxu0 %v1267
  %2084 = vmatpush.bf16.msra.mxu0 %v1258
  %2085 = vmatpush.bf16.msra.mxu0 %v1249
  %2086 = vmatpush.bf16.msra.mxu0 %v1240
  %2087 = vmatpush.bf16.msra.mxu0 %v1231
  %2088 = vmatmul.bf16.gmra.mxu0 %v343
  %v2089 = vpop.f32.mrf.mxu0
  %v2090 = vadd.f32 %v2072, %v2089
  %v2091 = vpop.f32.mrf.mxu0
  %v2092 = vadd.f32 %v2074, %v2091
  %2093 = vmatmul.bf16.gmra.mxu0 %v347
  %v2094 = vpop.f32.mrf.mxu0
  %v2095 = vadd.f32 %v2077, %v2094
  %v2096 = vpop.f32.mrf.mxu0
  %2097 = vdwg.mxu0
  %2098 = vmatpush.bf16.msra.mxu0 %v1366
  %2099 = vmatpush.bf16.msra.mxu0 %v1357
  %2100 = vmatpush.bf16.msra.mxu0 %v1348
  %2101 = vmatpush.bf16.msra.mxu0 %v1339
  %2102 = vmatpush.bf16.msra.mxu0 %v1330
  %2103 = vmatpush.bf16.msra.mxu0 %v1321
  %2104 = vmatpush.bf16.msra.mxu0 %v1312
  %2105 = vmatpush.bf16.msra.mxu0 %v1303
  %2106 = vmatmul.bf16.gmra.mxu0 %v344
  %v2107 = vpop.f32.mrf.mxu0
  %v2108 = vadd.f32 %v2090, %v2107
  %v2109 = vpop.f32.mrf.mxu0
  %v2110 = vadd.f32 %v2092, %v2109
  %2111 = vmatmul.bf16.gmra.mxu0 %v348
  %v2112 = vpop.f32.mrf.mxu0
  %v2113 = vadd.f32 %v2095, %v2112
  %v2114 = vpop.f32.mrf.mxu0
  %2115 = vdwg.mxu0
  %2116 = vmatpush.bf16.msra.mxu0 0
  %2117 = vmatpush.bf16.msra.mxu0 0
  %2118 = vmatpush.bf16.msra.mxu0 0
  %2119 = vmatpush.bf16.msra.mxu0 %v1691
  %2120 = vmatpush.bf16.msra.mxu0 %v1402
  %2121 = vmatpush.bf16.msra.mxu0 %v1393
  %2122 = vmatpush.bf16.msra.mxu0 %v1384
  %2123 = vmatpush.bf16.msra.mxu0 %v1375
  %2124 = vmatmul.bf16.gmra.mxu0 %v1669
  %v2125 = vpop.f32.mrf.mxu0
  %v2126 = vadd.f32 %v2108, %v2125
  %v2127 = vpop.f32.mrf.mxu0
  %v2128 = vadd.f32 %v2110, %v2127
  %2129 = vmatmul.bf16.gmra.mxu0 %v1672
  %v2130 = vpop.f32.mrf.mxu0
  %v2131 = vadd.f32 %v2113, %v2130
  %v2132 = vpop.f32.mrf.mxu0
  %2133 = vdwg.mxu0
  %2134 = vmatpush.bf16.msra.mxu0 %v1223
  %2135 = vmatpush.bf16.msra.mxu0 %v1214
  %2136 = vmatpush.bf16.msra.mxu0 %v1205
  %2137 = vmatpush.bf16.msra.mxu0 %v1196
  %2138 = vmatpush.bf16.msra.mxu0 %v1187
  %2139 = vmatpush.bf16.msra.mxu0 %v1178
  %2140 = vmatpush.bf16.msra.mxu0 %v1169
  %2141 = vmatpush.bf16.msra.mxu0 %v1160
  %2142 = vmatmul.bf16.gmra.mxu0 %v342
  %v2143 = vpop.f32.mrf.mxu0
  %v2144 = vadd.f32 %v312, %v2143
  %v2145 = vpop.f32.mrf.mxu0
  %v2146 = vadd.f32 %v317, %v2145
  %2147 = vmatmul.bf16.gmra.mxu0 %v346
  %v2148 = vpop.f32.mrf.mxu0
  %v2149 = vadd.f32 %v322, %v2148
  %v2150 = vpop.f32.mrf.mxu0
  %2151 = vdwg.mxu0
  %2152 = vmatpush.bf16.msra.mxu0 %v1295
  %2153 = vmatpush.bf16.msra.mxu0 %v1286
  %2154 = vmatpush.bf16.msra.mxu0 %v1277
  %2155 = vmatpush.bf16.msra.mxu0 %v1268
  %2156 = vmatpush.bf16.msra.mxu0 %v1259
  %2157 = vmatpush.bf16.msra.mxu0 %v1250
  %2158 = vmatpush.bf16.msra.mxu0 %v1241
  %2159 = vmatpush.bf16.msra.mxu0 %v1232
  %2160 = vmatmul.bf16.gmra.mxu0 %v343
  %v2161 = vpop.f32.mrf.mxu0
  %v2162 = vadd.f32 %v2144, %v2161
  %v2163 = vpop.f32.mrf.mxu0
  %v2164 = vadd.f32 %v2146, %v2163
  %2165 = vmatmul.bf16.gmra.mxu0 %v347
  %v2166 = vpop.f32.mrf.mxu0
  %v2167 = vadd.f32 %v2149, %v2166
  %v2168 = vpop.f32.mrf.mxu0
  %2169 = vdwg.mxu0
  %2170 = vmatpush.bf16.msra.mxu0 %v1367
  %2171 = vmatpush.bf16.msra.mxu0 %v1358
  %2172 = vmatpush.bf16.msra.mxu0 %v1349
  %2173 = vmatpush.bf16.msra.mxu0 %v1340
  %2174 = vmatpush.bf16.msra.mxu0 %v1331
  %2175 = vmatpush.bf16.msra.mxu0 %v1322
  %2176 = vmatpush.bf16.msra.mxu0 %v1313
  %2177 = vmatpush.bf16.msra.mxu0 %v1304
  %2178 = vmatmul.bf16.gmra.mxu0 %v344
  %v2179 = vpop.f32.mrf.mxu0
  %v2180 = vadd.f32 %v2162, %v2179
  %v2181 = vpop.f32.mrf.mxu0
  %v2182 = vadd.f32 %v2164, %v2181
  %2183 = vmatmul.bf16.gmra.mxu0 %v348
  %v2184 = vpop.f32.mrf.mxu0
  %v2185 = vadd.f32 %v2167, %v2184
  %v2186 = vpop.f32.mrf.mxu0
  %2187 = vdwg.mxu0
  %2188 = vmatpush.bf16.msra.mxu0 0
  %2189 = vmatpush.bf16.msra.mxu0 0
  %2190 = vmatpush.bf16.msra.mxu0 0
  %2191 = vmatpush.bf16.msra.mxu0 %v1694
  %2192 = vmatpush.bf16.msra.mxu0 %v1403
  %2193 = vmatpush.bf16.msra.mxu0 %v1394
  %2194 = vmatpush.bf16.msra.mxu0 %v1385
  %2195 = vmatpush.bf16.msra.mxu0 %v1376
  %2196 = vmatmul.bf16.gmra.mxu0 %v1669
  %v2197 = vpop.f32.mrf.mxu0
  %v2198 = vadd.f32 %v2180, %v2197
  %v2199 = vpop.f32.mrf.mxu0
  %v2200 = vadd.f32 %v2182, %v2199
  %2201 = vmatmul.bf16.gmra.mxu0 %v1672
  %v2202 = vpop.f32.mrf.mxu0
  %v2203 = vadd.f32 %v2185, %v2202
  %v2204 = vpop.f32.mrf.mxu0
  %2205 = vdwg.mxu0
  %2206 = vmatpush.bf16.msra.mxu0 %v1224
  %2207 = vmatpush.bf16.msra.mxu0 %v1215
  %2208 = vmatpush.bf16.msra.mxu0 %v1206
  %2209 = vmatpush.bf16.msra.mxu0 %v1197
  %2210 = vmatpush.bf16.msra.mxu0 %v1188
  %2211 = vmatpush.bf16.msra.mxu0 %v1179
  %2212 = vmatpush.bf16.msra.mxu0 %v1170
  %2213 = vmatpush.bf16.msra.mxu0 %v1161
  %2214 = vmatmul.bf16.gmra.mxu0 %v342
  %v2215 = vpop.f32.mrf.mxu0
  %v2216 = vadd.f32 %v312, %v2215
  %v2217 = vpop.f32.mrf.mxu0
  %v2218 = vadd.f32 %v317, %v2217
  %2219 = vmatmul.bf16.gmra.mxu0 %v346
  %v2220 = vpop.f32.mrf.mxu0
  %v2221 = vadd.f32 %v322, %v2220
  %v2222 = vpop.f32.mrf.mxu0
  %2223 = vdwg.mxu0
  %2224 = vmatpush.bf16.msra.mxu0 %v1296
  %2225 = vmatpush.bf16.msra.mxu0 %v1287
  %2226 = vmatpush.bf16.msra.mxu0 %v1278
  %2227 = vmatpush.bf16.msra.mxu0 %v1269
  %2228 = vmatpush.bf16.msra.mxu0 %v1260
  %2229 = vmatpush.bf16.msra.mxu0 %v1251
  %2230 = vmatpush.bf16.msra.mxu0 %v1242
  %2231 = vmatpush.bf16.msra.mxu0 %v1233
  %2232 = vmatmul.bf16.gmra.mxu0 %v343
  %v2233 = vpop.f32.mrf.mxu0
  %v2234 = vadd.f32 %v2216, %v2233
  %v2235 = vpop.f32.mrf.mxu0
  %v2236 = vadd.f32 %v2218, %v2235
  %2237 = vmatmul.bf16.gmra.mxu0 %v347
  %v2238 = vpop.f32.mrf.mxu0
  %v2239 = vadd.f32 %v2221, %v2238
  %v2240 = vpop.f32.mrf.mxu0
  %2241 = vdwg.mxu0
  %2242 = vmatpush.bf16.msra.mxu0 %v1368
  %2243 = vmatpush.bf16.msra.mxu0 %v1359
  %2244 = vmatpush.bf16.msra.mxu0 %v1350
  %2245 = vmatpush.bf16.msra.mxu0 %v1341
  %2246 = vmatpush.bf16.msra.mxu0 %v1332
  %2247 = vmatpush.bf16.msra.mxu0 %v1323
  %2248 = vmatpush.bf16.msra.mxu0 %v1314
  %2249 = vmatpush.bf16.msra.mxu0 %v1305
  %2250 = vmatmul.bf16.gmra.mxu0 %v344
  %v2251 = vpop.f32.mrf.mxu0
  %v2252 = vadd.f32 %v2234, %v2251
  %v2253 = vpop.f32.mrf.mxu0
  %v2254 = vadd.f32 %v2236, %v2253
  %2255 = vmatmul.bf16.gmra.mxu0 %v348
  %v2256 = vpop.f32.mrf.mxu0
  %v2257 = vadd.f32 %v2239, %v2256
  %v2258 = vpop.f32.mrf.mxu0
  %2259 = vdwg.mxu0
  %2260 = vmatpush.bf16.msra.mxu0 0
  %2261 = vmatpush.bf16.msra.mxu0 0
  %2262 = vmatpush.bf16.msra.mxu0 0
  %2263 = vmatpush.bf16.msra.mxu0 %v1697
  %2264 = vmatpush.bf16.msra.mxu0 %v1404
  %2265 = vmatpush.bf16.msra.mxu0 %v1395
  %2266 = vmatpush.bf16.msra.mxu0 %v1386
  %2267 = vmatpush.bf16.msra.mxu0 %v1377
  %2268 = vmatmul.bf16.gmra.mxu0 %v1669
  %v2269 = vpop.f32.mrf.mxu0
  %v2270 = vadd.f32 %v2252, %v2269
  %v2271 = vpop.f32.mrf.mxu0
  %v2272 = vadd.f32 %v2254, %v2271
  %2273 = vmatmul.bf16.gmra.mxu0 %v1672
  %v2274 = vpop.f32.mrf.mxu0
  %v2275 = vadd.f32 %v2257, %v2274
  %v2276 = vpop.f32.mrf.mxu0
  %2277 = vdwg.mxu0
  %2278 = vmatpush.bf16.msra.mxu0 %v1225
  %2279 = vmatpush.bf16.msra.mxu0 %v1216
  %2280 = vmatpush.bf16.msra.mxu0 %v1207
  %2281 = vmatpush.bf16.msra.mxu0 %v1198
  %2282 = vmatpush.bf16.msra.mxu0 %v1189
  %2283 = vmatpush.bf16.msra.mxu0 %v1180
  %2284 = vmatpush.bf16.msra.mxu0 %v1171
  %2285 = vmatpush.bf16.msra.mxu0 %v1162
  %2286 = vmatmul.bf16.gmra.mxu0 %v342
  %v2287 = vpop.f32.mrf.mxu0
  %v2288 = vadd.f32 %v312, %v2287
  %v2289 = vpop.f32.mrf.mxu0
  %v2290 = vadd.f32 %v317, %v2289
  %2291 = vmatmul.bf16.gmra.mxu0 %v346
  %v2292 = vpop.f32.mrf.mxu0
  %v2293 = vadd.f32 %v322, %v2292
  %v2294 = vpop.f32.mrf.mxu0
  %2295 = vdwg.mxu0
  %2296 = vmatpush.bf16.msra.mxu0 %v1297
  %2297 = vmatpush.bf16.msra.mxu0 %v1288
  %2298 = vmatpush.bf16.msra.mxu0 %v1279
  %2299 = vmatpush.bf16.msra.mxu0 %v1270
  %2300 = vmatpush.bf16.msra.mxu0 %v1261
  %2301 = vmatpush.bf16.msra.mxu0 %v1252
  %2302 = vmatpush.bf16.msra.mxu0 %v1243
  %2303 = vmatpush.bf16.msra.mxu0 %v1234
  %2304 = vmatmul.bf16.gmra.mxu0 %v343
  %v2305 = vpop.f32.mrf.mxu0
  %v2306 = vadd.f32 %v2288, %v2305
  %v2307 = vpop.f32.mrf.mxu0
  %v2308 = vadd.f32 %v2290, %v2307
  %2309 = vmatmul.bf16.gmra.mxu0 %v347
  %v2310 = vpop.f32.mrf.mxu0
  %v2311 = vadd.f32 %v2293, %v2310
  %v2312 = vpop.f32.mrf.mxu0
  %2313 = vdwg.mxu0
  %2314 = vmatpush.bf16.msra.mxu0 %v1369
  %2315 = vmatpush.bf16.msra.mxu0 %v1360
  %2316 = vmatpush.bf16.msra.mxu0 %v1351
  %2317 = vmatpush.bf16.msra.mxu0 %v1342
  %2318 = vmatpush.bf16.msra.mxu0 %v1333
  %2319 = vmatpush.bf16.msra.mxu0 %v1324
  %2320 = vmatpush.bf16.msra.mxu0 %v1315
  %2321 = vmatpush.bf16.msra.mxu0 %v1306
  %2322 = vmatmul.bf16.gmra.mxu0 %v344
  %v2323 = vpop.f32.mrf.mxu0
  %v2324 = vadd.f32 %v2306, %v2323
  %v2325 = vpop.f32.mrf.mxu0
  %v2326 = vadd.f32 %v2308, %v2325
  %2327 = vmatmul.bf16.gmra.mxu0 %v348
  %v2328 = vpop.f32.mrf.mxu0
  %v2329 = vadd.f32 %v2311, %v2328
  %v2330 = vpop.f32.mrf.mxu0
  %2331 = vdwg.mxu0
  %2332 = vmatpush.bf16.msra.mxu0 0
  %2333 = vmatpush.bf16.msra.mxu0 0
  %2334 = vmatpush.bf16.msra.mxu0 0
  %2335 = vmatpush.bf16.msra.mxu0 %v1700
  %2336 = vmatpush.bf16.msra.mxu0 %v1405
  %2337 = vmatpush.bf16.msra.mxu0 %v1396
  %2338 = vmatpush.bf16.msra.mxu0 %v1387
  %2339 = vmatpush.bf16.msra.mxu0 %v1378
  %2340 = vmatmul.bf16.gmra.mxu0 %v1669
  %v2341 = vpop.f32.mrf.mxu0
  %v2342 = vadd.f32 %v2324, %v2341
  %v2343 = vpop.f32.mrf.mxu0
  %v2344 = vadd.f32 %v2326, %v2343
  %2345 = vmatmul.bf16.gmra.mxu0 %v1672
  %v2346 = vpop.f32.mrf.mxu0
  %v2347 = vadd.f32 %v2329, %v2346
  %v2348 = vpop.f32.mrf.mxu0
  %2349 = vdwg.mxu0
  %v2350 = vmax.f32 %v1766, 0.0
  %v2351 = vmax.f32 %v1838, 0.0
  %v2352 = vmax.f32 %v1910, 0.0
  %v2353 = vmax.f32 %v1982, 0.0
  %v2354 = vmax.f32 %v2054, 0.0
  %v2355 = vmax.f32 %v2126, 0.0
  %v2356 = vmax.f32 %v2198, 0.0
  %v2357 = vmax.f32 %v2270, 0.0
  %v2358 = vmax.f32 %v2342, 0.0
  %v2359 = vmax.f32 %v1768, 0.0
  %v2360 = vmax.f32 %v1840, 0.0
  %v2361 = vmax.f32 %v1912, 0.0
  %v2362 = vmax.f32 %v1984, 0.0
  %v2363 = vmax.f32 %v2056, 0.0
  %v2364 = vmax.f32 %v2128, 0.0
  %v2365 = vmax.f32 %v2200, 0.0
  %v2366 = vmax.f32 %v2272, 0.0
  %v2367 = vmax.f32 %v2344, 0.0
  %v2368 = vmax.f32 %v1771, 0.0
  %v2369 = vmax.f32 %v1843, 0.0
  %v2370 = vmax.f32 %v1915, 0.0
  %v2371 = vmax.f32 %v1987, 0.0
  %v2372 = vmax.f32 %v2059, 0.0
  %v2373 = vmax.f32 %v2131, 0.0
  %v2374 = vmax.f32 %v2203, 0.0
  %v2375 = vmax.f32 %v2275, 0.0
  %v2376 = vmax.f32 %v2347, 0.0
  %2386 = vrot.lane.b32.xlu0 %v2352, 96
  %v2387 = vpop.permute.xlu0 %2386
  %2388 = vrot.lane.b32.xlu0 %v2353, 96
  %v2389 = vpop.permute.xlu0 %2388
  %2390 = vrot.lane.b32.xlu0 %v2354, 96
  %v2391 = vpop.permute.xlu0 %2390
  %2392 = vrot.lane.b32.xlu0 %v2361, 96
  %v2393 = vpop.permute.xlu0 %2392
  %2394 = vrot.lane.b32.xlu0 %v2362, 96
  %v2395 = vpop.permute.xlu0 %2394
  %2396 = vrot.lane.b32.xlu0 %v2363, 96
  %v2397 = vpop.permute.xlu0 %2396
  %2398 = vrot.lane.b32.xlu0 %v2370, 96
  %v2399 = vpop.permute.xlu0 %2398
  %2400 = vrot.lane.b32.xlu0 %v2371, 96
  %v2401 = vpop.permute.xlu0 %2400
  %2402 = vrot.lane.b32.xlu0 %v2372, 96
  %v2403 = vpop.permute.xlu0 %2402
  %vm2404 = vcmask 785408
  %v2405 = vsel %vm2404, %v2387, %v2389
  %v2406 = vsel %vm2404, %v2389, %v2391
  %v2407 = vsel %vm2404, %v2393, %v2395
  %v2408 = vsel %vm2404, %v2395, %v2397
  %v2409 = vsel %vm2404, %v2399, %v2401
  %v2410 = vsel %vm2404, %v2401, %v2403
  %v2420 = vmax.f32 %v2350, %v2405
  %v2421 = vmax.f32 %v2351, %v2406
  %v2422 = vmax.f32 %v2352, %v2391
  %v2423 = vmax.f32 %v2359, %v2407
  %v2424 = vmax.f32 %v2360, %v2408
  %v2425 = vmax.f32 %v2361, %v2397
  %v2426 = vmax.f32 %v2368, %v2409
  %v2427 = vmax.f32 %v2369, %v2410
  %v2428 = vmax.f32 %v2370, %v2403
  %2438 = vrot.lane.b32.xlu0 %v2356, 96
  %v2439 = vpop.permute.xlu0 %2438
  %2440 = vrot.lane.b32.xlu0 %v2357, 96
  %v2441 = vpop.permute.xlu0 %2440
  %2442 = vrot.lane.b32.xlu0 %v2358, 96
  %v2443 = vpop.permute.xlu0 %2442
  %2444 = vrot.lane.b32.xlu0 %v2365, 96
  %v2445 = vpop.permute.xlu0 %2444
  %2446 = vrot.lane.b32.xlu0 %v2366, 96
  %v2447 = vpop.permute.xlu0 %2446
  %2448 = vrot.lane.b32.xlu0 %v2367, 96
  %v2449 = vpop.permute.xlu0 %2448
  %2450 = vrot.lane.b32.xlu0 %v2374, 96
  %v2451 = vpop.permute.xlu0 %2450
  %2452 = vrot.lane.b32.xlu0 %v2375, 96
  %v2453 = vpop.permute.xlu0 %2452
  %2454 = vrot.lane.b32.xlu0 %v2376, 96
  %v2455 = vpop.permute.xlu0 %2454
  %v2456 = vsel %vm2404, %v2439, %v2441
  %v2457 = vsel %vm2404, %v2441, %v2443
  %v2458 = vsel %vm2404, %v2445, %v2447
  %v2459 = vsel %vm2404, %v2447, %v2449
  %v2460 = vsel %vm2404, %v2451, %v2453
  %v2461 = vsel %vm2404, %v2453, %v2455
  %v2471 = vmax.f32 %v2354, %v2456
  %v2472 = vmax.f32 %v2355, %v2457
  %v2473 = vmax.f32 %v2356, %v2443
  %v2474 = vmax.f32 %v2363, %v2458
  %v2475 = vmax.f32 %v2364, %v2459
  %v2476 = vmax.f32 %v2365, %v2449
  %v2477 = vmax.f32 %v2372, %v2460
  %v2478 = vmax.f32 %v2373, %v2461
  %v2479 = vmax.f32 %v2374, %v2455
  %2489 = vrot.lane.b32.xlu0 %v2471, 64
  %v2490 = vpop.permute.xlu0 %2489
  %2491 = vrot.lane.b32.xlu0 %v2472, 64
  %v2492 = vpop.permute.xlu0 %2491
  %2493 = vrot.lane.b32.xlu0 %v2473, 64
  %v2494 = vpop.permute.xlu0 %2493
  %2495 = vrot.lane.b32.xlu0 %v2474, 64
  %v2496 = vpop.permute.xlu0 %2495
  %2497 = vrot.lane.b32.xlu0 %v2475, 64
  %v2498 = vpop.permute.xlu0 %2497
  %2499 = vrot.lane.b32.xlu0 %v2476, 64
  %v2500 = vpop.permute.xlu0 %2499
  %2501 = vrot.lane.b32.xlu0 %v2477, 64
  %v2502 = vpop.permute.xlu0 %2501
  %2503 = vrot.lane.b32.xlu0 %v2478, 64
  %v2504 = vpop.permute.xlu0 %2503
  %2505 = vrot.lane.b32.xlu0 %v2479, 64
  %v2506 = vpop.permute.xlu0 %2505
  %vm2507 = vcmask 523264
  %v2508 = vsel %vm2507, %v2490, %v2492
  %v2509 = vsel %vm2507, %v2492, %v2494
  %v2510 = vsel %vm2507, %v2496, %v2498
  %v2511 = vsel %vm2507, %v2498, %v2500
  %v2512 = vsel %vm2507, %v2502, %v2504
  %v2513 = vsel %vm2507, %v2504, %v2506
  %v2523 = vmax.f32 %v2420, %v2508
  %v2524 = vmax.f32 %v2421, %v2509
  %v2525 = vmax.f32 %v2422, %v2494
  %v2526 = vmax.f32 %v2423, %v2510
  %v2527 = vmax.f32 %v2424, %v2511
  %v2528 = vmax.f32 %v2425, %v2500
  %v2529 = vmax.f32 %v2426, %v2512
  %v2530 = vmax.f32 %v2427, %v2513
  %v2531 = vmax.f32 %v2428, %v2506
  %2532 = vst [vmem:[%s3] sm:$0xff] %v2523
  %2533 = vst [vmem:[%s3 + $0x8] sm:$0xff] %v2524
  %vm2534 = vcmask 261120
  %2535 = vst.msk [vmem:[%s3 + $0x10] sm:$0xff] %vm2534, %v2525
  %2536 = vst [vmem:[%s3 + $0x18] sm:$0xff] %v2526
  %2537 = vst [vmem:[%s3 + $0x20] sm:$0xff] %v2527
  %2538 = vst.msk [vmem:[%s3 + $0x28] sm:$0xff] %vm2534, %v2528
  %2539 = vst [vmem:[%s3 + $0x30] sm:$0xf] %v2529
  %2540 = vst [vmem:[%s3 + $0x38] sm:$0xf] %v2530
  %vm2541 = vcmask 257024
  %2542 = vst.msk [vmem:[%s3 + $0x40] sm:$0xf] %vm2541, %v2531
  // Predicated region
  $region14: #{lenet_forward.3} parent=0 // pred_check
    _
  $region15: #{lenet_forward.3} parent=0 // pred_check_branch
    %2544 = sbr.rel (0) target = $region17
  $region16: #{lenet_forward.3} parent=0 // pred_region
    _
  $region17: #{lenet_forward.3} parent=0 // pred_fallthru
    _
  // Predicated region
  $region18: #{lenet_forward.3} parent=0 // pred_check
    _
  $region19: #{lenet_forward.3} parent=0 // pred_check_branch
    %2546 = sbr.rel (0) target = $region21
  $region20: #{lenet_forward.3} parent=0 // pred_region
    _
  $region21: #{lenet_forward.3} parent=0 // pred_fallthru
    _

// kernel: lenet_forward.4
$region0: #{lenet_forward.4}
  #allocation0 [shape = 'u32[]', space=smem, size = 0x4, offset = 0x4, fixed_abs, tag = 'smem constant byte address 0x4 - core index']
  #allocation1 [shape = 'u32[72,128]{1,0:T(1,128)}', space=vmem, size = 0x9000, scoped, tag = 'internal scratch']
  %s0 = inlined_call_operand.vmem [shape: bf16[50,500], index: 0, kind: input, shape index: {}]
  %s1 = inlined_call_operand.vmem [shape: bf16[500,128], index: 1, kind: input, shape index: {}]
  %s2 = inlined_call_operand.vmem [shape: f32[50,1], index: 2, kind: input, shape index: {}]
  %s3 = inlined_call_operand.vmem [shape: f32[50,32], index: 3, kind: output, shape index: {}]
  %s4 = sld [smem:[#allocation0]]
  $region22: #{lenet_forward.4} parent=0
    _
  %s6 = ssub.s32 1, %s4
  %s7 = scalar_select 0, %s6, %s4
  // Predicated region
  $region2: #{lenet_forward.4} parent=0 // pred_check
    _
  $region3: #{lenet_forward.4} parent=0 // pred_check_branch
    %9 = sbr.rel (0) target = $region5
  $region4: #{lenet_forward.4} parent=0 // pred_region
    _
  $region5: #{lenet_forward.4} parent=0 // pred_fallthru
    _
  // Predicated region
  $region6: #{lenet_forward.4} parent=0 // pred_check
    _
  $region7: #{lenet_forward.4} parent=0 // pred_check_branch
    %11 = sbr.rel (0) target = $region9
  $region8: #{lenet_forward.4} parent=0 // pred_region
    _
  $region9: #{lenet_forward.4} parent=0 // pred_fallthru
    _
  // Predicated region
  $region10: #{lenet_forward.4} parent=0 // pred_check
    _
  $region11: #{lenet_forward.4} parent=0 // pred_check_branch
    %13 = sbr.rel (0) target = $region13
  $region12: #{lenet_forward.4} parent=0 // pred_region
    _
  $region13: #{lenet_forward.4} parent=0 // pred_fallthru
    _
  %v14 = vld [vmem:[%s0] sm:$0xff]
  %v15 = vld [vmem:[%s0 + $0x8] sm:$0xff]
  %v16 = vld [vmem:[%s0 + $0x10] sm:$0xff]
  %v17 = vld [vmem:[%s0 + $0x18] sm:$0xff]
  %v18 = vld [vmem:[%s0 + $0x20] sm:$0xff]
  %v19 = vld [vmem:[%s0 + $0x28] sm:$0xff]
  %v20 = vld [vmem:[%s0 + $0x30] sm:$0xff]
  %v21 = vld [vmem:[%s0 + $0x38] sm:$0xff]
  %v22 = vld [vmem:[%s0 + $0x40] sm:$0xff]
  %v23 = vld [vmem:[%s0 + $0x48] sm:$0xff]
  %v24 = vld [vmem:[%s0 + $0x50] sm:$0xff]
  %v25 = vld [vmem:[%s0 + $0x58] sm:$0xff]
  %v26 = vld [vmem:[%s0 + $0x60] sm:$0x11]
  %v27 = vld [vmem:[%s0 + $0x68] sm:$0x11]
  %v28 = vld [vmem:[%s1] sm:$0xf]
  %v29 = vld [vmem:[%s1 + $0x4] sm:$0xf]
  %v30 = vld [vmem:[%s1 + $0x8] sm:$0xf]
  %v31 = vld [vmem:[%s1 + $0xc] sm:$0xf]
  %v32 = vld [vmem:[%s1 + $0x10] sm:$0xf]
  %v33 = vld [vmem:[%s1 + $0x14] sm:$0xf]
  %v34 = vld [vmem:[%s1 + $0x18] sm:$0xf]
  %v35 = vld [vmem:[%s1 + $0x1c] sm:$0xf]
  %v36 = vld [vmem:[%s1 + $0x20] sm:$0xf]
  %v37 = vld [vmem:[%s1 + $0x24] sm:$0xf]
  %v38 = vld [vmem:[%s1 + $0x28] sm:$0xf]
  %v39 = vld [vmem:[%s1 + $0x2c] sm:$0xf]
  %v40 = vld [vmem:[%s1 + $0x30] sm:$0xf]
  %v41 = vld [vmem:[%s1 + $0x34] sm:$0xf]
  %v42 = vld [vmem:[%s1 + $0x38] sm:$0xf]
  %v43 = vld [vmem:[%s1 + $0x3c] sm:$0xf]
  %v44 = vld [vmem:[%s1 + $0x40] sm:$0xf]
  %v45 = vld [vmem:[%s1 + $0x44] sm:$0xf]
  %v46 = vld [vmem:[%s1 + $0x48] sm:$0xf]
  %v47 = vld [vmem:[%s1 + $0x4c] sm:$0xf]
  %v48 = vld [vmem:[%s1 + $0x50] sm:$0xf]
  %v49 = vld [vmem:[%s1 + $0x54] sm:$0xf]
  %v50 = vld [vmem:[%s1 + $0x58] sm:$0xf]
  %v51 = vld [vmem:[%s1 + $0x5c] sm:$0xf]
  %v52 = vld [vmem:[%s1 + $0x60] sm:$0xf]
  %v53 = vld [vmem:[%s1 + $0x64] sm:$0xf]
  %v54 = vld [vmem:[%s1 + $0x68] sm:$0xf]
  %v55 = vld [vmem:[%s1 + $0x6c] sm:$0xf]
  %v56 = vld [vmem:[%s1 + $0x70] sm:$0xf]
  %v57 = vld [vmem:[%s1 + $0x74] sm:$0xf]
  %v58 = vld [vmem:[%s1 + $0x78] sm:$0xf]
  %v59 = vld [vmem:[%s1 + $0x7c] sm:$0xf]
  %v60 = vld [vmem:[%s1 + $0x80] sm:$0xf]
  %v61 = vld [vmem:[%s1 + $0x84] sm:$0xf]
  %v62 = vld [vmem:[%s1 + $0x88] sm:$0xf]
  %v63 = vld [vmem:[%s1 + $0x8c] sm:$0xf]
  %v64 = vld [vmem:[%s1 + $0x90] sm:$0xf]
  %v65 = vld [vmem:[%s1 + $0x94] sm:$0xf]
  %v66 = vld [vmem:[%s1 + $0x98] sm:$0xf]
  %v67 = vld [vmem:[%s1 + $0x9c] sm:$0xf]
  %v68 = vld [vmem:[%s1 + $0xa0] sm:$0xf]
  %v69 = vld [vmem:[%s1 + $0xa4] sm:$0xf]
  %v70 = vld [vmem:[%s1 + $0xa8] sm:$0xf]
  %v71 = vld [vmem:[%s1 + $0xac] sm:$0xf]
  %v72 = vld [vmem:[%s1 + $0xb0] sm:$0xf]
  %v73 = vld [vmem:[%s1 + $0xb4] sm:$0xf]
  %v74 = vld [vmem:[%s1 + $0xb8] sm:$0xf]
  %v75 = vld [vmem:[%s1 + $0xbc] sm:$0xf]
  %v76 = vld [vmem:[%s1 + $0xc0] sm:$0xf]
  %v77 = vld [vmem:[%s1 + $0xc4] sm:$0xf]
  %v78 = vld [vmem:[%s1 + $0xc8] sm:$0xf]
  %v79 = vld [vmem:[%s1 + $0xcc] sm:$0xf]
  %v80 = vld [vmem:[%s1 + $0xd0] sm:$0xf]
  %v81 = vld [vmem:[%s1 + $0xd4] sm:$0xf]
  %v82 = vld [vmem:[%s1 + $0xd8] sm:$0xf]
  %v83 = vld [vmem:[%s1 + $0xdc] sm:$0xf]
  %v84 = vld [vmem:[%s1 + $0xe0] sm:$0xf]
  %v85 = vld [vmem:[%s1 + $0xe4] sm:$0xf]
  %v86 = vld [vmem:[%s1 + $0xe8] sm:$0xf]
  %v87 = vld [vmem:[%s1 + $0xec] sm:$0xf]
  %v88 = vld [vmem:[%s1 + $0xf0] sm:$0xf]
  %v89 = vld [vmem:[%s1 + $0xf4] sm:$0xf]
  %v90 = vld [vmem:[%s1 + $0xf8] sm:$0x3]
  %v91 = vld [vmem:[%s2] sm:$0xff]
  %v92 = vld [vmem:[%s2 + $0x8] sm:$0xff]
  %v93 = vld [vmem:[%s2 + $0x10] sm:$0xff]
  %v94 = vld [vmem:[%s2 + $0x18] sm:$0xff]
  %v95 = vld [vmem:[%s2 + $0x20] sm:$0xff]
  %v96 = vld [vmem:[%s2 + $0x28] sm:$0xff]
  %v97 = vld [vmem:[%s2 + $0x30] sm:$0x3]
  %99 = vset.pattern.permute.xlu0 0
  %100 = vperm.xlu0 %99, %v91
  %v101 = vpop.permute.xlu0 %100
  %104 = vset.pattern.permute.xlu0 0
  %105 = vperm.xlu0 %104, %v92
  %v106 = vpop.permute.xlu0 %105
  %109 = vset.pattern.permute.xlu0 0
  %110 = vperm.xlu0 %109, %v93
  %v111 = vpop.permute.xlu0 %110
  %114 = vset.pattern.permute.xlu0 0
  %115 = vperm.xlu0 %114, %v94
  %v116 = vpop.permute.xlu0 %115
  %119 = vset.pattern.permute.xlu0 0
  %120 = vperm.xlu0 %119, %v95
  %v121 = vpop.permute.xlu0 %120
  %124 = vset.pattern.permute.xlu0 0
  %125 = vperm.xlu0 %124, %v96
  %v126 = vpop.permute.xlu0 %125
  %129 = vset.pattern.permute.xlu0 0
  %130 = vperm.xlu0 %129, %v97
  %v131 = vpop.permute.xlu0 %130
  %v147 = vunpack.c.l.b16 %v14
  %v148 = vunpack.c.h.b16 %v14
  %v149 = vunpack.c.l.b16 %v15
  %v150 = vunpack.c.h.b16 %v15
  %v151 = vunpack.c.l.b16 %v16
  %v152 = vunpack.c.h.b16 %v16
  %v153 = vunpack.c.l.b16 %v17
  %v154 = vunpack.c.h.b16 %v17
  %v155 = vunpack.c.l.b16 %v18
  %v156 = vunpack.c.h.b16 %v18
  %v157 = vunpack.c.l.b16 %v19
  %v158 = vunpack.c.h.b16 %v19
  %v159 = vunpack.c.l.b16 %v20
  %v160 = vunpack.c.h.b16 %v20
  %v161 = vunpack.c.l.b16 %v21
  %v162 = vunpack.c.h.b16 %v21
  %v163 = vunpack.c.l.b16 %v22
  %v164 = vunpack.c.h.b16 %v22
  %v165 = vunpack.c.l.b16 %v23
  %v166 = vunpack.c.h.b16 %v23
  %v167 = vunpack.c.l.b16 %v24
  %v168 = vunpack.c.h.b16 %v24
  %v169 = vunpack.c.l.b16 %v25
  %v170 = vunpack.c.h.b16 %v25
  %v171 = vunpack.c.l.b16 %v26
  %v172 = vunpack.c.h.b16 %v26
  %v173 = vunpack.c.l.b16 %v27
  %v174 = vunpack.c.h.b16 %v27
  %v175 = vpack.c.b16 %v151, %v147
  %v176 = vpack.c.b16 %v152, %v148
  %v177 = vpack.c.b16 %v153, %v149
  %v178 = vpack.c.b16 %v154, %v150
  %v179 = vpack.c.b16 %v159, %v155
  %v180 = vpack.c.b16 %v160, %v156
  %v181 = vpack.c.b16 %v161, %v157
  %v182 = vpack.c.b16 %v162, %v158
  %v183 = vpack.c.b16 %v167, %v163
  %v184 = vpack.c.b16 %v168, %v164
  %v185 = vpack.c.b16 %v169, %v165
  %v186 = vpack.c.b16 %v170, %v166
  %v187 = vpack.c.b16 %v171, %v171
  %v188 = vpack.c.b16 %v172, %v172
  %v189 = vpack.c.b16 %v173, %v173
  %v190 = vpack.c.b16 %v174, %v174
  %v266 = vunpack.c.l.b16 %v28
  %v267 = vunpack.c.l.b16 %v29
  %v268 = vunpack.c.l.b16 %v30
  %v269 = vunpack.c.l.b16 %v31
  %v270 = vunpack.c.l.b16 %v32
  %v271 = vunpack.c.l.b16 %v33
  %v272 = vunpack.c.l.b16 %v34
  %v273 = vunpack.c.l.b16 %v35
  %v274 = vunpack.c.l.b16 %v36
  %v275 = vunpack.c.l.b16 %v37
  %v276 = vunpack.c.l.b16 %v38
  %v277 = vunpack.c.l.b16 %v39
  %v278 = vunpack.c.l.b16 %v40
  %v279 = vunpack.c.l.b16 %v41
  %v280 = vunpack.c.l.b16 %v42
  %v281 = vunpack.c.l.b16 %v43
  %v282 = vunpack.c.l.b16 %v44
  %v283 = vunpack.c.l.b16 %v45
  %v284 = vunpack.c.l.b16 %v46
  %v285 = vunpack.c.l.b16 %v47
  %v286 = vunpack.c.l.b16 %v48
  %v287 = vunpack.c.l.b16 %v49
  %v288 = vunpack.c.l.b16 %v50
  %v289 = vunpack.c.l.b16 %v51
  %v290 = vunpack.c.l.b16 %v52
  %v291 = vunpack.c.l.b16 %v53
  %v292 = vunpack.c.l.b16 %v54
  %v293 = vunpack.c.l.b16 %v55
  %v294 = vunpack.c.l.b16 %v56
  %v295 = vunpack.c.l.b16 %v57
  %v296 = vunpack.c.l.b16 %v58
  %v297 = vunpack.c.l.b16 %v59
  %v298 = vunpack.c.l.b16 %v60
  %v299 = vunpack.c.l.b16 %v61
  %v300 = vunpack.c.l.b16 %v62
  %v301 = vunpack.c.l.b16 %v63
  %v302 = vunpack.c.l.b16 %v64
  %v303 = vunpack.c.l.b16 %v65
  %v304 = vunpack.c.l.b16 %v66
  %v305 = vunpack.c.l.b16 %v67
  %v306 = vunpack.c.l.b16 %v68
  %v307 = vunpack.c.l.b16 %v69
  %v308 = vunpack.c.l.b16 %v70
  %v309 = vunpack.c.l.b16 %v71
  %v310 = vunpack.c.l.b16 %v72
  %v311 = vunpack.c.l.b16 %v73
  %v312 = vunpack.c.l.b16 %v74
  %v313 = vunpack.c.l.b16 %v75
  %v314 = vunpack.c.l.b16 %v76
  %v315 = vunpack.c.l.b16 %v77
  %v316 = vunpack.c.l.b16 %v78
  %v317 = vunpack.c.l.b16 %v79
  %v318 = vunpack.c.l.b16 %v80
  %v319 = vunpack.c.l.b16 %v81
  %v320 = vunpack.c.l.b16 %v82
  %v321 = vunpack.c.l.b16 %v83
  %v322 = vunpack.c.l.b16 %v84
  %v323 = vunpack.c.l.b16 %v85
  %v324 = vunpack.c.l.b16 %v86
  %v325 = vunpack.c.l.b16 %v87
  %v326 = vunpack.c.l.b16 %v88
  %v327 = vunpack.c.l.b16 %v89
  %v328 = vunpack.c.l.b16 %v90
  %v329 = vpack.c.b16 %v267, %v266
  %v330 = vpack.c.b16 %v269, %v268
  %v331 = vpack.c.b16 %v271, %v270
  %v332 = vpack.c.b16 %v273, %v272
  %v333 = vpack.c.b16 %v275, %v274
  %v334 = vpack.c.b16 %v277, %v276
  %v335 = vpack.c.b16 %v279, %v278
  %v336 = vpack.c.b16 %v281, %v280
  %v337 = vpack.c.b16 %v283, %v282
  %v338 = vpack.c.b16 %v285, %v284
  %v339 = vpack.c.b16 %v287, %v286
  %v340 = vpack.c.b16 %v289, %v288
  %v341 = vpack.c.b16 %v291, %v290
  %v342 = vpack.c.b16 %v293, %v292
  %v343 = vpack.c.b16 %v295, %v294
  %v344 = vpack.c.b16 %v297, %v296
  %v345 = vpack.c.b16 %v299, %v298
  %v346 = vpack.c.b16 %v301, %v300
  %v347 = vpack.c.b16 %v303, %v302
  %v348 = vpack.c.b16 %v305, %v304
  %v349 = vpack.c.b16 %v307, %v306
  %v350 = vpack.c.b16 %v309, %v308
  %v351 = vpack.c.b16 %v311, %v310
  %v352 = vpack.c.b16 %v313, %v312
  %v353 = vpack.c.b16 %v315, %v314
  %v354 = vpack.c.b16 %v317, %v316
  %v355 = vpack.c.b16 %v319, %v318
  %v356 = vpack.c.b16 %v321, %v320
  %v357 = vpack.c.b16 %v323, %v322
  %v358 = vpack.c.b16 %v325, %v324
  %v359 = vpack.c.b16 %v327, %v326
  %v360 = vpack.c.b16 %v328, %v328
  %vm392 = vcmask 949248
  %v394 = vsel %vm392, %v178, 0
  %v397 = vsel %vm392, %v182, 0
  %v400 = vsel %vm392, %v186, 0
  %v403 = vsel %vm392, %v190, 0
  %vm405 = vcmask 1041408
  %v407 = vsel %vm405, %v360, 0
  %409 = vmatpush.bf16.msra.mxu0 %v336
  %410 = vmatpush.bf16.msra.mxu0 %v335
  %411 = vmatpush.bf16.msra.mxu0 %v334
  %412 = vmatpush.bf16.msra.mxu0 %v333
  %413 = vmatpush.bf16.msra.mxu0 %v332
  %414 = vmatpush.bf16.msra.mxu0 %v331
  %415 = vmatpush.bf16.msra.mxu0 %v330
  %416 = vmatpush.bf16.msra.mxu0 %v329
  %417 = vmatmul.bf16.gmra.mxu0 %v175
  %v418 = vpop.f32.mrf.mxu0
  %v419 = vadd.f32 %v101, %v418
  %v420 = vpop.f32.mrf.mxu0
  %v421 = vadd.f32 %v106, %v420
  %422 = vmatmul.bf16.gmra.mxu0 %v179
  %v423 = vpop.f32.mrf.mxu0
  %v424 = vadd.f32 %v111, %v423
  %v425 = vpop.f32.mrf.mxu0
  %v426 = vadd.f32 %v116, %v425
  %427 = vmatmul.bf16.gmra.mxu0 %v183
  %v428 = vpop.f32.mrf.mxu0
  %v429 = vadd.f32 %v121, %v428
  %v430 = vpop.f32.mrf.mxu0
  %v431 = vadd.f32 %v126, %v430
  %432 = vmatmul.bf16.gmra.mxu0 %v187
  %v433 = vpop.f32.mrf.mxu0
  %v434 = vadd.f32 %v131, %v433
  %v435 = vpop.f32.mrf.mxu0
  %436 = vdwg.mxu0
  %437 = vmatpush.bf16.msra.mxu0 %v344
  %438 = vmatpush.bf16.msra.mxu0 %v343
  %439 = vmatpush.bf16.msra.mxu0 %v342
  %440 = vmatpush.bf16.msra.mxu0 %v341
  %441 = vmatpush.bf16.msra.mxu0 %v340
  %442 = vmatpush.bf16.msra.mxu0 %v339
  %443 = vmatpush.bf16.msra.mxu0 %v338
  %444 = vmatpush.bf16.msra.mxu0 %v337
  %445 = vmatmul.bf16.gmra.mxu0 %v176
  %v446 = vpop.f32.mrf.mxu0
  %v447 = vadd.f32 %v419, %v446
  %v448 = vpop.f32.mrf.mxu0
  %v449 = vadd.f32 %v421, %v448
  %450 = vmatmul.bf16.gmra.mxu0 %v180
  %v451 = vpop.f32.mrf.mxu0
  %v452 = vadd.f32 %v424, %v451
  %v453 = vpop.f32.mrf.mxu0
  %v454 = vadd.f32 %v426, %v453
  %455 = vmatmul.bf16.gmra.mxu0 %v184
  %v456 = vpop.f32.mrf.mxu0
  %v457 = vadd.f32 %v429, %v456
  %v458 = vpop.f32.mrf.mxu0
  %v459 = vadd.f32 %v431, %v458
  %460 = vmatmul.bf16.gmra.mxu0 %v188
  %v461 = vpop.f32.mrf.mxu0
  %v462 = vadd.f32 %v434, %v461
  %v463 = vpop.f32.mrf.mxu0
  %464 = vdwg.mxu0
  %465 = vmatpush.bf16.msra.mxu0 %v352
  %466 = vmatpush.bf16.msra.mxu0 %v351
  %467 = vmatpush.bf16.msra.mxu0 %v350
  %468 = vmatpush.bf16.msra.mxu0 %v349
  %469 = vmatpush.bf16.msra.mxu0 %v348
  %470 = vmatpush.bf16.msra.mxu0 %v347
  %471 = vmatpush.bf16.msra.mxu0 %v346
  %472 = vmatpush.bf16.msra.mxu0 %v345
  %473 = vmatmul.bf16.gmra.mxu0 %v177
  %v474 = vpop.f32.mrf.mxu0
  %v475 = vadd.f32 %v447, %v474
  %v476 = vpop.f32.mrf.mxu0
  %v477 = vadd.f32 %v449, %v476
  %478 = vmatmul.bf16.gmra.mxu0 %v181
  %v479 = vpop.f32.mrf.mxu0
  %v480 = vadd.f32 %v452, %v479
  %v481 = vpop.f32.mrf.mxu0
  %v482 = vadd.f32 %v454, %v481
  %483 = vmatmul.bf16.gmra.mxu0 %v185
  %v484 = vpop.f32.mrf.mxu0
  %v485 = vadd.f32 %v457, %v484
  %v486 = vpop.f32.mrf.mxu0
  %v487 = vadd.f32 %v459, %v486
  %488 = vmatmul.bf16.gmra.mxu0 %v189
  %v489 = vpop.f32.mrf.mxu0
  %v490 = vadd.f32 %v462, %v489
  %v491 = vpop.f32.mrf.mxu0
  %492 = vdwg.mxu0
  %493 = vmatpush.bf16.msra.mxu0 %v407
  %494 = vmatpush.bf16.msra.mxu0 %v359
  %495 = vmatpush.bf16.msra.mxu0 %v358
  %496 = vmatpush.bf16.msra.mxu0 %v357
  %497 = vmatpush.bf16.msra.mxu0 %v356
  %498 = vmatpush.bf16.msra.mxu0 %v355
  %499 = vmatpush.bf16.msra.mxu0 %v354
  %500 = vmatpush.bf16.msra.mxu0 %v353
  %501 = vmatmul.bf16.gmra.mxu0 %v394
  %v502 = vpop.f32.mrf.mxu0
  %v503 = vadd.f32 %v475, %v502
  %v504 = vpop.f32.mrf.mxu0
  %v505 = vadd.f32 %v477, %v504
  %506 = vmatmul.bf16.gmra.mxu0 %v397
  %v507 = vpop.f32.mrf.mxu0
  %v508 = vadd.f32 %v480, %v507
  %v509 = vpop.f32.mrf.mxu0
  %v510 = vadd.f32 %v482, %v509
  %511 = vmatmul.bf16.gmra.mxu0 %v400
  %v512 = vpop.f32.mrf.mxu0
  %v513 = vadd.f32 %v485, %v512
  %v514 = vpop.f32.mrf.mxu0
  %v515 = vadd.f32 %v487, %v514
  %516 = vmatmul.bf16.gmra.mxu0 %v403
  %v517 = vpop.f32.mrf.mxu0
  %v518 = vadd.f32 %v490, %v517
  %v519 = vpop.f32.mrf.mxu0
  %520 = vdwg.mxu0
  %v521 = vmax.f32 %v503, 0.0
  %v522 = vmax.f32 %v505, 0.0
  %v523 = vmax.f32 %v508, 0.0
  %v524 = vmax.f32 %v510, 0.0
  %v525 = vmax.f32 %v513, 0.0
  %v526 = vmax.f32 %v515, 0.0
  %v527 = vmax.f32 %v518, 0.0
  %535 = vrot.lane.b32.xlu0 %v521, 96
  %v536 = vpop.permute.xlu0 %535
  %537 = vrot.lane.b32.xlu0 %v522, 96
  %v538 = vpop.permute.xlu0 %537
  %539 = vrot.lane.b32.xlu0 %v523, 96
  %v540 = vpop.permute.xlu0 %539
  %541 = vrot.lane.b32.xlu0 %v524, 96
  %v542 = vpop.permute.xlu0 %541
  %543 = vrot.lane.b32.xlu0 %v525, 96
  %v544 = vpop.permute.xlu0 %543
  %545 = vrot.lane.b32.xlu0 %v526, 96
  %v546 = vpop.permute.xlu0 %545
  %547 = vrot.lane.b32.xlu0 %v527, 96
  %v548 = vpop.permute.xlu0 %547
  %v556 = vmax.f32 %v521, %v536
  %v557 = vmax.f32 %v522, %v538
  %v558 = vmax.f32 %v523, %v540
  %v559 = vmax.f32 %v524, %v542
  %v560 = vmax.f32 %v525, %v544
  %v561 = vmax.f32 %v526, %v546
  %v562 = vmax.f32 %v527, %v548
  %570 = vrot.lane.b32.xlu0 %v556, 64
  %v571 = vpop.permute.xlu0 %570
  %572 = vrot.lane.b32.xlu0 %v557, 64
  %v573 = vpop.permute.xlu0 %572
  %574 = vrot.lane.b32.xlu0 %v558, 64
  %v575 = vpop.permute.xlu0 %574
  %576 = vrot.lane.b32.xlu0 %v559, 64
  %v577 = vpop.permute.xlu0 %576
  %578 = vrot.lane.b32.xlu0 %v560, 64
  %v579 = vpop.permute.xlu0 %578
  %580 = vrot.lane.b32.xlu0 %v561, 64
  %v581 = vpop.permute.xlu0 %580
  %582 = vrot.lane.b32.xlu0 %v562, 64
  %v583 = vpop.permute.xlu0 %582
  %v591 = vmax.f32 %v556, %v571
  %v592 = vmax.f32 %v557, %v573
  %v593 = vmax.f32 %v558, %v575
  %v594 = vmax.f32 %v559, %v577
  %v595 = vmax.f32 %v560, %v579
  %v596 = vmax.f32 %v561, %v581
  %v597 = vmax.f32 %v562, %v583
  %vm598 = vcmask 261120
  %599 = vst.msk [vmem:[%s3] sm:$0xff] %vm598, %v591
  %600 = vst.msk [vmem:[%s3 + $0x8] sm:$0xff] %vm598, %v592
  %601 = vst.msk [vmem:[%s3 + $0x10] sm:$0xff] %vm598, %v593
  %602 = vst.msk [vmem:[%s3 + $0x18] sm:$0xff] %vm598, %v594
  %603 = vst.msk [vmem:[%s3 + $0x20] sm:$0xff] %vm598, %v595
  %604 = vst.msk [vmem:[%s3 + $0x28] sm:$0xff] %vm598, %v596
  %vm605 = vcmask 254976
  %606 = vst.msk [vmem:[%s3 + $0x30] sm:$0x3] %vm605, %v597
  // Predicated region
  $region14: #{lenet_forward.4} parent=0 // pred_check
    _
  $region15: #{lenet_forward.4} parent=0 // pred_check_branch
    %608 = sbr.rel (0) target = $region17
  $region16: #{lenet_forward.4} parent=0 // pred_region
    _
  $region17: #{lenet_forward.4} parent=0 // pred_fallthru
    _
  // Predicated region
  $region18: #{lenet_forward.4} parent=0 // pred_check
    _
  $region19: #{lenet_forward.4} parent=0 // pred_check_branch
    %610 = sbr.rel (0) target = $region21
  $region20: #{lenet_forward.4} parent=0 // pred_region
    _
  $region21: #{lenet_forward.4} parent=0 // pred_fallthru
    _

// kernel: lenet_forward.5
$region0: #{lenet_forward.5}
  #allocation0 [shape = 'u32[]', space=smem, size = 0x4, offset = 0x4, fixed_abs, tag = 'smem constant byte address 0x4 - core index']
  #allocation1 [shape = 'u32[72,128]{1,0:T(1,128)}', space=vmem, size = 0x9000, scoped, tag = 'internal scratch']
  %s0 = inlined_call_operand.vmem [shape: bf16[2,800], index: 0, kind: input, shape index: {}]
  %s1 = inlined_call_operand.vmem [shape: bf16[800,500], index: 1, kind: input, shape index: {}]
  %s2 = inlined_call_operand.vmem [shape: f32[1,500], index: 2, kind: input, shape index: {}]
  %s3 = inlined_call_operand.vmem [shape: bf16[500,14], index: 3, kind: input, shape index: {}]
  %s4 = inlined_call_operand.vmem [shape: f32[1,14], index: 4, kind: input, shape index: {}]
  %s5 = inlined_call_operand.hbm [shape: f32[2,14], index: 5, kind: output, shape index: {}]
  %s6 = sld [smem:[#allocation0]]
  $region30: #{lenet_forward.5} parent=0
    _
  %s8 = ssub.s32 1, %s6
  %s9 = scalar_select 0, %s8, %s6
  $region1: #{lenet_forward.5} parent=0
    #allocation2 [shape = 'u8[1024]{0}', space=vmem, size = 0x400, scoped, tag = 'output window, operand 0, single buffered']
    #allocation3 [shape = 's32[1]{0}', space=sflag, size = 0x4, scoped, tag = 'scoped memory for lenet_forward.5']
    %10 = vsyncpa [#allocation3], 0
    // Predicated region
    $region2: #{lenet_forward.5} parent=1 // pred_check
      _
    $region3: #{lenet_forward.5} parent=1 // pred_check_branch
      %12 = sbr.rel (0) target = $region5
    $region4: #{lenet_forward.5} parent=1 // pred_region
      _
    $region5: #{lenet_forward.5} parent=1 // pred_fallthru
      _
    // Predicated region
    $region6: #{lenet_forward.5} parent=1 // pred_check
      _
    $region7: #{lenet_forward.5} parent=1 // pred_check_branch
      %14 = sbr.rel (0) target = $region9
    $region8: #{lenet_forward.5} parent=1 // pred_region
      _
    $region9: #{lenet_forward.5} parent=1 // pred_fallthru
      _
    // Predicated region
    $region10: #{lenet_forward.5} parent=1 // pred_check
      _
    $region11: #{lenet_forward.5} parent=1 // pred_check_branch
      %16 = sbr.rel (0) target = $region13
    $region12: #{lenet_forward.5} parent=1 // pred_region
      _
    $region13: #{lenet_forward.5} parent=1 // pred_fallthru
      _
    // Predicated region
    $region14: #{lenet_forward.5} parent=1 // pred_check
      _
    $region15: #{lenet_forward.5} parent=1 // pred_check_branch
      %18 = sbr.rel (0) target = $region17
    $region16: #{lenet_forward.5} parent=1 // pred_region
      _
    $region17: #{lenet_forward.5} parent=1 // pred_fallthru
      _
    // Predicated region
    $region18: #{lenet_forward.5} parent=1 // pred_check
      _
    $region19: #{lenet_forward.5} parent=1 // pred_check_branch
      %20 = sbr.rel (0) target = $region21
    $region20: #{lenet_forward.5} parent=1 // pred_region
      _
    $region21: #{lenet_forward.5} parent=1 // pred_fallthru
      _
    %v22 = vld [vmem:[%s0] sm:$0x7f]
    %v23 = vld [vmem:[%s1] sm:$0xff]
    %v24 = vld [vmem:[%s1 + $0x8] sm:$0xff]
    %v25 = vld [vmem:[%s1 + $0x10] sm:$0xff]
    %v26 = vld [vmem:[%s1 + $0x18] sm:$0xff]
    %v27 = vld [vmem:[%s1 + $0x20] sm:$0xff]
    %v28 = vld [vmem:[%s1 + $0x28] sm:$0xff]
    %v29 = vld [vmem:[%s1 + $0x30] sm:$0xff]
    %v30 = vld [vmem:[%s1 + $0x38] sm:$0xff]
    %v31 = vld [vmem:[%s1 + $0x40] sm:$0xff]
    %v32 = vld [vmem:[%s1 + $0x48] sm:$0xff]
    %v33 = vld [vmem:[%s1 + $0x50] sm:$0xff]
    %v34 = vld [vmem:[%s1 + $0x58] sm:$0xff]
    %v35 = vld [vmem:[%s1 + $0x60] sm:$0xff]
    %v36 = vld [vmem:[%s1 + $0x68] sm:$0xff]
    %v37 = vld [vmem:[%s1 + $0x70] sm:$0xff]
    %v38 = vld [vmem:[%s1 + $0x78] sm:$0xff]
    %v39 = vld [vmem:[%s1 + $0x80] sm:$0xff]
    %v40 = vld [vmem:[%s1 + $0x88] sm:$0xff]
    %v41 = vld [vmem:[%s1 + $0x90] sm:$0xff]
    %v42 = vld [vmem:[%s1 + $0x98] sm:$0xff]
    %v43 = vld [vmem:[%s1 + $0xa0] sm:$0xff]
    %v44 = vld [vmem:[%s1 + $0xa8] sm:$0xff]
    %v45 = vld [vmem:[%s1 + $0xb0] sm:$0xff]
    %v46 = vld [vmem:[%s1 + $0xb8] sm:$0xff]
    %v47 = vld [vmem:[%s1 + $0xc0] sm:$0xff]
    %v48 = vld [vmem:[%s1 + $0xc8] sm:$0xff]
    %v49 = vld [vmem:[%s1 + $0xd0] sm:$0xff]
    %v50 = vld [vmem:[%s1 + $0xd8] sm:$0xff]
    %v51 = vld [vmem:[%s1 + $0xe0] sm:$0xff]
    %v52 = vld [vmem:[%s1 + $0xe8] sm:$0xff]
    %v53 = vld [vmem:[%s1 + $0xf0] sm:$0xff]
    %v54 = vld [vmem:[%s1 + $0xf8] sm:$0xff]
    %v55 = vld [vmem:[%s1 + $0x100] sm:$0xff]
    %v56 = vld [vmem:[%s1 + $0x108] sm:$0xff]
    %v57 = vld [vmem:[%s1 + $0x110] sm:$0xff]
    %v58 = vld [vmem:[%s1 + $0x118] sm:$0xff]
    %v59 = vld [vmem:[%s1 + $0x120] sm:$0xff]
    %v60 = vld [vmem:[%s1 + $0x128] sm:$0xff]
    %v61 = vld [vmem:[%s1 + $0x130] sm:$0xff]
    %v62 = vld [vmem:[%s1 + $0x138] sm:$0xff]
    %v63 = vld [vmem:[%s1 + $0x140] sm:$0xff]
    %v64 = vld [vmem:[%s1 + $0x148] sm:$0xff]
    %v65 = vld [vmem:[%s1 + $0x150] sm:$0xff]
    %v66 = vld [vmem:[%s1 + $0x158] sm:$0xff]
    %v67 = vld [vmem:[%s1 + $0x160] sm:$0xff]
    %v68 = vld [vmem:[%s1 + $0x168] sm:$0xff]
    %v69 = vld [vmem:[%s1 + $0x170] sm:$0xff]
    %v70 = vld [vmem:[%s1 + $0x178] sm:$0xff]
    %v71 = vld [vmem:[%s1 + $0x180] sm:$0xff]
    %v72 = vld [vmem:[%s1 + $0x188] sm:$0xff]
    %v73 = vld [vmem:[%s1 + $0x190] sm:$0xff]
    %v74 = vld [vmem:[%s1 + $0x198] sm:$0xff]
    %v75 = vld [vmem:[%s1 + $0x1a0] sm:$0xff]
    %v76 = vld [vmem:[%s1 + $0x1a8] sm:$0xff]
    %v77 = vld [vmem:[%s1 + $0x1b0] sm:$0xff]
    %v78 = vld [vmem:[%s1 + $0x1b8] sm:$0xff]
    %v79 = vld [vmem:[%s1 + $0x1c0] sm:$0xff]
    %v80 = vld [vmem:[%s1 + $0x1c8] sm:$0xff]
    %v81 = vld [vmem:[%s1 + $0x1d0] sm:$0xff]
    %v82 = vld [vmem:[%s1 + $0x1d8] sm:$0xff]
    %v83 = vld [vmem:[%s1 + $0x1e0] sm:$0xff]
    %v84 = vld [vmem:[%s1 + $0x1e8] sm:$0xff]
    %v85 = vld [vmem:[%s1 + $0x1f0] sm:$0xff]
    %v86 = vld [vmem:[%s1 + $0x1f8] sm:$0xff]
    %v87 = vld [vmem:[%s1 + $0x200] sm:$0xff]
    %v88 = vld [vmem:[%s1 + $0x208] sm:$0xff]
    %v89 = vld [vmem:[%s1 + $0x210] sm:$0xff]
    %v90 = vld [vmem:[%s1 + $0x218] sm:$0xff]
    %v91 = vld [vmem:[%s1 + $0x220] sm:$0xff]
    %v92 = vld [vmem:[%s1 + $0x228] sm:$0xff]
    %v93 = vld [vmem:[%s1 + $0x230] sm:$0xff]
    %v94 = vld [vmem:[%s1 + $0x238] sm:$0xff]
    %v95 = vld [vmem:[%s1 + $0x240] sm:$0xff]
    %v96 = vld [vmem:[%s1 + $0x248] sm:$0xff]
    %v97 = vld [vmem:[%s1 + $0x250] sm:$0xff]
    %v98 = vld [vmem:[%s1 + $0x258] sm:$0xff]
    %v99 = vld [vmem:[%s1 + $0x260] sm:$0xff]
    %v100 = vld [vmem:[%s1 + $0x268] sm:$0xff]
    %v101 = vld [vmem:[%s1 + $0x270] sm:$0xff]
    %v102 = vld [vmem:[%s1 + $0x278] sm:$0xff]
    %v103 = vld [vmem:[%s1 + $0x280] sm:$0xff]
    %v104 = vld [vmem:[%s1 + $0x288] sm:$0xff]
    %v105 = vld [vmem:[%s1 + $0x290] sm:$0xff]
    %v106 = vld [vmem:[%s1 + $0x298] sm:$0xff]
    %v107 = vld [vmem:[%s1 + $0x2a0] sm:$0xff]
    %v108 = vld [vmem:[%s1 + $0x2a8] sm:$0xff]
    %v109 = vld [vmem:[%s1 + $0x2b0] sm:$0xff]
    %v110 = vld [vmem:[%s1 + $0x2b8] sm:$0xff]
    %v111 = vld [vmem:[%s1 + $0x2c0] sm:$0xff]
    %v112 = vld [vmem:[%s1 + $0x2c8] sm:$0xff]
    %v113 = vld [vmem:[%s1 + $0x2d0] sm:$0xff]
    %v114 = vld [vmem:[%s1 + $0x2d8] sm:$0xff]
    %v115 = vld [vmem:[%s1 + $0x2e0] sm:$0xff]
    %v116 = vld [vmem:[%s1 + $0x2e8] sm:$0xff]
    %v117 = vld [vmem:[%s1 + $0x2f0] sm:$0xff]
    %v118 = vld [vmem:[%s1 + $0x2f8] sm:$0xff]
    %v119 = vld [vmem:[%s1 + $0x300] sm:$0xff]
    %v120 = vld [vmem:[%s1 + $0x308] sm:$0xff]
    %v121 = vld [vmem:[%s1 + $0x310] sm:$0xff]
    %v122 = vld [vmem:[%s1 + $0x318] sm:$0xff]
    %v123 = vld [vmem:[%s1 + $0x320] sm:$0xff]
    %v124 = vld [vmem:[%s1 + $0x328] sm:$0xff]
    %v125 = vld [vmem:[%s1 + $0x330] sm:$0xff]
    %v126 = vld [vmem:[%s1 + $0x338] sm:$0xff]
    %v127 = vld [vmem:[%s1 + $0x340] sm:$0xff]
    %v128 = vld [vmem:[%s1 + $0x348] sm:$0xff]
    %v129 = vld [vmem:[%s1 + $0x350] sm:$0xff]
    %v130 = vld [vmem:[%s1 + $0x358] sm:$0xff]
    %v131 = vld [vmem:[%s1 + $0x360] sm:$0xff]
    %v132 = vld [vmem:[%s1 + $0x368] sm:$0xff]
    %v133 = vld [vmem:[%s1 + $0x370] sm:$0xff]
    %v134 = vld [vmem:[%s1 + $0x378] sm:$0xff]
    %v135 = vld [vmem:[%s1 + $0x380] sm:$0xff]
    %v136 = vld [vmem:[%s1 + $0x388] sm:$0xff]
    %v137 = vld [vmem:[%s1 + $0x390] sm:$0xff]
    %v138 = vld [vmem:[%s1 + $0x398] sm:$0xff]
    %v139 = vld [vmem:[%s1 + $0x3a0] sm:$0xff]
    %v140 = vld [vmem:[%s1 + $0x3a8] sm:$0xff]
    %v141 = vld [vmem:[%s1 + $0x3b0] sm:$0xff]
    %v142 = vld [vmem:[%s1 + $0x3b8] sm:$0xff]
    %v143 = vld [vmem:[%s1 + $0x3c0] sm:$0xff]
    %v144 = vld [vmem:[%s1 + $0x3c8] sm:$0xff]
    %v145 = vld [vmem:[%s1 + $0x3d0] sm:$0xff]
    %v146 = vld [vmem:[%s1 + $0x3d8] sm:$0xff]
    %v147 = vld [vmem:[%s1 + $0x3e0] sm:$0xff]
    %v148 = vld [vmem:[%s1 + $0x3e8] sm:$0xff]
    %v149 = vld [vmem:[%s1 + $0x3f0] sm:$0xff]
    %v150 = vld [vmem:[%s1 + $0x3f8] sm:$0xff]
    %v151 = vld [vmem:[%s1 + $0x400] sm:$0xff]
    %v152 = vld [vmem:[%s1 + $0x408] sm:$0xff]
    %v153 = vld [vmem:[%s1 + $0x410] sm:$0xff]
    %v154 = vld [vmem:[%s1 + $0x418] sm:$0xff]
    %v155 = vld [vmem:[%s1 + $0x420] sm:$0xff]
    %v156 = vld [vmem:[%s1 + $0x428] sm:$0xff]
    %v157 = vld [vmem:[%s1 + $0x430] sm:$0xff]
    %v158 = vld [vmem:[%s1 + $0x438] sm:$0xff]
    %v159 = vld [vmem:[%s1 + $0x440] sm:$0xff]
    %v160 = vld [vmem:[%s1 + $0x448] sm:$0xff]
    %v161 = vld [vmem:[%s1 + $0x450] sm:$0xff]
    %v162 = vld [vmem:[%s1 + $0x458] sm:$0xff]
    %v163 = vld [vmem:[%s1 + $0x460] sm:$0xff]
    %v164 = vld [vmem:[%s1 + $0x468] sm:$0xff]
    %v165 = vld [vmem:[%s1 + $0x470] sm:$0xff]
    %v166 = vld [vmem:[%s1 + $0x478] sm:$0xff]
    %v167 = vld [vmem:[%s1 + $0x480] sm:$0xff]
    %v168 = vld [vmem:[%s1 + $0x488] sm:$0xff]
    %v169 = vld [vmem:[%s1 + $0x490] sm:$0xff]
    %v170 = vld [vmem:[%s1 + $0x498] sm:$0xff]
    %v171 = vld [vmem:[%s1 + $0x4a0] sm:$0xff]
    %v172 = vld [vmem:[%s1 + $0x4a8] sm:$0xff]
    %v173 = vld [vmem:[%s1 + $0x4b0] sm:$0xff]
    %v174 = vld [vmem:[%s1 + $0x4b8] sm:$0xff]
    %v175 = vld [vmem:[%s1 + $0x4c0] sm:$0xff]
    %v176 = vld [vmem:[%s1 + $0x4c8] sm:$0xff]
    %v177 = vld [vmem:[%s1 + $0x4d0] sm:$0xff]
    %v178 = vld [vmem:[%s1 + $0x4d8] sm:$0xff]
    %v179 = vld [vmem:[%s1 + $0x4e0] sm:$0xff]
    %v180 = vld [vmem:[%s1 + $0x4e8] sm:$0xff]
    %v181 = vld [vmem:[%s1 + $0x4f0] sm:$0xff]
    %v182 = vld [vmem:[%s1 + $0x4f8] sm:$0xff]
    %v183 = vld [vmem:[%s1 + $0x500] sm:$0xff]
    %v184 = vld [vmem:[%s1 + $0x508] sm:$0xff]
    %v185 = vld [vmem:[%s1 + $0x510] sm:$0xff]
    %v186 = vld [vmem:[%s1 + $0x518] sm:$0xff]
    %v187 = vld [vmem:[%s1 + $0x520] sm:$0xff]
    %v188 = vld [vmem:[%s1 + $0x528] sm:$0xff]
    %v189 = vld [vmem:[%s1 + $0x530] sm:$0xff]
    %v190 = vld [vmem:[%s1 + $0x538] sm:$0xff]
    %v191 = vld [vmem:[%s1 + $0x540] sm:$0xff]
    %v192 = vld [vmem:[%s1 + $0x548] sm:$0xff]
    %v193 = vld [vmem:[%s1 + $0x550] sm:$0xff]
    %v194 = vld [vmem:[%s1 + $0x558] sm:$0xff]
    %v195 = vld [vmem:[%s1 + $0x560] sm:$0xff]
    %v196 = vld [vmem:[%s1 + $0x568] sm:$0xff]
    %v197 = vld [vmem:[%s1 + $0x570] sm:$0xff]
    %v198 = vld [vmem:[%s1 + $0x578] sm:$0xff]
    %v199 = vld [vmem:[%s1 + $0x580] sm:$0xff]
    %v200 = vld [vmem:[%s1 + $0x588] sm:$0xff]
    %v201 = vld [vmem:[%s1 + $0x590] sm:$0xff]
    %v202 = vld [vmem:[%s1 + $0x598] sm:$0xff]
    %v203 = vld [vmem:[%s1 + $0x5a0] sm:$0xff]
    %v204 = vld [vmem:[%s1 + $0x5a8] sm:$0xff]
    %v205 = vld [vmem:[%s1 + $0x5b0] sm:$0xff]
    %v206 = vld [vmem:[%s1 + $0x5b8] sm:$0xff]
    %v207 = vld [vmem:[%s1 + $0x5c0] sm:$0xff]
    %v208 = vld [vmem:[%s1 + $0x5c8] sm:$0xff]
    %v209 = vld [vmem:[%s1 + $0x5d0] sm:$0xff]
    %v210 = vld [vmem:[%s1 + $0x5d8] sm:$0xff]
    %v211 = vld [vmem:[%s1 + $0x5e0] sm:$0xff]
    %v212 = vld [vmem:[%s1 + $0x5e8] sm:$0xff]
    %v213 = vld [vmem:[%s1 + $0x5f0] sm:$0xff]
    %v214 = vld [vmem:[%s1 + $0x5f8] sm:$0xff]
    %v215 = vld [vmem:[%s1 + $0x600] sm:$0xff]
    %v216 = vld [vmem:[%s1 + $0x608] sm:$0xff]
    %v217 = vld [vmem:[%s1 + $0x610] sm:$0xff]
    %v218 = vld [vmem:[%s1 + $0x618] sm:$0xff]
    %v219 = vld [vmem:[%s1 + $0x620] sm:$0xff]
    %v220 = vld [vmem:[%s1 + $0x628] sm:$0xff]
    %v221 = vld [vmem:[%s1 + $0x630] sm:$0xff]
    %v222 = vld [vmem:[%s1 + $0x638] sm:$0xff]
    %v223 = vld [vmem:[%s2] sm:$0xf]
    %v225 = vperm.slane %v223, 0
    %v226 = vperm.slane %v223, 1
    %v227 = vperm.slane %v223, 2
    %v228 = vperm.slane %v223, 3
    %234 = vst [vmem:[#allocation1] ss:$9 sm:$0xff] %v22
    %v235 = vld [vmem:[#allocation1] sm:$0xff]
    %v236 = vld [vmem:[#allocation1 + $0x9] sm:$0xff]
    %v237 = vld [vmem:[#allocation1 + $0x12] sm:$0xff]
    %v238 = vld [vmem:[#allocation1 + $0x1b] sm:$0xff]
    %v239 = vld [vmem:[#allocation1 + $0x24] sm:$0xff]
    %v240 = vld [vmem:[#allocation1 + $0x2d] sm:$0xff]
    %v241 = vld [vmem:[#allocation1 + $0x36] sm:$0xff]
    %v448 = vunpack.c.l.b16 %v23
    %v449 = vunpack.c.h.b16 %v23
    %v450 = vunpack.c.l.b16 %v24
    %v451 = vunpack.c.h.b16 %v24
    %v452 = vunpack.c.l.b16 %v25
    %v453 = vunpack.c.h.b16 %v25
    %v454 = vunpack.c.l.b16 %v26
    %v455 = vunpack.c.h.b16 %v26
    %v456 = vunpack.c.l.b16 %v27
    %v457 = vunpack.c.h.b16 %v27
    %v458 = vunpack.c.l.b16 %v28
    %v459 = vunpack.c.h.b16 %v28
    %v460 = vunpack.c.l.b16 %v29
    %v461 = vunpack.c.h.b16 %v29
    %v462 = vunpack.c.l.b16 %v30
    %v463 = vunpack.c.h.b16 %v30
    %v464 = vunpack.c.l.b16 %v31
    %v465 = vunpack.c.h.b16 %v31
    %v466 = vunpack.c.l.b16 %v32
    %v467 = vunpack.c.h.b16 %v32
    %v468 = vunpack.c.l.b16 %v33
    %v469 = vunpack.c.h.b16 %v33
    %v470 = vunpack.c.l.b16 %v34
    %v471 = vunpack.c.h.b16 %v34
    %v472 = vunpack.c.l.b16 %v35
    %v473 = vunpack.c.h.b16 %v35
    %v474 = vunpack.c.l.b16 %v36
    %v475 = vunpack.c.h.b16 %v36
    %v476 = vunpack.c.l.b16 %v37
    %v477 = vunpack.c.h.b16 %v37
    %v478 = vunpack.c.l.b16 %v38
    %v479 = vunpack.c.h.b16 %v38
    %v480 = vunpack.c.l.b16 %v39
    %v481 = vunpack.c.h.b16 %v39
    %v482 = vunpack.c.l.b16 %v40
    %v483 = vunpack.c.h.b16 %v40
    %v484 = vunpack.c.l.b16 %v41
    %v485 = vunpack.c.h.b16 %v41
    %v486 = vunpack.c.l.b16 %v42
    %v487 = vunpack.c.h.b16 %v42
    %v488 = vunpack.c.l.b16 %v43
    %v489 = vunpack.c.h.b16 %v43
    %v490 = vunpack.c.l.b16 %v44
    %v491 = vunpack.c.h.b16 %v44
    %v492 = vunpack.c.l.b16 %v45
    %v493 = vunpack.c.h.b16 %v45
    %v494 = vunpack.c.l.b16 %v46
    %v495 = vunpack.c.h.b16 %v46
    %v496 = vunpack.c.l.b16 %v47
    %v497 = vunpack.c.h.b16 %v47
    %v498 = vunpack.c.l.b16 %v48
    %v499 = vunpack.c.h.b16 %v48
    %v500 = vunpack.c.l.b16 %v49
    %v501 = vunpack.c.h.b16 %v49
    %v502 = vunpack.c.l.b16 %v50
    %v503 = vunpack.c.h.b16 %v50
    %v504 = vunpack.c.l.b16 %v51
    %v505 = vunpack.c.h.b16 %v51
    %v506 = vunpack.c.l.b16 %v52
    %v507 = vunpack.c.h.b16 %v52
    %v508 = vunpack.c.l.b16 %v53
    %v509 = vunpack.c.h.b16 %v53
    %v510 = vunpack.c.l.b16 %v54
    %v511 = vunpack.c.h.b16 %v54
    %v512 = vunpack.c.l.b16 %v55
    %v513 = vunpack.c.h.b16 %v55
    %v514 = vunpack.c.l.b16 %v56
    %v515 = vunpack.c.h.b16 %v56
    %v516 = vunpack.c.l.b16 %v57
    %v517 = vunpack.c.h.b16 %v57
    %v518 = vunpack.c.l.b16 %v58
    %v519 = vunpack.c.h.b16 %v58
    %v520 = vunpack.c.l.b16 %v59
    %v521 = vunpack.c.h.b16 %v59
    %v522 = vunpack.c.l.b16 %v60
    %v523 = vunpack.c.h.b16 %v60
    %v524 = vunpack.c.l.b16 %v61
    %v525 = vunpack.c.h.b16 %v61
    %v526 = vunpack.c.l.b16 %v62
    %v527 = vunpack.c.h.b16 %v62
    %v528 = vunpack.c.l.b16 %v63
    %v529 = vunpack.c.h.b16 %v63
    %v530 = vunpack.c.l.b16 %v64
    %v531 = vunpack.c.h.b16 %v64
    %v532 = vunpack.c.l.b16 %v65
    %v533 = vunpack.c.h.b16 %v65
    %v534 = vunpack.c.l.b16 %v66
    %v535 = vunpack.c.h.b16 %v66
    %v536 = vunpack.c.l.b16 %v67
    %v537 = vunpack.c.h.b16 %v67
    %v538 = vunpack.c.l.b16 %v68
    %v539 = vunpack.c.h.b16 %v68
    %v540 = vunpack.c.l.b16 %v69
    %v541 = vunpack.c.h.b16 %v69
    %v542 = vunpack.c.l.b16 %v70
    %v543 = vunpack.c.h.b16 %v70
    %v544 = vunpack.c.l.b16 %v71
    %v545 = vunpack.c.h.b16 %v71
    %v546 = vunpack.c.l.b16 %v72
    %v547 = vunpack.c.h.b16 %v72
    %v548 = vunpack.c.l.b16 %v73
    %v549 = vunpack.c.h.b16 %v73
    %v550 = vunpack.c.l.b16 %v74
    %v551 = vunpack.c.h.b16 %v74
    %v552 = vunpack.c.l.b16 %v75
    %v553 = vunpack.c.h.b16 %v75
    %v554 = vunpack.c.l.b16 %v76
    %v555 = vunpack.c.h.b16 %v76
    %v556 = vunpack.c.l.b16 %v77
    %v557 = vunpack.c.h.b16 %v77
    %v558 = vunpack.c.l.b16 %v78
    %v559 = vunpack.c.h.b16 %v78
    %v560 = vunpack.c.l.b16 %v79
    %v561 = vunpack.c.h.b16 %v79
    %v562 = vunpack.c.l.b16 %v80
    %v563 = vunpack.c.h.b16 %v80
    %v564 = vunpack.c.l.b16 %v81
    %v565 = vunpack.c.h.b16 %v81
    %v566 = vunpack.c.l.b16 %v82
    %v567 = vunpack.c.h.b16 %v82
    %v568 = vunpack.c.l.b16 %v83
    %v569 = vunpack.c.h.b16 %v83
    %v570 = vunpack.c.l.b16 %v84
    %v571 = vunpack.c.h.b16 %v84
    %v572 = vunpack.c.l.b16 %v85
    %v573 = vunpack.c.h.b16 %v85
    %v574 = vunpack.c.l.b16 %v86
    %v575 = vunpack.c.h.b16 %v86
    %v576 = vunpack.c.l.b16 %v87
    %v577 = vunpack.c.h.b16 %v87
    %v578 = vunpack.c.l.b16 %v88
    %v579 = vunpack.c.h.b16 %v88
    %v580 = vunpack.c.l.b16 %v89
    %v581 = vunpack.c.h.b16 %v89
    %v582 = vunpack.c.l.b16 %v90
    %v583 = vunpack.c.h.b16 %v90
    %v584 = vunpack.c.l.b16 %v91
    %v585 = vunpack.c.h.b16 %v91
    %v586 = vunpack.c.l.b16 %v92
    %v587 = vunpack.c.h.b16 %v92
    %v588 = vunpack.c.l.b16 %v93
    %v589 = vunpack.c.h.b16 %v93
    %v590 = vunpack.c.l.b16 %v94
    %v591 = vunpack.c.h.b16 %v94
    %v592 = vunpack.c.l.b16 %v95
    %v593 = vunpack.c.h.b16 %v95
    %v594 = vunpack.c.l.b16 %v96
    %v595 = vunpack.c.h.b16 %v96
    %v596 = vunpack.c.l.b16 %v97
    %v597 = vunpack.c.h.b16 %v97
    %v598 = vunpack.c.l.b16 %v98
    %v599 = vunpack.c.h.b16 %v98
    %v600 = vunpack.c.l.b16 %v99
    %v601 = vunpack.c.h.b16 %v99
    %v602 = vunpack.c.l.b16 %v100
    %v603 = vunpack.c.h.b16 %v100
    %v604 = vunpack.c.l.b16 %v101
    %v605 = vunpack.c.h.b16 %v101
    %v606 = vunpack.c.l.b16 %v102
    %v607 = vunpack.c.h.b16 %v102
    %v608 = vunpack.c.l.b16 %v103
    %v609 = vunpack.c.h.b16 %v103
    %v610 = vunpack.c.l.b16 %v104
    %v611 = vunpack.c.h.b16 %v104
    %v612 = vunpack.c.l.b16 %v105
    %v613 = vunpack.c.h.b16 %v105
    %v614 = vunpack.c.l.b16 %v106
    %v615 = vunpack.c.h.b16 %v106
    %v616 = vunpack.c.l.b16 %v107
    %v617 = vunpack.c.h.b16 %v107
    %v618 = vunpack.c.l.b16 %v108
    %v619 = vunpack.c.h.b16 %v108
    %v620 = vunpack.c.l.b16 %v109
    %v621 = vunpack.c.h.b16 %v109
    %v622 = vunpack.c.l.b16 %v110
    %v623 = vunpack.c.h.b16 %v110
    %v624 = vunpack.c.l.b16 %v111
    %v625 = vunpack.c.h.b16 %v111
    %v626 = vunpack.c.l.b16 %v112
    %v627 = vunpack.c.h.b16 %v112
    %v628 = vunpack.c.l.b16 %v113
    %v629 = vunpack.c.h.b16 %v113
    %v630 = vunpack.c.l.b16 %v114
    %v631 = vunpack.c.h.b16 %v114
    %v632 = vunpack.c.l.b16 %v115
    %v633 = vunpack.c.h.b16 %v115
    %v634 = vunpack.c.l.b16 %v116
    %v635 = vunpack.c.h.b16 %v116
    %v636 = vunpack.c.l.b16 %v117
    %v637 = vunpack.c.h.b16 %v117
    %v638 = vunpack.c.l.b16 %v118
    %v639 = vunpack.c.h.b16 %v118
    %v640 = vunpack.c.l.b16 %v119
    %v641 = vunpack.c.h.b16 %v119
    %v642 = vunpack.c.l.b16 %v120
    %v643 = vunpack.c.h.b16 %v120
    %v644 = vunpack.c.l.b16 %v121
    %v645 = vunpack.c.h.b16 %v121
    %v646 = vunpack.c.l.b16 %v122
    %v647 = vunpack.c.h.b16 %v122
    %v648 = vunpack.c.l.b16 %v123
    %v649 = vunpack.c.h.b16 %v123
    %v650 = vunpack.c.l.b16 %v124
    %v651 = vunpack.c.h.b16 %v124
    %v652 = vunpack.c.l.b16 %v125
    %v653 = vunpack.c.h.b16 %v125
    %v654 = vunpack.c.l.b16 %v126
    %v655 = vunpack.c.h.b16 %v126
    %v656 = vunpack.c.l.b16 %v127
    %v657 = vunpack.c.h.b16 %v127
    %v658 = vunpack.c.l.b16 %v128
    %v659 = vunpack.c.h.b16 %v128
    %v660 = vunpack.c.l.b16 %v129
    %v661 = vunpack.c.h.b16 %v129
    %v662 = vunpack.c.l.b16 %v130
    %v663 = vunpack.c.h.b16 %v130
    %v664 = vunpack.c.l.b16 %v131
    %v665 = vunpack.c.h.b16 %v131
    %v666 = vunpack.c.l.b16 %v132
    %v667 = vunpack.c.h.b16 %v132
    %v668 = vunpack.c.l.b16 %v133
    %v669 = vunpack.c.h.b16 %v133
    %v670 = vunpack.c.l.b16 %v134
    %v671 = vunpack.c.h.b16 %v134
    %v672 = vunpack.c.l.b16 %v135
    %v673 = vunpack.c.h.b16 %v135
    %v674 = vunpack.c.l.b16 %v136
    %v675 = vunpack.c.h.b16 %v136
    %v676 = vunpack.c.l.b16 %v137
    %v677 = vunpack.c.h.b16 %v137
    %v678 = vunpack.c.l.b16 %v138
    %v679 = vunpack.c.h.b16 %v138
    %v680 = vunpack.c.l.b16 %v139
    %v681 = vunpack.c.h.b16 %v139
    %v682 = vunpack.c.l.b16 %v140
    %v683 = vunpack.c.h.b16 %v140
    %v684 = vunpack.c.l.b16 %v141
    %v685 = vunpack.c.h.b16 %v141
    %v686 = vunpack.c.l.b16 %v142
    %v687 = vunpack.c.h.b16 %v142
    %v688 = vunpack.c.l.b16 %v143
    %v689 = vunpack.c.h.b16 %v143
    %v690 = vunpack.c.l.b16 %v144
    %v691 = vunpack.c.h.b16 %v144
    %v692 = vunpack.c.l.b16 %v145
    %v693 = vunpack.c.h.b16 %v145
    %v694 = vunpack.c.l.b16 %v146
    %v695 = vunpack.c.h.b16 %v146
    %v696 = vunpack.c.l.b16 %v147
    %v697 = vunpack.c.h.b16 %v147
    %v698 = vunpack.c.l.b16 %v148
    %v699 = vunpack.c.h.b16 %v148
    %v700 = vunpack.c.l.b16 %v149
    %v701 = vunpack.c.h.b16 %v149
    %v702 = vunpack.c.l.b16 %v150
    %v703 = vunpack.c.h.b16 %v150
    %v704 = vunpack.c.l.b16 %v151
    %v705 = vunpack.c.h.b16 %v151
    %v706 = vunpack.c.l.b16 %v152
    %v707 = vunpack.c.h.b16 %v152
    %v708 = vunpack.c.l.b16 %v153
    %v709 = vunpack.c.h.b16 %v153
    %v710 = vunpack.c.l.b16 %v154
    %v711 = vunpack.c.h.b16 %v154
    %v712 = vunpack.c.l.b16 %v155
    %v713 = vunpack.c.h.b16 %v155
    %v714 = vunpack.c.l.b16 %v156
    %v715 = vunpack.c.h.b16 %v156
    %v716 = vunpack.c.l.b16 %v157
    %v717 = vunpack.c.h.b16 %v157
    %v718 = vunpack.c.l.b16 %v158
    %v719 = vunpack.c.h.b16 %v158
    %v720 = vunpack.c.l.b16 %v159
    %v721 = vunpack.c.h.b16 %v159
    %v722 = vunpack.c.l.b16 %v160
    %v723 = vunpack.c.h.b16 %v160
    %v724 = vunpack.c.l.b16 %v161
    %v725 = vunpack.c.h.b16 %v161
    %v726 = vunpack.c.l.b16 %v162
    %v727 = vunpack.c.h.b16 %v162
    %v728 = vunpack.c.l.b16 %v163
    %v729 = vunpack.c.h.b16 %v163
    %v730 = vunpack.c.l.b16 %v164
    %v731 = vunpack.c.h.b16 %v164
    %v732 = vunpack.c.l.b16 %v165
    %v733 = vunpack.c.h.b16 %v165
    %v734 = vunpack.c.l.b16 %v166
    %v735 = vunpack.c.h.b16 %v166
    %v736 = vunpack.c.l.b16 %v167
    %v737 = vunpack.c.h.b16 %v167
    %v738 = vunpack.c.l.b16 %v168
    %v739 = vunpack.c.h.b16 %v168
    %v740 = vunpack.c.l.b16 %v169
    %v741 = vunpack.c.h.b16 %v169
    %v742 = vunpack.c.l.b16 %v170
    %v743 = vunpack.c.h.b16 %v170
    %v744 = vunpack.c.l.b16 %v171
    %v745 = vunpack.c.h.b16 %v171
    %v746 = vunpack.c.l.b16 %v172
    %v747 = vunpack.c.h.b16 %v172
    %v748 = vunpack.c.l.b16 %v173
    %v749 = vunpack.c.h.b16 %v173
    %v750 = vunpack.c.l.b16 %v174
    %v751 = vunpack.c.h.b16 %v174
    %v752 = vunpack.c.l.b16 %v175
    %v753 = vunpack.c.h.b16 %v175
    %v754 = vunpack.c.l.b16 %v176
    %v755 = vunpack.c.h.b16 %v176
    %v756 = vunpack.c.l.b16 %v177
    %v757 = vunpack.c.h.b16 %v177
    %v758 = vunpack.c.l.b16 %v178
    %v759 = vunpack.c.h.b16 %v178
    %v760 = vunpack.c.l.b16 %v179
    %v761 = vunpack.c.h.b16 %v179
    %v762 = vunpack.c.l.b16 %v180
    %v763 = vunpack.c.h.b16 %v180
    %v764 = vunpack.c.l.b16 %v181
    %v765 = vunpack.c.h.b16 %v181
    %v766 = vunpack.c.l.b16 %v182
    %v767 = vunpack.c.h.b16 %v182
    %v768 = vunpack.c.l.b16 %v183
    %v769 = vunpack.c.h.b16 %v183
    %v770 = vunpack.c.l.b16 %v184
    %v771 = vunpack.c.h.b16 %v184
    %v772 = vunpack.c.l.b16 %v185
    %v773 = vunpack.c.h.b16 %v185
    %v774 = vunpack.c.l.b16 %v186
    %v775 = vunpack.c.h.b16 %v186
    %v776 = vunpack.c.l.b16 %v187
    %v777 = vunpack.c.h.b16 %v187
    %v778 = vunpack.c.l.b16 %v188
    %v779 = vunpack.c.h.b16 %v188
    %v780 = vunpack.c.l.b16 %v189
    %v781 = vunpack.c.h.b16 %v189
    %v782 = vunpack.c.l.b16 %v190
    %v783 = vunpack.c.h.b16 %v190
    %v784 = vunpack.c.l.b16 %v191
    %v785 = vunpack.c.h.b16 %v191
    %v786 = vunpack.c.l.b16 %v192
    %v787 = vunpack.c.h.b16 %v192
    %v788 = vunpack.c.l.b16 %v193
    %v789 = vunpack.c.h.b16 %v193
    %v790 = vunpack.c.l.b16 %v194
    %v791 = vunpack.c.h.b16 %v194
    %v792 = vunpack.c.l.b16 %v195
    %v793 = vunpack.c.h.b16 %v195
    %v794 = vunpack.c.l.b16 %v196
    %v795 = vunpack.c.h.b16 %v196
    %v796 = vunpack.c.l.b16 %v197
    %v797 = vunpack.c.h.b16 %v197
    %v798 = vunpack.c.l.b16 %v198
    %v799 = vunpack.c.h.b16 %v198
    %v800 = vunpack.c.l.b16 %v199
    %v801 = vunpack.c.h.b16 %v199
    %v802 = vunpack.c.l.b16 %v200
    %v803 = vunpack.c.h.b16 %v200
    %v804 = vunpack.c.l.b16 %v201
    %v805 = vunpack.c.h.b16 %v201
    %v806 = vunpack.c.l.b16 %v202
    %v807 = vunpack.c.h.b16 %v202
    %v808 = vunpack.c.l.b16 %v203
    %v809 = vunpack.c.h.b16 %v203
    %v810 = vunpack.c.l.b16 %v204
    %v811 = vunpack.c.h.b16 %v204
    %v812 = vunpack.c.l.b16 %v205
    %v813 = vunpack.c.h.b16 %v205
    %v814 = vunpack.c.l.b16 %v206
    %v815 = vunpack.c.h.b16 %v206
    %v816 = vunpack.c.l.b16 %v207
    %v817 = vunpack.c.h.b16 %v207
    %v818 = vunpack.c.l.b16 %v208
    %v819 = vunpack.c.h.b16 %v208
    %v820 = vunpack.c.l.b16 %v209
    %v821 = vunpack.c.h.b16 %v209
    %v822 = vunpack.c.l.b16 %v210
    %v823 = vunpack.c.h.b16 %v210
    %v824 = vunpack.c.l.b16 %v211
    %v825 = vunpack.c.h.b16 %v211
    %v826 = vunpack.c.l.b16 %v212
    %v827 = vunpack.c.h.b16 %v212
    %v828 = vunpack.c.l.b16 %v213
    %v829 = vunpack.c.h.b16 %v213
    %v830 = vunpack.c.l.b16 %v214
    %v831 = vunpack.c.h.b16 %v214
    %v832 = vunpack.c.l.b16 %v215
    %v833 = vunpack.c.h.b16 %v215
    %v834 = vunpack.c.l.b16 %v216
    %v835 = vunpack.c.h.b16 %v216
    %v836 = vunpack.c.l.b16 %v217
    %v837 = vunpack.c.h.b16 %v217
    %v838 = vunpack.c.l.b16 %v218
    %v839 = vunpack.c.h.b16 %v218
    %v840 = vunpack.c.l.b16 %v219
    %v841 = vunpack.c.h.b16 %v219
    %v842 = vunpack.c.l.b16 %v220
    %v843 = vunpack.c.h.b16 %v220
    %v844 = vunpack.c.l.b16 %v221
    %v845 = vunpack.c.h.b16 %v221
    %v846 = vunpack.c.l.b16 %v222
    %v847 = vunpack.c.h.b16 %v222
    %v848 = vpack.c.b16 %v452, %v448
    %v849 = vpack.c.b16 %v453, %v449
    %v850 = vpack.c.b16 %v454, %v450
    %v851 = vpack.c.b16 %v455, %v451
    %v852 = vpack.c.b16 %v460, %v456
    %v853 = vpack.c.b16 %v461, %v457
    %v854 = vpack.c.b16 %v462, %v458
    %v855 = vpack.c.b16 %v463, %v459
    %v856 = vpack.c.b16 %v468, %v464
    %v857 = vpack.c.b16 %v469, %v465
    %v858 = vpack.c.b16 %v470, %v466
    %v859 = vpack.c.b16 %v471, %v467
    %v860 = vpack.c.b16 %v476, %v472
    %v861 = vpack.c.b16 %v477, %v473
    %v862 = vpack.c.b16 %v478, %v474
    %v863 = vpack.c.b16 %v479, %v475
    %v864 = vpack.c.b16 %v484, %v480
    %v865 = vpack.c.b16 %v485, %v481
    %v866 = vpack.c.b16 %v486, %v482
    %v867 = vpack.c.b16 %v487, %v483
    %v868 = vpack.c.b16 %v492, %v488
    %v869 = vpack.c.b16 %v493, %v489
    %v870 = vpack.c.b16 %v494, %v490
    %v871 = vpack.c.b16 %v495, %v491
    %v872 = vpack.c.b16 %v500, %v496
    %v873 = vpack.c.b16 %v501, %v497
    %v874 = vpack.c.b16 %v502, %v498
    %v875 = vpack.c.b16 %v503, %v499
    %v876 = vpack.c.b16 %v508, %v504
    %v877 = vpack.c.b16 %v509, %v505
    %v878 = vpack.c.b16 %v510, %v506
    %v879 = vpack.c.b16 %v511, %v507
    %v880 = vpack.c.b16 %v516, %v512
    %v881 = vpack.c.b16 %v517, %v513
    %v882 = vpack.c.b16 %v518, %v514
    %v883 = vpack.c.b16 %v519, %v515
    %v884 = vpack.c.b16 %v524, %v520
    %v885 = vpack.c.b16 %v525, %v521
    %v886 = vpack.c.b16 %v526, %v522
    %v887 = vpack.c.b16 %v527, %v523
    %v888 = vpack.c.b16 %v532, %v528
    %v889 = vpack.c.b16 %v533, %v529
    %v890 = vpack.c.b16 %v534, %v530
    %v891 = vpack.c.b16 %v535, %v531
    %v892 = vpack.c.b16 %v540, %v536
    %v893 = vpack.c.b16 %v541, %v537
    %v894 = vpack.c.b16 %v542, %v538
    %v895 = vpack.c.b16 %v543, %v539
    %v896 = vpack.c.b16 %v548, %v544
    %v897 = vpack.c.b16 %v549, %v545
    %v898 = vpack.c.b16 %v550, %v546
    %v899 = vpack.c.b16 %v551, %v547
    %v900 = vpack.c.b16 %v556, %v552
    %v901 = vpack.c.b16 %v557, %v553
    %v902 = vpack.c.b16 %v558, %v554
    %v903 = vpack.c.b16 %v559, %v555
    %v904 = vpack.c.b16 %v564, %v560
    %v905 = vpack.c.b16 %v565, %v561
    %v906 = vpack.c.b16 %v566, %v562
    %v907 = vpack.c.b16 %v567, %v563
    %v908 = vpack.c.b16 %v572, %v568
    %v909 = vpack.c.b16 %v573, %v569
    %v910 = vpack.c.b16 %v574, %v570
    %v911 = vpack.c.b16 %v575, %v571
    %v912 = vpack.c.b16 %v580, %v576
    %v913 = vpack.c.b16 %v581, %v577
    %v914 = vpack.c.b16 %v582, %v578
    %v915 = vpack.c.b16 %v583, %v579
    %v916 = vpack.c.b16 %v588, %v584
    %v917 = vpack.c.b16 %v589, %v585
    %v918 = vpack.c.b16 %v590, %v586
    %v919 = vpack.c.b16 %v591, %v587
    %v920 = vpack.c.b16 %v596, %v592
    %v921 = vpack.c.b16 %v597, %v593
    %v922 = vpack.c.b16 %v598, %v594
    %v923 = vpack.c.b16 %v599, %v595
    %v924 = vpack.c.b16 %v604, %v600
    %v925 = vpack.c.b16 %v605, %v601
    %v926 = vpack.c.b16 %v606, %v602
    %v927 = vpack.c.b16 %v607, %v603
    %v928 = vpack.c.b16 %v612, %v608
    %v929 = vpack.c.b16 %v613, %v609
    %v930 = vpack.c.b16 %v614, %v610
    %v931 = vpack.c.b16 %v615, %v611
    %v932 = vpack.c.b16 %v620, %v616
    %v933 = vpack.c.b16 %v621, %v617
    %v934 = vpack.c.b16 %v622, %v618
    %v935 = vpack.c.b16 %v623, %v619
    %v936 = vpack.c.b16 %v628, %v624
    %v937 = vpack.c.b16 %v629, %v625
    %v938 = vpack.c.b16 %v630, %v626
    %v939 = vpack.c.b16 %v631, %v627
    %v940 = vpack.c.b16 %v636, %v632
    %v941 = vpack.c.b16 %v637, %v633
    %v942 = vpack.c.b16 %v638, %v634
    %v943 = vpack.c.b16 %v639, %v635
    %v944 = vpack.c.b16 %v644, %v640
    %v945 = vpack.c.b16 %v645, %v641
    %v946 = vpack.c.b16 %v646, %v642
    %v947 = vpack.c.b16 %v647, %v643
    %v948 = vpack.c.b16 %v652, %v648
    %v949 = vpack.c.b16 %v653, %v649
    %v950 = vpack.c.b16 %v654, %v650
    %v951 = vpack.c.b16 %v655, %v651
    %v952 = vpack.c.b16 %v660, %v656
    %v953 = vpack.c.b16 %v661, %v657
    %v954 = vpack.c.b16 %v662, %v658
    %v955 = vpack.c.b16 %v663, %v659
    %v956 = vpack.c.b16 %v668, %v664
    %v957 = vpack.c.b16 %v669, %v665
    %v958 = vpack.c.b16 %v670, %v666
    %v959 = vpack.c.b16 %v671, %v667
    %v960 = vpack.c.b16 %v676, %v672
    %v961 = vpack.c.b16 %v677, %v673
    %v962 = vpack.c.b16 %v678, %v674
    %v963 = vpack.c.b16 %v679, %v675
    %v964 = vpack.c.b16 %v684, %v680
    %v965 = vpack.c.b16 %v685, %v681
    %v966 = vpack.c.b16 %v686, %v682
    %v967 = vpack.c.b16 %v687, %v683
    %v968 = vpack.c.b16 %v692, %v688
    %v969 = vpack.c.b16 %v693, %v689
    %v970 = vpack.c.b16 %v694, %v690
    %v971 = vpack.c.b16 %v695, %v691
    %v972 = vpack.c.b16 %v700, %v696
    %v973 = vpack.c.b16 %v701, %v697
    %v974 = vpack.c.b16 %v702, %v698
    %v975 = vpack.c.b16 %v703, %v699
    %v976 = vpack.c.b16 %v708, %v704
    %v977 = vpack.c.b16 %v709, %v705
    %v978 = vpack.c.b16 %v710, %v706
    %v979 = vpack.c.b16 %v711, %v707
    %v980 = vpack.c.b16 %v716, %v712
    %v981 = vpack.c.b16 %v717, %v713
    %v982 = vpack.c.b16 %v718, %v714
    %v983 = vpack.c.b16 %v719, %v715
    %v984 = vpack.c.b16 %v724, %v720
    %v985 = vpack.c.b16 %v725, %v721
    %v986 = vpack.c.b16 %v726, %v722
    %v987 = vpack.c.b16 %v727, %v723
    %v988 = vpack.c.b16 %v732, %v728
    %v989 = vpack.c.b16 %v733, %v729
    %v990 = vpack.c.b16 %v734, %v730
    %v991 = vpack.c.b16 %v735, %v731
    %v992 = vpack.c.b16 %v740, %v736
    %v993 = vpack.c.b16 %v741, %v737
    %v994 = vpack.c.b16 %v742, %v738
    %v995 = vpack.c.b16 %v743, %v739
    %v996 = vpack.c.b16 %v748, %v744
    %v997 = vpack.c.b16 %v749, %v745
    %v998 = vpack.c.b16 %v750, %v746
    %v999 = vpack.c.b16 %v751, %v747
    %v1000 = vpack.c.b16 %v756, %v752
    %v1001 = vpack.c.b16 %v757, %v753
    %v1002 = vpack.c.b16 %v758, %v754
    %v1003 = vpack.c.b16 %v759, %v755
    %v1004 = vpack.c.b16 %v764, %v760
    %v1005 = vpack.c.b16 %v765, %v761
    %v1006 = vpack.c.b16 %v766, %v762
    %v1007 = vpack.c.b16 %v767, %v763
    %v1008 = vpack.c.b16 %v772, %v768
    %v1009 = vpack.c.b16 %v773, %v769
    %v1010 = vpack.c.b16 %v774, %v770
    %v1011 = vpack.c.b16 %v775, %v771
    %v1012 = vpack.c.b16 %v780, %v776
    %v1013 = vpack.c.b16 %v781, %v777
    %v1014 = vpack.c.b16 %v782, %v778
    %v1015 = vpack.c.b16 %v783, %v779
    %v1016 = vpack.c.b16 %v788, %v784
    %v1017 = vpack.c.b16 %v789, %v785
    %v1018 = vpack.c.b16 %v790, %v786
    %v1019 = vpack.c.b16 %v791, %v787
    %v1020 = vpack.c.b16 %v796, %v792
    %v1021 = vpack.c.b16 %v797, %v793
    %v1022 = vpack.c.b16 %v798, %v794
    %v1023 = vpack.c.b16 %v799, %v795
    %v1024 = vpack.c.b16 %v804, %v800
    %v1025 = vpack.c.b16 %v805, %v801
    %v1026 = vpack.c.b16 %v806, %v802
    %v1027 = vpack.c.b16 %v807, %v803
    %v1028 = vpack.c.b16 %v812, %v808
    %v1029 = vpack.c.b16 %v813, %v809
    %v1030 = vpack.c.b16 %v814, %v810
    %v1031 = vpack.c.b16 %v815, %v811
    %v1032 = vpack.c.b16 %v820, %v816
    %v1033 = vpack.c.b16 %v821, %v817
    %v1034 = vpack.c.b16 %v822, %v818
    %v1035 = vpack.c.b16 %v823, %v819
    %v1036 = vpack.c.b16 %v828, %v824
    %v1037 = vpack.c.b16 %v829, %v825
    %v1038 = vpack.c.b16 %v830, %v826
    %v1039 = vpack.c.b16 %v831, %v827
    %v1040 = vpack.c.b16 %v836, %v832
    %v1041 = vpack.c.b16 %v837, %v833
    %v1042 = vpack.c.b16 %v838, %v834
    %v1043 = vpack.c.b16 %v839, %v835
    %v1044 = vpack.c.b16 %v844, %v840
    %v1045 = vpack.c.b16 %v845, %v841
    %v1046 = vpack.c.b16 %v846, %v842
    %v1047 = vpack.c.b16 %v847, %v843
    %vm1248 = vcmask 261120
    %v1249 = vsel %vm1248, %v241, 0
    %1251 = vmatpush.bf16.msra.mxu0 %v876
    %1252 = vmatpush.bf16.msra.mxu0 %v872
    %1253 = vmatpush.bf16.msra.mxu0 %v868
    %1254 = vmatpush.bf16.msra.mxu0 %v864
    %1255 = vmatpush.bf16.msra.mxu0 %v860
    %1256 = vmatpush.bf16.msra.mxu0 %v856
    %1257 = vmatpush.bf16.msra.mxu0 %v852
    %1258 = vmatpush.bf16.msra.mxu0 %v848
    %1259 = vmatmul.bf16.gmra.mxu0 %v235
    %v1260 = vpop.f32.mrf.mxu0
    %v1261 = vadd.f32 %v225, %v1260
    %v1262 = vpop.f32.mrf.mxu0
    %1263 = vdwg.mxu0
    %1264 = vmatpush.bf16.msra.mxu0 %v908
    %1265 = vmatpush.bf16.msra.mxu0 %v904
    %1266 = vmatpush.bf16.msra.mxu0 %v900
    %1267 = vmatpush.bf16.msra.mxu0 %v896
    %1268 = vmatpush.bf16.msra.mxu0 %v892
    %1269 = vmatpush.bf16.msra.mxu0 %v888
    %1270 = vmatpush.bf16.msra.mxu0 %v884
    %1271 = vmatpush.bf16.msra.mxu0 %v880
    %1272 = vmatmul.bf16.gmra.mxu0 %v236
    %v1273 = vpop.f32.mrf.mxu0
    %v1274 = vadd.f32 %v1261, %v1273
    %v1275 = vpop.f32.mrf.mxu0
    %1276 = vdwg.mxu0
    %1277 = vmatpush.bf16.msra.mxu0 %v940
    %1278 = vmatpush.bf16.msra.mxu0 %v936
    %1279 = vmatpush.bf16.msra.mxu0 %v932
    %1280 = vmatpush.bf16.msra.mxu0 %v928
    %1281 = vmatpush.bf16.msra.mxu0 %v924
    %1282 = vmatpush.bf16.msra.mxu0 %v920
    %1283 = vmatpush.bf16.msra.mxu0 %v916
    %1284 = vmatpush.bf16.msra.mxu0 %v912
    %1285 = vmatmul.bf16.gmra.mxu0 %v237
    %v1286 = vpop.f32.mrf.mxu0
    %v1287 = vadd.f32 %v1274, %v1286
    %v1288 = vpop.f32.mrf.mxu0
    %1289 = vdwg.mxu0
    %1290 = vmatpush.bf16.msra.mxu0 %v972
    %1291 = vmatpush.bf16.msra.mxu0 %v968
    %1292 = vmatpush.bf16.msra.mxu0 %v964
    %1293 = vmatpush.bf16.msra.mxu0 %v960
    %1294 = vmatpush.bf16.msra.mxu0 %v956
    %1295 = vmatpush.bf16.msra.mxu0 %v952
    %1296 = vmatpush.bf16.msra.mxu0 %v948
    %1297 = vmatpush.bf16.msra.mxu0 %v944
    %1298 = vmatmul.bf16.gmra.mxu0 %v238
    %v1299 = vpop.f32.mrf.mxu0
    %v1300 = vadd.f32 %v1287, %v1299
    %v1301 = vpop.f32.mrf.mxu0
    %1302 = vdwg.mxu0
    %1303 = vmatpush.bf16.msra.mxu0 %v1004
    %1304 = vmatpush.bf16.msra.mxu0 %v1000
    %1305 = vmatpush.bf16.msra.mxu0 %v996
    %1306 = vmatpush.bf16.msra.mxu0 %v992
    %1307 = vmatpush.bf16.msra.mxu0 %v988
    %1308 = vmatpush.bf16.msra.mxu0 %v984
    %1309 = vmatpush.bf16.msra.mxu0 %v980
    %1310 = vmatpush.bf16.msra.mxu0 %v976
    %1311 = vmatmul.bf16.gmra.mxu0 %v239
    %v1312 = vpop.f32.mrf.mxu0
    %v1313 = vadd.f32 %v1300, %v1312
    %v1314 = vpop.f32.mrf.mxu0
    %1315 = vdwg.mxu0
    %1316 = vmatpush.bf16.msra.mxu0 %v1036
    %1317 = vmatpush.bf16.msra.mxu0 %v1032
    %1318 = vmatpush.bf16.msra.mxu0 %v1028
    %1319 = vmatpush.bf16.msra.mxu0 %v1024
    %1320 = vmatpush.bf16.msra.mxu0 %v1020
    %1321 = vmatpush.bf16.msra.mxu0 %v1016
    %1322 = vmatpush.bf16.msra.mxu0 %v1012
    %1323 = vmatpush.bf16.msra.mxu0 %v1008
    %1324 = vmatmul.bf16.gmra.mxu0 %v240
    %v1325 = vpop.f32.mrf.mxu0
    %v1326 = vadd.f32 %v1313, %v1325
    %v1327 = vpop.f32.mrf.mxu0
    %1328 = vdwg.mxu0
    %1329 = vmatpush.bf16.msra.mxu0 0
    %1330 = vmatpush.bf16.msra.mxu0 0
    %1331 = vmatpush.bf16.msra.mxu0 0
    %1332 = vmatpush.bf16.msra.mxu0 0
    %1333 = vmatpush.bf16.msra.mxu0 0
    %1334 = vmatpush.bf16.msra.mxu0 0
    %1335 = vmatpush.bf16.msra.mxu0 %v1044
    %1336 = vmatpush.bf16.msra.mxu0 %v1040
    %1337 = vmatmul.bf16.gmra.mxu0 %v1249
    %v1338 = vpop.f32.mrf.mxu0
    %v1339 = vadd.f32 %v1326, %v1338
    %v1340 = vpop.f32.mrf.mxu0
    %1341 = vdwg.mxu0
    %1342 = vmatpush.bf16.msra.mxu0 %v877
    %1343 = vmatpush.bf16.msra.mxu0 %v873
    %1344 = vmatpush.bf16.msra.mxu0 %v869
    %1345 = vmatpush.bf16.msra.mxu0 %v865
    %1346 = vmatpush.bf16.msra.mxu0 %v861
    %1347 = vmatpush.bf16.msra.mxu0 %v857
    %1348 = vmatpush.bf16.msra.mxu0 %v853
    %1349 = vmatpush.bf16.msra.mxu0 %v849
    %1350 = vmatmul.bf16.gmra.mxu0 %v235
    %v1351 = vpop.f32.mrf.mxu0
    %v1352 = vadd.f32 %v226, %v1351
    %v1353 = vpop.f32.mrf.mxu0
    %1354 = vdwg.mxu0
    %1355 = vmatpush.bf16.msra.mxu0 %v909
    %1356 = vmatpush.bf16.msra.mxu0 %v905
    %1357 = vmatpush.bf16.msra.mxu0 %v901
    %1358 = vmatpush.bf16.msra.mxu0 %v897
    %1359 = vmatpush.bf16.msra.mxu0 %v893
    %1360 = vmatpush.bf16.msra.mxu0 %v889
    %1361 = vmatpush.bf16.msra.mxu0 %v885
    %1362 = vmatpush.bf16.msra.mxu0 %v881
    %1363 = vmatmul.bf16.gmra.mxu0 %v236
    %v1364 = vpop.f32.mrf.mxu0
    %v1365 = vadd.f32 %v1352, %v1364
    %v1366 = vpop.f32.mrf.mxu0
    %1367 = vdwg.mxu0
    %1368 = vmatpush.bf16.msra.mxu0 %v941
    %1369 = vmatpush.bf16.msra.mxu0 %v937
    %1370 = vmatpush.bf16.msra.mxu0 %v933
    %1371 = vmatpush.bf16.msra.mxu0 %v929
    %1372 = vmatpush.bf16.msra.mxu0 %v925
    %1373 = vmatpush.bf16.msra.mxu0 %v921
    %1374 = vmatpush.bf16.msra.mxu0 %v917
    %1375 = vmatpush.bf16.msra.mxu0 %v913
    %1376 = vmatmul.bf16.gmra.mxu0 %v237
    %v1377 = vpop.f32.mrf.mxu0
    %v1378 = vadd.f32 %v1365, %v1377
    %v1379 = vpop.f32.mrf.mxu0
    %1380 = vdwg.mxu0
    %1381 = vmatpush.bf16.msra.mxu0 %v973
    %1382 = vmatpush.bf16.msra.mxu0 %v969
    %1383 = vmatpush.bf16.msra.mxu0 %v965
    %1384 = vmatpush.bf16.msra.mxu0 %v961
    %1385 = vmatpush.bf16.msra.mxu0 %v957
    %1386 = vmatpush.bf16.msra.mxu0 %v953
    %1387 = vmatpush.bf16.msra.mxu0 %v949
    %1388 = vmatpush.bf16.msra.mxu0 %v945
    %1389 = vmatmul.bf16.gmra.mxu0 %v238
    %v1390 = vpop.f32.mrf.mxu0
    %v1391 = vadd.f32 %v1378, %v1390
    %v1392 = vpop.f32.mrf.mxu0
    %1393 = vdwg.mxu0
    %1394 = vmatpush.bf16.msra.mxu0 %v1005
    %1395 = vmatpush.bf16.msra.mxu0 %v1001
    %1396 = vmatpush.bf16.msra.mxu0 %v997
    %1397 = vmatpush.bf16.msra.mxu0 %v993
    %1398 = vmatpush.bf16.msra.mxu0 %v989
    %1399 = vmatpush.bf16.msra.mxu0 %v985
    %1400 = vmatpush.bf16.msra.mxu0 %v981
    %1401 = vmatpush.bf16.msra.mxu0 %v977
    %1402 = vmatmul.bf16.gmra.mxu0 %v239
    %v1403 = vpop.f32.mrf.mxu0
    %v1404 = vadd.f32 %v1391, %v1403
    %v1405 = vpop.f32.mrf.mxu0
    %1406 = vdwg.mxu0
    %1407 = vmatpush.bf16.msra.mxu0 %v1037
    %1408 = vmatpush.bf16.msra.mxu0 %v1033
    %1409 = vmatpush.bf16.msra.mxu0 %v1029
    %1410 = vmatpush.bf16.msra.mxu0 %v1025
    %1411 = vmatpush.bf16.msra.mxu0 %v1021
    %1412 = vmatpush.bf16.msra.mxu0 %v1017
    %1413 = vmatpush.bf16.msra.mxu0 %v1013
    %1414 = vmatpush.bf16.msra.mxu0 %v1009
    %1415 = vmatmul.bf16.gmra.mxu0 %v240
    %v1416 = vpop.f32.mrf.mxu0
    %v1417 = vadd.f32 %v1404, %v1416
    %v1418 = vpop.f32.mrf.mxu0
    %1419 = vdwg.mxu0
    %1420 = vmatpush.bf16.msra.mxu0 0
    %1421 = vmatpush.bf16.msra.mxu0 0
    %1422 = vmatpush.bf16.msra.mxu0 0
    %1423 = vmatpush.bf16.msra.mxu0 0
    %1424 = vmatpush.bf16.msra.mxu0 0
    %1425 = vmatpush.bf16.msra.mxu0 0
    %1426 = vmatpush.bf16.msra.mxu0 %v1045
    %1427 = vmatpush.bf16.msra.mxu0 %v1041
    %1428 = vmatmul.bf16.gmra.mxu0 %v1249
    %v1429 = vpop.f32.mrf.mxu0
    %v1430 = vadd.f32 %v1417, %v1429
    %v1431 = vpop.f32.mrf.mxu0
    %1432 = vdwg.mxu0
    %1433 = vmatpush.bf16.msra.mxu0 %v878
    %1434 = vmatpush.bf16.msra.mxu0 %v874
    %1435 = vmatpush.bf16.msra.mxu0 %v870
    %1436 = vmatpush.bf16.msra.mxu0 %v866
    %1437 = vmatpush.bf16.msra.mxu0 %v862
    %1438 = vmatpush.bf16.msra.mxu0 %v858
    %1439 = vmatpush.bf16.msra.mxu0 %v854
    %1440 = vmatpush.bf16.msra.mxu0 %v850
    %1441 = vmatmul.bf16.gmra.mxu0 %v235
    %v1442 = vpop.f32.mrf.mxu0
    %v1443 = vadd.f32 %v227, %v1442
    %v1444 = vpop.f32.mrf.mxu0
    %1445 = vdwg.mxu0
    %1446 = vmatpush.bf16.msra.mxu0 %v910
    %1447 = vmatpush.bf16.msra.mxu0 %v906
    %1448 = vmatpush.bf16.msra.mxu0 %v902
    %1449 = vmatpush.bf16.msra.mxu0 %v898
    %1450 = vmatpush.bf16.msra.mxu0 %v894
    %1451 = vmatpush.bf16.msra.mxu0 %v890
    %1452 = vmatpush.bf16.msra.mxu0 %v886
    %1453 = vmatpush.bf16.msra.mxu0 %v882
    %1454 = vmatmul.bf16.gmra.mxu0 %v236
    %v1455 = vpop.f32.mrf.mxu0
    %v1456 = vadd.f32 %v1443, %v1455
    %v1457 = vpop.f32.mrf.mxu0
    %1458 = vdwg.mxu0
    %1459 = vmatpush.bf16.msra.mxu0 %v942
    %1460 = vmatpush.bf16.msra.mxu0 %v938
    %1461 = vmatpush.bf16.msra.mxu0 %v934
    %1462 = vmatpush.bf16.msra.mxu0 %v930
    %1463 = vmatpush.bf16.msra.mxu0 %v926
    %1464 = vmatpush.bf16.msra.mxu0 %v922
    %1465 = vmatpush.bf16.msra.mxu0 %v918
    %1466 = vmatpush.bf16.msra.mxu0 %v914
    %1467 = vmatmul.bf16.gmra.mxu0 %v237
    %v1468 = vpop.f32.mrf.mxu0
    %v1469 = vadd.f32 %v1456, %v1468
    %v1470 = vpop.f32.mrf.mxu0
    %1471 = vdwg.mxu0
    %1472 = vmatpush.bf16.msra.mxu0 %v974
    %1473 = vmatpush.bf16.msra.mxu0 %v970
    %1474 = vmatpush.bf16.msra.mxu0 %v966
    %1475 = vmatpush.bf16.msra.mxu0 %v962
    %1476 = vmatpush.bf16.msra.mxu0 %v958
    %1477 = vmatpush.bf16.msra.mxu0 %v954
    %1478 = vmatpush.bf16.msra.mxu0 %v950
    %1479 = vmatpush.bf16.msra.mxu0 %v946
    %1480 = vmatmul.bf16.gmra.mxu0 %v238
    %v1481 = vpop.f32.mrf.mxu0
    %v1482 = vadd.f32 %v1469, %v1481
    %v1483 = vpop.f32.mrf.mxu0
    %1484 = vdwg.mxu0
    %1485 = vmatpush.bf16.msra.mxu0 %v1006
    %1486 = vmatpush.bf16.msra.mxu0 %v1002
    %1487 = vmatpush.bf16.msra.mxu0 %v998
    %1488 = vmatpush.bf16.msra.mxu0 %v994
    %1489 = vmatpush.bf16.msra.mxu0 %v990
    %1490 = vmatpush.bf16.msra.mxu0 %v986
    %1491 = vmatpush.bf16.msra.mxu0 %v982
    %1492 = vmatpush.bf16.msra.mxu0 %v978
    %1493 = vmatmul.bf16.gmra.mxu0 %v239
    %v1494 = vpop.f32.mrf.mxu0
    %v1495 = vadd.f32 %v1482, %v1494
    %v1496 = vpop.f32.mrf.mxu0
    %1497 = vdwg.mxu0
    %1498 = vmatpush.bf16.msra.mxu0 %v1038
    %1499 = vmatpush.bf16.msra.mxu0 %v1034
    %1500 = vmatpush.bf16.msra.mxu0 %v1030
    %1501 = vmatpush.bf16.msra.mxu0 %v1026
    %1502 = vmatpush.bf16.msra.mxu0 %v1022
    %1503 = vmatpush.bf16.msra.mxu0 %v1018
    %1504 = vmatpush.bf16.msra.mxu0 %v1014
    %1505 = vmatpush.bf16.msra.mxu0 %v1010
    %1506 = vmatmul.bf16.gmra.mxu0 %v240
    %v1507 = vpop.f32.mrf.mxu0
    %v1508 = vadd.f32 %v1495, %v1507
    %v1509 = vpop.f32.mrf.mxu0
    %1510 = vdwg.mxu0
    %1511 = vmatpush.bf16.msra.mxu0 0
    %1512 = vmatpush.bf16.msra.mxu0 0
    %1513 = vmatpush.bf16.msra.mxu0 0
    %1514 = vmatpush.bf16.msra.mxu0 0
    %1515 = vmatpush.bf16.msra.mxu0 0
    %1516 = vmatpush.bf16.msra.mxu0 0
    %1517 = vmatpush.bf16.msra.mxu0 %v1046
    %1518 = vmatpush.bf16.msra.mxu0 %v1042
    %1519 = vmatmul.bf16.gmra.mxu0 %v1249
    %v1520 = vpop.f32.mrf.mxu0
    %v1521 = vadd.f32 %v1508, %v1520
    %v1522 = vpop.f32.mrf.mxu0
    %1523 = vdwg.mxu0
    %1524 = vmatpush.bf16.msra.mxu0 %v879
    %1525 = vmatpush.bf16.msra.mxu0 %v875
    %1526 = vmatpush.bf16.msra.mxu0 %v871
    %1527 = vmatpush.bf16.msra.mxu0 %v867
    %1528 = vmatpush.bf16.msra.mxu0 %v863
    %1529 = vmatpush.bf16.msra.mxu0 %v859
    %1530 = vmatpush.bf16.msra.mxu0 %v855
    %1531 = vmatpush.bf16.msra.mxu0 %v851
    %1532 = vmatmul.bf16.gmra.mxu0 %v235
    %v1533 = vpop.f32.mrf.mxu0
    %v1534 = vadd.f32 %v228, %v1533
    %v1535 = vpop.f32.mrf.mxu0
    %1536 = vdwg.mxu0
    %1537 = vmatpush.bf16.msra.mxu0 %v911
    %1538 = vmatpush.bf16.msra.mxu0 %v907
    %1539 = vmatpush.bf16.msra.mxu0 %v903
    %1540 = vmatpush.bf16.msra.mxu0 %v899
    %1541 = vmatpush.bf16.msra.mxu0 %v895
    %1542 = vmatpush.bf16.msra.mxu0 %v891
    %1543 = vmatpush.bf16.msra.mxu0 %v887
    %1544 = vmatpush.bf16.msra.mxu0 %v883
    %1545 = vmatmul.bf16.gmra.mxu0 %v236
    %v1546 = vpop.f32.mrf.mxu0
    %v1547 = vadd.f32 %v1534, %v1546
    %v1548 = vpop.f32.mrf.mxu0
    %1549 = vdwg.mxu0
    %1550 = vmatpush.bf16.msra.mxu0 %v943
    %1551 = vmatpush.bf16.msra.mxu0 %v939
    %1552 = vmatpush.bf16.msra.mxu0 %v935
    %1553 = vmatpush.bf16.msra.mxu0 %v931
    %1554 = vmatpush.bf16.msra.mxu0 %v927
    %1555 = vmatpush.bf16.msra.mxu0 %v923
    %1556 = vmatpush.bf16.msra.mxu0 %v919
    %1557 = vmatpush.bf16.msra.mxu0 %v915
    %1558 = vmatmul.bf16.gmra.mxu0 %v237
    %v1559 = vpop.f32.mrf.mxu0
    %v1560 = vadd.f32 %v1547, %v1559
    %v1561 = vpop.f32.mrf.mxu0
    %1562 = vdwg.mxu0
    %1563 = vmatpush.bf16.msra.mxu0 %v975
    %1564 = vmatpush.bf16.msra.mxu0 %v971
    %1565 = vmatpush.bf16.msra.mxu0 %v967
    %1566 = vmatpush.bf16.msra.mxu0 %v963
    %1567 = vmatpush.bf16.msra.mxu0 %v959
    %1568 = vmatpush.bf16.msra.mxu0 %v955
    %1569 = vmatpush.bf16.msra.mxu0 %v951
    %1570 = vmatpush.bf16.msra.mxu0 %v947
    %1571 = vmatmul.bf16.gmra.mxu0 %v238
    %v1572 = vpop.f32.mrf.mxu0
    %v1573 = vadd.f32 %v1560, %v1572
    %v1574 = vpop.f32.mrf.mxu0
    %1575 = vdwg.mxu0
    %1576 = vmatpush.bf16.msra.mxu0 %v1007
    %1577 = vmatpush.bf16.msra.mxu0 %v1003
    %1578 = vmatpush.bf16.msra.mxu0 %v999
    %1579 = vmatpush.bf16.msra.mxu0 %v995
    %1580 = vmatpush.bf16.msra.mxu0 %v991
    %1581 = vmatpush.bf16.msra.mxu0 %v987
    %1582 = vmatpush.bf16.msra.mxu0 %v983
    %1583 = vmatpush.bf16.msra.mxu0 %v979
    %1584 = vmatmul.bf16.gmra.mxu0 %v239
    %v1585 = vpop.f32.mrf.mxu0
    %v1586 = vadd.f32 %v1573, %v1585
    %v1587 = vpop.f32.mrf.mxu0
    %1588 = vdwg.mxu0
    %1589 = vmatpush.bf16.msra.mxu0 %v1039
    %1590 = vmatpush.bf16.msra.mxu0 %v1035
    %1591 = vmatpush.bf16.msra.mxu0 %v1031
    %1592 = vmatpush.bf16.msra.mxu0 %v1027
    %1593 = vmatpush.bf16.msra.mxu0 %v1023
    %1594 = vmatpush.bf16.msra.mxu0 %v1019
    %1595 = vmatpush.bf16.msra.mxu0 %v1015
    %1596 = vmatpush.bf16.msra.mxu0 %v1011
    %1597 = vmatmul.bf16.gmra.mxu0 %v240
    %v1598 = vpop.f32.mrf.mxu0
    %v1599 = vadd.f32 %v1586, %v1598
    %v1600 = vpop.f32.mrf.mxu0
    %1601 = vdwg.mxu0
    %1602 = vmatpush.bf16.msra.mxu0 0
    %1603 = vmatpush.bf16.msra.mxu0 0
    %1604 = vmatpush.bf16.msra.mxu0 0
    %1605 = vmatpush.bf16.msra.mxu0 0
    %1606 = vmatpush.bf16.msra.mxu0 0
    %1607 = vmatpush.bf16.msra.mxu0 0
    %1608 = vmatpush.bf16.msra.mxu0 %v1047
    %1609 = vmatpush.bf16.msra.mxu0 %v1043
    %1610 = vmatmul.bf16.gmra.mxu0 %v1249
    %v1611 = vpop.f32.mrf.mxu0
    %v1612 = vadd.f32 %v1599, %v1611
    %v1613 = vpop.f32.mrf.mxu0
    %1614 = vdwg.mxu0
    %v1615 = vmax.f32 %v1339, 0.0
    %v1616 = vmax.f32 %v1430, 0.0
    %v1617 = vmax.f32 %v1521, 0.0
    %v1618 = vmax.f32 %v1612, 0.0
    %v1619 = vpack.c.bf16 %v1615, %v1615
    %v1620 = vpack.c.bf16 %v1616, %v1616
    %v1621 = vpack.c.bf16 %v1617, %v1617
    %v1622 = vpack.c.bf16 %v1618, %v1618
    %v1623 = vld [vmem:[%s3] sm:$0xf]
    %v1624 = vld [vmem:[%s3 + $0x4] sm:$0xf]
    %v1625 = vld [vmem:[%s3 + $0x8] sm:$0xf]
    %v1626 = vld [vmem:[%s3 + $0xc] sm:$0xf]
    %v1627 = vld [vmem:[%s3 + $0x10] sm:$0xf]
    %v1628 = vld [vmem:[%s3 + $0x14] sm:$0xf]
    %v1629 = vld [vmem:[%s3 + $0x18] sm:$0xf]
    %v1630 = vld [vmem:[%s3 + $0x1c] sm:$0xf]
    %v1631 = vld [vmem:[%s3 + $0x20] sm:$0xf]
    %v1632 = vld [vmem:[%s3 + $0x24] sm:$0xf]
    %v1633 = vld [vmem:[%s3 + $0x28] sm:$0xf]
    %v1634 = vld [vmem:[%s3 + $0x2c] sm:$0xf]
    %v1635 = vld [vmem:[%s3 + $0x30] sm:$0xf]
    %v1636 = vld [vmem:[%s3 + $0x34] sm:$0xf]
    %v1637 = vld [vmem:[%s3 + $0x38] sm:$0xf]
    %v1638 = vld [vmem:[%s3 + $0x3c] sm:$0xf]
    %v1639 = vld [vmem:[%s3 + $0x40] sm:$0xf]
    %v1640 = vld [vmem:[%s3 + $0x44] sm:$0xf]
    %v1641 = vld [vmem:[%s3 + $0x48] sm:$0xf]
    %v1642 = vld [vmem:[%s3 + $0x4c] sm:$0xf]
    %v1643 = vld [vmem:[%s3 + $0x50] sm:$0xf]
    %v1644 = vld [vmem:[%s3 + $0x54] sm:$0xf]
    %v1645 = vld [vmem:[%s3 + $0x58] sm:$0xf]
    %v1646 = vld [vmem:[%s3 + $0x5c] sm:$0xf]
    %v1647 = vld [vmem:[%s3 + $0x60] sm:$0xf]
    %v1648 = vld [vmem:[%s3 + $0x64] sm:$0xf]
    %v1649 = vld [vmem:[%s3 + $0x68] sm:$0xf]
    %v1650 = vld [vmem:[%s3 + $0x6c] sm:$0xf]
    %v1651 = vld [vmem:[%s3 + $0x70] sm:$0xf]
    %v1652 = vld [vmem:[%s3 + $0x74] sm:$0xf]
    %v1653 = vld [vmem:[%s3 + $0x78] sm:$0xf]
    %v1654 = vld [vmem:[%s3 + $0x7c] sm:$0xf]
    %v1655 = vld [vmem:[%s3 + $0x80] sm:$0xf]
    %v1656 = vld [vmem:[%s3 + $0x84] sm:$0xf]
    %v1657 = vld [vmem:[%s3 + $0x88] sm:$0xf]
    %v1658 = vld [vmem:[%s3 + $0x8c] sm:$0xf]
    %v1659 = vld [vmem:[%s3 + $0x90] sm:$0xf]
    %v1660 = vld [vmem:[%s3 + $0x94] sm:$0xf]
    %v1661 = vld [vmem:[%s3 + $0x98] sm:$0xf]
    %v1662 = vld [vmem:[%s3 + $0x9c] sm:$0xf]
    %v1663 = vld [vmem:[%s3 + $0xa0] sm:$0xf]
    %v1664 = vld [vmem:[%s3 + $0xa4] sm:$0xf]
    %v1665 = vld [vmem:[%s3 + $0xa8] sm:$0xf]
    %v1666 = vld [vmem:[%s3 + $0xac] sm:$0xf]
    %v1667 = vld [vmem:[%s3 + $0xb0] sm:$0xf]
    %v1668 = vld [vmem:[%s3 + $0xb4] sm:$0xf]
    %v1669 = vld [vmem:[%s3 + $0xb8] sm:$0xf]
    %v1670 = vld [vmem:[%s3 + $0xbc] sm:$0xf]
    %v1671 = vld [vmem:[%s3 + $0xc0] sm:$0xf]
    %v1672 = vld [vmem:[%s3 + $0xc4] sm:$0xf]
    %v1673 = vld [vmem:[%s3 + $0xc8] sm:$0xf]
    %v1674 = vld [vmem:[%s3 + $0xcc] sm:$0xf]
    %v1675 = vld [vmem:[%s3 + $0xd0] sm:$0xf]
    %v1676 = vld [vmem:[%s3 + $0xd4] sm:$0xf]
    %v1677 = vld [vmem:[%s3 + $0xd8] sm:$0xf]
    %v1678 = vld [vmem:[%s3 + $0xdc] sm:$0xf]
    %v1679 = vld [vmem:[%s3 + $0xe0] sm:$0xf]
    %v1680 = vld [vmem:[%s3 + $0xe4] sm:$0xf]
    %v1681 = vld [vmem:[%s3 + $0xe8] sm:$0xf]
    %v1682 = vld [vmem:[%s3 + $0xec] sm:$0xf]
    %v1683 = vld [vmem:[%s3 + $0xf0] sm:$0xf]
    %v1684 = vld [vmem:[%s3 + $0xf4] sm:$0xf]
    %v1685 = vld [vmem:[%s3 + $0xf8] sm:$0x3]
    %v1686 = vld [vmem:[%s4] sm:$0x1]
    %v1688 = vperm.slane %v1686, 0
    %v1753 = vunpack.c.l.b16 %v1623
    %v1754 = vunpack.c.l.b16 %v1624
    %v1755 = vunpack.c.l.b16 %v1625
    %v1756 = vunpack.c.l.b16 %v1626
    %v1757 = vunpack.c.l.b16 %v1627
    %v1758 = vunpack.c.l.b16 %v1628
    %v1759 = vunpack.c.l.b16 %v1629
    %v1760 = vunpack.c.l.b16 %v1630
    %v1761 = vunpack.c.l.b16 %v1631
    %v1762 = vunpack.c.l.b16 %v1632
    %v1763 = vunpack.c.l.b16 %v1633
    %v1764 = vunpack.c.l.b16 %v1634
    %v1765 = vunpack.c.l.b16 %v1635
    %v1766 = vunpack.c.l.b16 %v1636
    %v1767 = vunpack.c.l.b16 %v1637
    %v1768 = vunpack.c.l.b16 %v1638
    %v1769 = vunpack.c.l.b16 %v1639
    %v1770 = vunpack.c.l.b16 %v1640
    %v1771 = vunpack.c.l.b16 %v1641
    %v1772 = vunpack.c.l.b16 %v1642
    %v1773 = vunpack.c.l.b16 %v1643
    %v1774 = vunpack.c.l.b16 %v1644
    %v1775 = vunpack.c.l.b16 %v1645
    %v1776 = vunpack.c.l.b16 %v1646
    %v1777 = vunpack.c.l.b16 %v1647
    %v1778 = vunpack.c.l.b16 %v1648
    %v1779 = vunpack.c.l.b16 %v1649
    %v1780 = vunpack.c.l.b16 %v1650
    %v1781 = vunpack.c.l.b16 %v1651
    %v1782 = vunpack.c.l.b16 %v1652
    %v1783 = vunpack.c.l.b16 %v1653
    %v1784 = vunpack.c.l.b16 %v1654
    %v1785 = vunpack.c.l.b16 %v1655
    %v1786 = vunpack.c.l.b16 %v1656
    %v1787 = vunpack.c.l.b16 %v1657
    %v1788 = vunpack.c.l.b16 %v1658
    %v1789 = vunpack.c.l.b16 %v1659
    %v1790 = vunpack.c.l.b16 %v1660
    %v1791 = vunpack.c.l.b16 %v1661
    %v1792 = vunpack.c.l.b16 %v1662
    %v1793 = vunpack.c.l.b16 %v1663
    %v1794 = vunpack.c.l.b16 %v1664
    %v1795 = vunpack.c.l.b16 %v1665
    %v1796 = vunpack.c.l.b16 %v1666
    %v1797 = vunpack.c.l.b16 %v1667
    %v1798 = vunpack.c.l.b16 %v1668
    %v1799 = vunpack.c.l.b16 %v1669
    %v1800 = vunpack.c.l.b16 %v1670
    %v1801 = vunpack.c.l.b16 %v1671
    %v1802 = vunpack.c.l.b16 %v1672
    %v1803 = vunpack.c.l.b16 %v1673
    %v1804 = vunpack.c.l.b16 %v1674
    %v1805 = vunpack.c.l.b16 %v1675
    %v1806 = vunpack.c.l.b16 %v1676
    %v1807 = vunpack.c.l.b16 %v1677
    %v1808 = vunpack.c.l.b16 %v1678
    %v1809 = vunpack.c.l.b16 %v1679
    %v1810 = vunpack.c.l.b16 %v1680
    %v1811 = vunpack.c.l.b16 %v1681
    %v1812 = vunpack.c.l.b16 %v1682
    %v1813 = vunpack.c.l.b16 %v1683
    %v1814 = vunpack.c.l.b16 %v1684
    %v1815 = vunpack.c.l.b16 %v1685
    %v1816 = vpack.c.b16 %v1754, %v1753
    %v1817 = vpack.c.b16 %v1756, %v1755
    %v1818 = vpack.c.b16 %v1758, %v1757
    %v1819 = vpack.c.b16 %v1760, %v1759
    %v1820 = vpack.c.b16 %v1762, %v1761
    %v1821 = vpack.c.b16 %v1764, %v1763
    %v1822 = vpack.c.b16 %v1766, %v1765
    %v1823 = vpack.c.b16 %v1768, %v1767
    %v1824 = vpack.c.b16 %v1770, %v1769
    %v1825 = vpack.c.b16 %v1772, %v1771
    %v1826 = vpack.c.b16 %v1774, %v1773
    %v1827 = vpack.c.b16 %v1776, %v1775
    %v1828 = vpack.c.b16 %v1778, %v1777
    %v1829 = vpack.c.b16 %v1780, %v1779
    %v1830 = vpack.c.b16 %v1782, %v1781
    %v1831 = vpack.c.b16 %v1784, %v1783
    %v1832 = vpack.c.b16 %v1786, %v1785
    %v1833 = vpack.c.b16 %v1788, %v1787
    %v1834 = vpack.c.b16 %v1790, %v1789
    %v1835 = vpack.c.b16 %v1792, %v1791
    %v1836 = vpack.c.b16 %v1794, %v1793
    %v1837 = vpack.c.b16 %v1796, %v1795
    %v1838 = vpack.c.b16 %v1798, %v1797
    %v1839 = vpack.c.b16 %v1800, %v1799
    %v1840 = vpack.c.b16 %v1802, %v1801
    %v1841 = vpack.c.b16 %v1804, %v1803
    %v1842 = vpack.c.b16 %v1806, %v1805
    %v1843 = vpack.c.b16 %v1808, %v1807
    %v1844 = vpack.c.b16 %v1810, %v1809
    %v1845 = vpack.c.b16 %v1812, %v1811
    %v1846 = vpack.c.b16 %v1814, %v1813
    %v1847 = vpack.c.b16 %v1815, %v1815
    %vm1879 = vcmask 949248
    %v1881 = vsel %vm1879, %v1622, 0
    %vm1883 = vcmask 1041408
    %v1885 = vsel %vm1883, %v1847, 0
    %1887 = vmatpush.bf16.msra.mxu0 %v1823
    %1888 = vmatpush.bf16.msra.mxu0 %v1822
    %1889 = vmatpush.bf16.msra.mxu0 %v1821
    %1890 = vmatpush.bf16.msra.mxu0 %v1820
    %1891 = vmatpush.bf16.msra.mxu0 %v1819
    %1892 = vmatpush.bf16.msra.mxu0 %v1818
    %1893 = vmatpush.bf16.msra.mxu0 %v1817
    %1894 = vmatpush.bf16.msra.mxu0 %v1816
    %1895 = vmatmul.bf16.gmra.mxu0 %v1619
    %v1896 = vpop.f32.mrf.mxu0
    %v1897 = vadd.f32 %v1688, %v1896
    %v1898 = vpop.f32.mrf.mxu0
    %1899 = vdwg.mxu0
    %1900 = vmatpush.bf16.msra.mxu0 %v1831
    %1901 = vmatpush.bf16.msra.mxu0 %v1830
    %1902 = vmatpush.bf16.msra.mxu0 %v1829
    %1903 = vmatpush.bf16.msra.mxu0 %v1828
    %1904 = vmatpush.bf16.msra.mxu0 %v1827
    %1905 = vmatpush.bf16.msra.mxu0 %v1826
    %1906 = vmatpush.bf16.msra.mxu0 %v1825
    %1907 = vmatpush.bf16.msra.mxu0 %v1824
    %1908 = vmatmul.bf16.gmra.mxu0 %v1620
    %v1909 = vpop.f32.mrf.mxu0
    %v1910 = vadd.f32 %v1897, %v1909
    %v1911 = vpop.f32.mrf.mxu0
    %1912 = vdwg.mxu0
    %1913 = vmatpush.bf16.msra.mxu0 %v1839
    %1914 = vmatpush.bf16.msra.mxu0 %v1838
    %1915 = vmatpush.bf16.msra.mxu0 %v1837
    %1916 = vmatpush.bf16.msra.mxu0 %v1836
    %1917 = vmatpush.bf16.msra.mxu0 %v1835
    %1918 = vmatpush.bf16.msra.mxu0 %v1834
    %1919 = vmatpush.bf16.msra.mxu0 %v1833
    %1920 = vmatpush.bf16.msra.mxu0 %v1832
    %1921 = vmatmul.bf16.gmra.mxu0 %v1621
    %v1922 = vpop.f32.mrf.mxu0
    %v1923 = vadd.f32 %v1910, %v1922
    %v1924 = vpop.f32.mrf.mxu0
    %1925 = vdwg.mxu0
    %1926 = vmatpush.bf16.msra.mxu0 %v1885
    %1927 = vmatpush.bf16.msra.mxu0 %v1846
    %1928 = vmatpush.bf16.msra.mxu0 %v1845
    %1929 = vmatpush.bf16.msra.mxu0 %v1844
    %1930 = vmatpush.bf16.msra.mxu0 %v1843
    %1931 = vmatpush.bf16.msra.mxu0 %v1842
    %1932 = vmatpush.bf16.msra.mxu0 %v1841
    %1933 = vmatpush.bf16.msra.mxu0 %v1840
    %1934 = vmatmul.bf16.gmra.mxu0 %v1881
    %v1935 = vpop.f32.mrf.mxu0
    %v1936 = vadd.f32 %v1923, %v1935
    %v1937 = vpop.f32.mrf.mxu0
    %1938 = vdwg.mxu0
    %vm1939 = vcmask 107520
    %v1940 = vsel %vm1939, %v1936, -inf
    %1941 = vmax.xlane.f32.xlu0 %v1940
    %v1942 = vpop.xlane.xlu0 %1941
    %v1943 = vsub.f32 %v1936, %v1942
    %v1944 = vmul.f32 %v1943, 1.442695
    %v1945 = vpow.pop %v1944
    %v1946 = vsel %vm1939, %v1945, 0.0
    %1947 = vadd.xlane.f32.xlu0 %v1946
    %v1948 = vpop.xlane.xlu0 %1947
    %v1949 = vlog2.pop %v1948
    %v1950 = vmul.f32 %v1949, 0.6931472
    %v1951 = vsub.f32 %v1943, %v1950
    %1952 = vst.msk [vmem:[#allocation2] sm:$0x3] %vm1939, %v1951
    // Predicated region
    $region22: #{lenet_forward.5} parent=1 // pred_check
      _
    $region23: #{lenet_forward.5} parent=1 // pred_check_branch
      %1954 = sbr.rel (0) target = $region25
    $region24: #{lenet_forward.5} parent=1 // pred_region
      %1956 = vsyncadd [#allocation3], 0
      %s1958 = sshll.u32 [#allocation2], 4
      %s1959 = int_to_ptr.vmem [resolvable:$true] %s1958
      %s1960 = sshll.u32 %s5, 4
      %s1961 = int_to_ptr.hbm [resolvable:$true] %s1960
      %1963 = dma.vmem_to_hbm [thread:$0]  %s1959, 32, %s1961, [#allocation3]
    $region25: #{lenet_forward.5} parent=1 // pred_fallthru
      _
    // Predicated region
    $region26: #{lenet_forward.5} parent=1 // pred_check
      _
    $region27: #{lenet_forward.5} parent=1 // pred_check_branch
      %1965 = sbr.rel (0) target = $region29
    $region28: #{lenet_forward.5} parent=1 // pred_region
      %1967 = dma.done [#allocation3], 32
    $region29: #{lenet_forward.5} parent=1 // pred_fallthru
      _
    %1968 = vsyncpa [#allocation3], 1

</llo_original>
